<compile_context>
chip_gen: v7x
topology: tpu7x:2x2x1
jax: 0.10.0
libtpu: 0.0.40
codegen_flags: <defaults>
</compile_context>

<pallas_src>
import jax
import jax.numpy as jnp
from jax.experimental import pallas as pl
from jax.experimental.pallas import tpu as pltpu

BN_EPS = 1e-5


def _round_up(n, m):
    return ((n + m - 1) // m) * m


# ---------------------------------------------------------------------------
# Kernel
# ---------------------------------------------------------------------------
def gin_encoder_kernel(x_ref, a_ref, mask_ref,
                       ope1_ref, ope2_ref, ope3_ref,
                       lin_w, lin_b,
                       c1_w1, c1_b1, c1_w2, c1_b2, c1_g, c1_be,
                       bn1_g, bn1_b,
                       c2_w1, c2_b1, c2_w2, c2_b2, c2_g, c2_be,
                       bn2_g, bn2_b,
                       c3_w1, c3_b1, c3_w2, c3_b2, c3_g, c3_be,
                       out_ref):
    # One grid step == one graph.  x_ref (Np, Fp) bf16, a_ref (Np, Np) bf16
    # (dense adjacency incl. self loops, padded rows/cols zero), mask_ref
    # (Np, 1) f32 with 1.0 on real node rows.
    A = a_ref[...]
    mask = mask_ref[...]
    inv_cnt = 1.0 / jnp.sum(mask, axis=0, keepdims=True)      # (1, 1)

    def bn(z, gamma, beta):
        # BatchNorm1d (training mode, biased variance) over *real* nodes only.
        zm = z * mask
        mean = jnp.sum(zm, axis=0, keepdims=True) * inv_cnt
        d = (z - mean) * mask
        var = jnp.sum(d * d, axis=0, keepdims=True) * inv_cnt
        return (z - mean) * jax.lax.rsqrt(var + BN_EPS) * gamma + beta

    def gin_conv(h, ope_ref, w1, b1, w2, b2, g, be):
        # GINConv: nn((1 + eps) * x_i + sum_{j->i} x_j); self loops already in A.
        agg = jnp.dot(A, h.astype(jnp.bfloat16),
                      preferred_element_type=jnp.float32)
        z = agg + ope_ref[...] * h            # (1 + eps) precomputed in wrapper
        z = jnp.maximum(
            jnp.dot(z.astype(jnp.bfloat16), w1[...],
                    preferred_element_type=jnp.float32) + b1[...], 0.0)
        z = jnp.maximum(
            jnp.dot(z.astype(jnp.bfloat16), w2[...],
                    preferred_element_type=jnp.float32) + b2[...], 0.0)
        return bn(z, g[...], be[...])

    # x = self.lin(x)   (input-feature axis zero padded -> identical result)
    h = jnp.dot(x_ref[...], lin_w[...],
                preferred_element_type=jnp.float32) + lin_b[...]

    h = gin_conv(h, ope1_ref, c1_w1, c1_b1, c1_w2, c1_b2, c1_g, c1_be)
    h = jnp.maximum(bn(h, bn1_g[...], bn1_b[...]), 0.0)

    h = gin_conv(h, ope2_ref, c2_w1, c2_b1, c2_w2, c2_b2, c2_g, c2_be)
    h = jnp.maximum(bn(h, bn2_g[...], bn2_b[...]), 0.0)

    h = gin_conv(h, ope3_ref, c3_w1, c3_b1, c3_w2, c3_b2, c3_g, c3_be)

    out_ref[...] = h.astype(out_ref.dtype)


# ---------------------------------------------------------------------------
# Parameters (matching the PyTorch module layout)
# ---------------------------------------------------------------------------
def make_params(key, in_ch, out_ch):
    c2, c4 = 2 * out_ch, 4 * out_ch
    ks = list(jax.random.split(key, 16))

    def lin(k, fi, fo):
        w = jax.random.normal(k, (fi, fo), jnp.float32) * (1.0 / jnp.sqrt(fi))
        b = jax.random.normal(jax.random.fold_in(k, 1), (1, fo), jnp.float32) * 0.1
        return w, b

    p = {}
    p["lin_w"], p["lin_b"] = lin(ks[0], in_ch, c2)
    # conv1 MLP: 2C -> 4C -> 4C, BN(4C)
    p["c1_w1"], p["c1_b1"] = lin(ks[1], c2, c4)
    p["c1_w2"], p["c1_b2"] = lin(ks[2], c4, c4)
    p["c1_g"], p["c1_be"] = jnp.ones((1, c4)), jnp.zeros((1, c4))
    p["bn1_g"], p["bn1_b"] = jnp.ones((1, c4)), jnp.zeros((1, c4))
    # conv2 MLP: 4C -> 4C -> 4C, BN(4C)
    p["c2_w1"], p["c2_b1"] = lin(ks[3], c4, c4)
    p["c2_w2"], p["c2_b2"] = lin(ks[4], c4, c4)
    p["c2_g"], p["c2_be"] = jnp.ones((1, c4)), jnp.zeros((1, c4))
    p["bn2_g"], p["bn2_b"] = jnp.ones((1, c4)), jnp.zeros((1, c4))
    # conv3 MLP: 4C -> 2C -> 2C, BN(2C)
    p["c3_w1"], p["c3_b1"] = lin(ks[5], c4, c2)
    p["c3_w2"], p["c3_b2"] = lin(ks[6], c2, c2)
    p["c3_g"], p["c3_be"] = jnp.ones((1, c2)), jnp.zeros((1, c2))
    # trainable eps per GINConv, init 0
    p["eps"] = jnp.zeros((3,), jnp.float32)
    return p


_PARAM_ORDER = [
    "lin_w", "lin_b",
    "c1_w1", "c1_b1", "c1_w2", "c1_b2", "c1_g", "c1_be",
    "bn1_g", "bn1_b",
    "c2_w1", "c2_b1", "c2_w2", "c2_b2", "c2_g", "c2_be",
    "bn2_g", "bn2_b",
    "c3_w1", "c3_b1", "c3_w2", "c3_b2", "c3_g", "c3_be",
]
_BF16_PARAMS = {"lin_w", "c1_w1", "c1_w2", "c2_w1", "c2_w2", "c3_w1", "c3_w2"}


# ---------------------------------------------------------------------------
# Wrapper / drivers
# ---------------------------------------------------------------------------
def dense_adjacency_with_self_loops(edge_index, num_nodes, n_pad):
    loops = jnp.arange(num_nodes, dtype=edge_index.dtype)
    ei = jnp.concatenate([edge_index, jnp.stack([loops, loops])], axis=1)
    src, dst = ei[0], ei[1]
    # A[dst, src] accumulates x_src into node dst (PyG "add" aggregation).
    # Padded rows/cols stay exactly zero.
    return jnp.zeros((n_pad, n_pad), jnp.float32).at[dst, src].add(1.0)


def prepare_graph(x, edge_index, n_pad, f_pad):
    n, f = x.shape
    x_p = jnp.zeros((n_pad, f_pad), jnp.float32).at[:n, :f].set(x)
    a = dense_adjacency_with_self_loops(edge_index, n, n_pad)
    mask = (jnp.arange(n_pad) < n).astype(jnp.float32)[:, None]
    return x_p, a, mask


@jax.jit
def gin_encoder_forward_batched(x_b, a_b, mask_b, params):
    """x_b: (B, Np, Fp) zero-padded node features; a_b: (B, Np, Np) dense
    adjacency with self loops; mask_b: (B, Np, 1) with 1.0 on real nodes."""
    B, n_pad, f_pad = x_b.shape

    p = dict(params)
    lin_w = p["lin_w"]
    if lin_w.shape[0] != f_pad:               # pad input-feature axis with zeros
        lin_w = jnp.pad(lin_w, ((0, f_pad - lin_w.shape[0]), (0, 0)))
    p["lin_w"] = lin_w
    c2 = lin_w.shape[1]
    c4 = p["c1_w1"].shape[1]

    # (1 + eps) per GINConv, as tiny lane-aligned row vectors (no scalar reads
    # inside the kernel).
    ope = 1.0 + p["eps"]
    ope1 = jnp.full((1, c2), 1.0, jnp.float32) * ope[0]
    ope2 = jnp.full((1, c4), 1.0, jnp.float32) * ope[1]
    ope3 = jnp.full((1, c4), 1.0, jnp.float32) * ope[2]

    dense_params = [p[k].astype(jnp.bfloat16) if k in _BF16_PARAMS else p[k]
                    for k in _PARAM_ORDER]

    def per_graph(shape):
        nd = len(shape)
        return pl.BlockSpec((None,) + shape, lambda b: (b,) + (0,) * nd)

    def whole(arr):
        nd = arr.ndim
        return pl.BlockSpec(arr.shape, lambda b: (0,) * nd)

    in_specs = (
        [per_graph((n_pad, f_pad)),     # x
         per_graph((n_pad, n_pad)),     # A
         per_graph((n_pad, 1))]         # node mask
        + [whole(ope1), whole(ope2), whole(ope3)]
        + [whole(w) for w in dense_params]
    )

    return pl.pallas_call(
        gin_encoder_kernel,
        out_shape=jax.ShapeDtypeStruct((B, n_pad, c2), jnp.float32),
        grid=(B,),
        in_specs=in_specs,
        out_specs=per_graph((n_pad, c2)),
        compiler_params=pltpu.CompilerParams(
            dimension_semantics=("parallel",),      # graphs shard across TCs
            vmem_limit_bytes=48 * 1024 * 1024),
    )(x_b.astype(jnp.bfloat16), a_b.astype(jnp.bfloat16),
      mask_b.astype(jnp.float32), ope1, ope2, ope3, *dense_params)


def gin_encoder_forward(x, edge_index, params):
    """Single-graph forward matching GIN_Encoder.forward(x, edge_index)."""
    n, f = x.shape
    n_pad = _round_up(n, 128)
    f_pad = _round_up(f, 128)
    x_p, a, mask = prepare_graph(x, edge_index, n_pad, f_pad)
    out = gin_encoder_forward_batched(x_p[None], a[None], mask[None], params)
    return out[0, :n]


# ---------------------------------------------------------------------------
# Pure-JAX reference (same math & matmul precision as the kernel, no Pallas)
# ---------------------------------------------------------------------------
def _bn_train(z, gamma, beta):
    mean = jnp.mean(z, axis=0, keepdims=True)
    var = jnp.mean((z - mean) ** 2, axis=0, keepdims=True)
    return (z - mean) * jax.lax.rsqrt(var + BN_EPS) * gamma + beta


def gin_encoder_reference(x, edge_index, params):
    # Mirrors the kernel's bf16-operand / f32-accumulate matmuls so the only
    # remaining differences are accumulation order.  (Pure-f32 PyTorch differs
    # only by bf16 MXU rounding.)
    n = x.shape[0]
    A = dense_adjacency_with_self_loops(edge_index, n, n).astype(jnp.bfloat16)
    p = params

    def mm(a, w):
        return jnp.dot(a.astype(jnp.bfloat16), w.astype(jnp.bfloat16),
                       preferred_element_type=jnp.float32)

    h = mm(x, p["lin_w"]) + p["lin_b"]

    def conv(h, eps, w1, b1, w2, b2, g, be):
        agg = jnp.dot(A, h.astype(jnp.bfloat16),
                      preferred_element_type=jnp.float32)
        z = agg + (1.0 + eps) * h
        z = jnp.maximum(mm(z, w1) + b1, 0.0)
        z = jnp.maximum(mm(z, w2) + b2, 0.0)
        return _bn_train(z, g, be)

    h = conv(h, p["eps"][0], p["c1_w1"], p["c1_b1"], p["c1_w2"], p["c1_b2"],
             p["c1_g"], p["c1_be"])
    h = jnp.maximum(_bn_train(h, p["bn1_g"], p["bn1_b"]), 0.0)
    h = conv(h, p["eps"][1], p["c2_w1"], p["c2_b1"], p["c2_w2"], p["c2_b2"],
             p["c2_g"], p["c2_be"])
    h = jnp.maximum(_bn_train(h, p["bn2_g"], p["bn2_b"]), 0.0)
    h = conv(h, p["eps"][2], p["c3_w1"], p["c3_b1"], p["c3_w2"], p["c3_b2"],
             p["c3_g"], p["c3_be"])
    return h


# ---------------------------------------------------------------------------
# Demo
# ---------------------------------------------------------------------------
if __name__ == "__main__":
    key = jax.random.PRNGKey(0)
    k_x, k_e, k_p = jax.random.split(key, 3)

    B = 4          # graphs per pallas_call (grid axis, "parallel")
    N_NODES = 8    # nodes per graph
    IN_CH = 16     # INchannels (padded to 128 in the wrapper)
    OUT_CH = 64    # Outchannels -> 2C=128, 4C=256 (lane-dense)

    params = make_params(k_p, IN_CH, OUT_CH)

    N_PAD = _round_up(N_NODES, 128)
    F_PAD = _round_up(IN_CH, 128)

    graphs, xs, As, masks = [], [], [], []
    for g in range(B):
        kx = jax.random.fold_in(k_x, g)
        ke = jax.random.fold_in(k_e, g)
        x = jax.random.normal(kx, (N_NODES, IN_CH), jnp.float32)
        src = jax.random.randint(ke, (12,), 0, N_NODES, jnp.int32)
        dst = jax.random.randint(jax.random.fold_in(ke, 1), (12,), 0, N_NODES,
                                 jnp.int32)
        ei = jnp.stack([src, dst])
        graphs.append((x, ei))
        xp, a, m = prepare_graph(x, ei, N_PAD, F_PAD)
        xs.append(xp), As.append(a), masks.append(m)

    x_b, a_b, mask_b = jnp.stack(xs), jnp.stack(As), jnp.stack(masks)

    out = gin_encoder_forward_batched(x_b, a_b, mask_b, params)
    out = jax.block_until_ready(out)
    assert out.shape == (B, N_PAD, 2 * OUT_CH)

    for g, (x, ei) in enumerate(graphs):
        ref = gin_encoder_reference(x, ei, params)
        got = out[g, :N_NODES, :]
        assert jnp.allclose(got, ref, rtol=2e-2, atol=2e-2), f"mismatch graph {g}"

    print("KERNEL_OK")
</pallas_src>

<mosaic_0001>
module attributes {stable_mosaic.version = 11 : i64} {
  func.func @gin_encoder_kernel(%arg0: i32, %arg1: memref<1x128x128xbf16, #tpu.memory_space<vmem>>, %arg2: memref<1x128x128xbf16, #tpu.memory_space<vmem>>, %arg3: memref<1x128x1xf32, #tpu.memory_space<vmem>>, %arg4: memref<1x128xf32, #tpu.memory_space<vmem>>, %arg5: memref<1x256xf32, #tpu.memory_space<vmem>>, %arg6: memref<1x256xf32, #tpu.memory_space<vmem>>, %arg7: memref<128x128xbf16, #tpu.memory_space<vmem>>, %arg8: memref<1x128xf32, #tpu.memory_space<vmem>>, %arg9: memref<128x256xbf16, #tpu.memory_space<vmem>>, %arg10: memref<1x256xf32, #tpu.memory_space<vmem>>, %arg11: memref<256x256xbf16, #tpu.memory_space<vmem>>, %arg12: memref<1x256xf32, #tpu.memory_space<vmem>>, %arg13: memref<1x256xf32, #tpu.memory_space<vmem>>, %arg14: memref<1x256xf32, #tpu.memory_space<vmem>>, %arg15: memref<1x256xf32, #tpu.memory_space<vmem>>, %arg16: memref<1x256xf32, #tpu.memory_space<vmem>>, %arg17: memref<256x256xbf16, #tpu.memory_space<vmem>>, %arg18: memref<1x256xf32, #tpu.memory_space<vmem>>, %arg19: memref<256x256xbf16, #tpu.memory_space<vmem>>, %arg20: memref<1x256xf32, #tpu.memory_space<vmem>>, %arg21: memref<1x256xf32, #tpu.memory_space<vmem>>, %arg22: memref<1x256xf32, #tpu.memory_space<vmem>>, %arg23: memref<1x256xf32, #tpu.memory_space<vmem>>, %arg24: memref<1x256xf32, #tpu.memory_space<vmem>>, %arg25: memref<256x128xbf16, #tpu.memory_space<vmem>>, %arg26: memref<1x128xf32, #tpu.memory_space<vmem>>, %arg27: memref<128x128xbf16, #tpu.memory_space<vmem>>, %arg28: memref<1x128xf32, #tpu.memory_space<vmem>>, %arg29: memref<1x128xf32, #tpu.memory_space<vmem>>, %arg30: memref<1x128xf32, #tpu.memory_space<vmem>>, %arg31: memref<1x128x128xf32, #tpu.memory_space<vmem>>) attributes {dimension_semantics = [#tpu.dimension_semantics<parallel>], iteration_bounds = array<i64: 4>, scalar_prefetch = 0 : i64, scratch_operands = 0 : i64, tpu.core_type = #tpu.core_type<tc>, window_params = [{transform_indices = @transform_0, window_bounds = array<i64: 1, 128, 128>}, {transform_indices = @transform_1, window_bounds = array<i64: 1, 128, 128>}, {transform_indices = @transform_2, window_bounds = array<i64: 1, 128, 1>}, {pipeline_mode = #tpu.pipeline_mode<synchronous>, transform_indices = @transform_3, window_bounds = array<i64: 1, 128>}, {pipeline_mode = #tpu.pipeline_mode<synchronous>, transform_indices = @transform_4, window_bounds = array<i64: 1, 256>}, {pipeline_mode = #tpu.pipeline_mode<synchronous>, transform_indices = @transform_5, window_bounds = array<i64: 1, 256>}, {pipeline_mode = #tpu.pipeline_mode<synchronous>, transform_indices = @transform_6, window_bounds = array<i64: 128, 128>}, {pipeline_mode = #tpu.pipeline_mode<synchronous>, transform_indices = @transform_7, window_bounds = array<i64: 1, 128>}, {pipeline_mode = #tpu.pipeline_mode<synchronous>, transform_indices = @transform_8, window_bounds = array<i64: 128, 256>}, {pipeline_mode = #tpu.pipeline_mode<synchronous>, transform_indices = @transform_9, window_bounds = array<i64: 1, 256>}, {pipeline_mode = #tpu.pipeline_mode<synchronous>, transform_indices = @transform_10, window_bounds = array<i64: 256, 256>}, {pipeline_mode = #tpu.pipeline_mode<synchronous>, transform_indices = @transform_11, window_bounds = array<i64: 1, 256>}, {pipeline_mode = #tpu.pipeline_mode<synchronous>, transform_indices = @transform_12, window_bounds = array<i64: 1, 256>}, {pipeline_mode = #tpu.pipeline_mode<synchronous>, transform_indices = @transform_13, window_bounds = array<i64: 1, 256>}, {pipeline_mode = #tpu.pipeline_mode<synchronous>, transform_indices = @transform_14, window_bounds = array<i64: 1, 256>}, {pipeline_mode = #tpu.pipeline_mode<synchronous>, transform_indices = @transform_15, window_bounds = array<i64: 1, 256>}, {pipeline_mode = #tpu.pipeline_mode<synchronous>, transform_indices = @transform_16, window_bounds = array<i64: 256, 256>}, {pipeline_mode = #tpu.pipeline_mode<synchronous>, transform_indices = @transform_17, window_bounds = array<i64: 1, 256>}, {pipeline_mode = #tpu.pipeline_mode<synchronous>, transform_indices = @transform_18, window_bounds = array<i64: 256, 256>}, {pipeline_mode = #tpu.pipeline_mode<synchronous>, transform_indices = @transform_19, window_bounds = array<i64: 1, 256>}, {pipeline_mode = #tpu.pipeline_mode<synchronous>, transform_indices = @transform_20, window_bounds = array<i64: 1, 256>}, {pipeline_mode = #tpu.pipeline_mode<synchronous>, transform_indices = @transform_21, window_bounds = array<i64: 1, 256>}, {pipeline_mode = #tpu.pipeline_mode<synchronous>, transform_indices = @transform_22, window_bounds = array<i64: 1, 256>}, {pipeline_mode = #tpu.pipeline_mode<synchronous>, transform_indices = @transform_23, window_bounds = array<i64: 1, 256>}, {pipeline_mode = #tpu.pipeline_mode<synchronous>, transform_indices = @transform_24, window_bounds = array<i64: 256, 128>}, {pipeline_mode = #tpu.pipeline_mode<synchronous>, transform_indices = @transform_25, window_bounds = array<i64: 1, 128>}, {pipeline_mode = #tpu.pipeline_mode<synchronous>, transform_indices = @transform_26, window_bounds = array<i64: 128, 128>}, {pipeline_mode = #tpu.pipeline_mode<synchronous>, transform_indices = @transform_27, window_bounds = array<i64: 1, 128>}, {pipeline_mode = #tpu.pipeline_mode<synchronous>, transform_indices = @transform_28, window_bounds = array<i64: 1, 128>}, {pipeline_mode = #tpu.pipeline_mode<synchronous>, transform_indices = @transform_29, window_bounds = array<i64: 1, 128>}, {transform_indices = @transform_30, window_bounds = array<i64: 1, 128, 128>}]} {
    %c0 = arith.constant 0 : index
    %c0_0 = arith.constant 0 : index
    %c0_1 = arith.constant 0 : index
    %0 = vector.load %arg2[%c0, %c0_0, %c0_1] : memref<1x128x128xbf16, #tpu.memory_space<vmem>>, vector<1x128x128xbf16>
    %1 = vector.shape_cast %0 : vector<1x128x128xbf16> to vector<128x128xbf16>
    %c0_2 = arith.constant 0 : index
    %c0_3 = arith.constant 0 : index
    %c0_4 = arith.constant 0 : index
    %2 = vector.load %arg3[%c0_2, %c0_3, %c0_4] : memref<1x128x1xf32, #tpu.memory_space<vmem>>, vector<1x128x1xf32>
    %3 = vector.shape_cast %2 : vector<1x128x1xf32> to vector<128x1xf32>
    %cst = arith.constant dense<0.000000e+00> : vector<1xf32>
    %4 = vector.multi_reduction <add>, %3, %cst [0] : vector<128x1xf32> to vector<1xf32>
    %5 = vector.shape_cast %4 : vector<1xf32> to vector<1x1xf32>
    %cst_5 = arith.constant 1.000000e+00 : f32
    %6 = vector.broadcast %cst_5 : f32 to vector<1x1xf32>
    %7 = arith.divf %6, %5 : vector<1x1xf32>
    %c0_6 = arith.constant 0 : index
    %c0_7 = arith.constant 0 : index
    %c0_8 = arith.constant 0 : index
    %8 = vector.load %arg1[%c0_6, %c0_7, %c0_8] : memref<1x128x128xbf16, #tpu.memory_space<vmem>>, vector<1x128x128xbf16>
    %9 = vector.shape_cast %8 : vector<1x128x128xbf16> to vector<128x128xbf16>
    %c0_9 = arith.constant 0 : index
    %c0_10 = arith.constant 0 : index
    %10 = vector.load %arg7[%c0_9, %c0_10] : memref<128x128xbf16, #tpu.memory_space<vmem>>, vector<128x128xbf16>
    %cst_11 = arith.constant dense<0.000000e+00> : vector<128x128xf32>
    %11 = tpu.matmul %9, %10, %cst_11 {dimension_numbers = #tpu.dot_dimension_numbers<[1], [0], [0], [1], [0, 0, 1, 1], [], []>} : vector<128x128xbf16>, vector<128x128xbf16>, vector<128x128xf32> -> vector<128x128xf32>
    %c0_12 = arith.constant 0 : index
    %c0_13 = arith.constant 0 : index
    %12 = vector.load %arg8[%c0_12, %c0_13] : memref<1x128xf32, #tpu.memory_space<vmem>>, vector<1x128xf32>
    %13 = vector.broadcast %12 : vector<1x128xf32> to vector<128x128xf32>
    %14 = arith.addf %11, %13 : vector<128x128xf32>
    %15 = arith.truncf %14 : vector<128x128xf32> to vector<128x128xbf16>
    %cst_14 = arith.constant dense<0.000000e+00> : vector<128x128xf32>
    %16 = tpu.matmul %1, %15, %cst_14 {dimension_numbers = #tpu.dot_dimension_numbers<[1], [0], [0], [1], [0, 0, 1, 1], [], []>} : vector<128x128xbf16>, vector<128x128xbf16>, vector<128x128xf32> -> vector<128x128xf32>
    %c0_15 = arith.constant 0 : index
    %c0_16 = arith.constant 0 : index
    %17 = vector.load %arg4[%c0_15, %c0_16] : memref<1x128xf32, #tpu.memory_space<vmem>>, vector<1x128xf32>
    %18 = vector.broadcast %17 : vector<1x128xf32> to vector<128x128xf32>
    %19 = arith.mulf %18, %14 : vector<128x128xf32>
    %20 = arith.addf %16, %19 : vector<128x128xf32>
    %21 = arith.truncf %20 : vector<128x128xf32> to vector<128x128xbf16>
    %c0_17 = arith.constant 0 : index
    %c0_18 = arith.constant 0 : index
    %22 = vector.load %arg9[%c0_17, %c0_18] : memref<128x256xbf16, #tpu.memory_space<vmem>>, vector<128x256xbf16>
    %cst_19 = arith.constant dense<0.000000e+00> : vector<128x256xf32>
    %23 = tpu.matmul %21, %22, %cst_19 {dimension_numbers = #tpu.dot_dimension_numbers<[1], [0], [0], [1], [0, 0, 1, 1], [], []>} : vector<128x128xbf16>, vector<128x256xbf16>, vector<128x256xf32> -> vector<128x256xf32>
    %c0_20 = arith.constant 0 : index
    %c0_21 = arith.constant 0 : index
    %24 = vector.load %arg10[%c0_20, %c0_21] : memref<1x256xf32, #tpu.memory_space<vmem>>, vector<1x256xf32>
    %25 = vector.broadcast %24 : vector<1x256xf32> to vector<128x256xf32>
    %26 = arith.addf %23, %25 : vector<128x256xf32>
    %cst_22 = arith.constant 0.000000e+00 : f32
    %27 = vector.broadcast %cst_22 : f32 to vector<128x256xf32>
    %28 = arith.maximumf %26, %27 : vector<128x256xf32>
    %29 = arith.truncf %28 : vector<128x256xf32> to vector<128x256xbf16>
    %c0_23 = arith.constant 0 : index
    %c0_24 = arith.constant 0 : index
    %30 = vector.load %arg11[%c0_23, %c0_24] : memref<256x256xbf16, #tpu.memory_space<vmem>>, vector<256x256xbf16>
    %cst_25 = arith.constant dense<0.000000e+00> : vector<128x256xf32>
    %31 = tpu.matmul %29, %30, %cst_25 {dimension_numbers = #tpu.dot_dimension_numbers<[1], [0], [0], [1], [0, 0, 1, 1], [], []>} : vector<128x256xbf16>, vector<256x256xbf16>, vector<128x256xf32> -> vector<128x256xf32>
    %c0_26 = arith.constant 0 : index
    %c0_27 = arith.constant 0 : index
    %32 = vector.load %arg12[%c0_26, %c0_27] : memref<1x256xf32, #tpu.memory_space<vmem>>, vector<1x256xf32>
    %33 = vector.broadcast %32 : vector<1x256xf32> to vector<128x256xf32>
    %34 = arith.addf %31, %33 : vector<128x256xf32>
    %cst_28 = arith.constant 0.000000e+00 : f32
    %35 = vector.broadcast %cst_28 : f32 to vector<128x256xf32>
    %36 = arith.maximumf %34, %35 : vector<128x256xf32>
    %c0_29 = arith.constant 0 : index
    %c0_30 = arith.constant 0 : index
    %37 = vector.load %arg13[%c0_29, %c0_30] : memref<1x256xf32, #tpu.memory_space<vmem>>, vector<1x256xf32>
    %c0_31 = arith.constant 0 : index
    %c0_32 = arith.constant 0 : index
    %38 = vector.load %arg14[%c0_31, %c0_32] : memref<1x256xf32, #tpu.memory_space<vmem>>, vector<1x256xf32>
    %39 = vector.broadcast %3 : vector<128x1xf32> to vector<128x256xf32>
    %40 = arith.mulf %36, %39 : vector<128x256xf32>
    %cst_33 = arith.constant dense<0.000000e+00> : vector<256xf32>
    %41 = vector.multi_reduction <add>, %40, %cst_33 [0] : vector<128x256xf32> to vector<256xf32>
    %42 = vector.shape_cast %41 : vector<256xf32> to vector<1x256xf32>
    %43 = vector.broadcast %7 : vector<1x1xf32> to vector<1x256xf32>
    %44 = arith.mulf %42, %43 : vector<1x256xf32>
    %45 = vector.broadcast %44 : vector<1x256xf32> to vector<128x256xf32>
    %46 = arith.subf %36, %45 : vector<128x256xf32>
    %47 = vector.broadcast %3 : vector<128x1xf32> to vector<128x256xf32>
    %48 = arith.mulf %46, %47 : vector<128x256xf32>
    %49 = arith.mulf %48, %48 : vector<128x256xf32>
    %cst_34 = arith.constant dense<0.000000e+00> : vector<256xf32>
    %50 = vector.multi_reduction <add>, %49, %cst_34 [0] : vector<128x256xf32> to vector<256xf32>
    %51 = vector.shape_cast %50 : vector<256xf32> to vector<1x256xf32>
    %52 = vector.broadcast %7 : vector<1x1xf32> to vector<1x256xf32>
    %53 = arith.mulf %51, %52 : vector<1x256xf32>
    %54 = vector.broadcast %44 : vector<1x256xf32> to vector<128x256xf32>
    %55 = arith.subf %36, %54 : vector<128x256xf32>
    %cst_35 = arith.constant 9.99999974E-6 : f32
    %56 = vector.broadcast %cst_35 : f32 to vector<1x256xf32>
    %57 = arith.addf %53, %56 : vector<1x256xf32>
    %58 = math.rsqrt %57 : vector<1x256xf32>
    %59 = vector.broadcast %58 : vector<1x256xf32> to vector<128x256xf32>
    %60 = arith.mulf %55, %59 : vector<128x256xf32>
    %61 = vector.broadcast %37 : vector<1x256xf32> to vector<128x256xf32>
    %62 = arith.mulf %60, %61 : vector<128x256xf32>
    %63 = vector.broadcast %38 : vector<1x256xf32> to vector<128x256xf32>
    %64 = arith.addf %62, %63 : vector<128x256xf32>
    %c0_36 = arith.constant 0 : index
    %c0_37 = arith.constant 0 : index
    %65 = vector.load %arg15[%c0_36, %c0_37] : memref<1x256xf32, #tpu.memory_space<vmem>>, vector<1x256xf32>
    %c0_38 = arith.constant 0 : index
    %c0_39 = arith.constant 0 : index
    %66 = vector.load %arg16[%c0_38, %c0_39] : memref<1x256xf32, #tpu.memory_space<vmem>>, vector<1x256xf32>
    %67 = vector.broadcast %3 : vector<128x1xf32> to vector<128x256xf32>
    %68 = arith.mulf %64, %67 : vector<128x256xf32>
    %cst_40 = arith.constant dense<0.000000e+00> : vector<256xf32>
    %69 = vector.multi_reduction <add>, %68, %cst_40 [0] : vector<128x256xf32> to vector<256xf32>
    %70 = vector.shape_cast %69 : vector<256xf32> to vector<1x256xf32>
    %71 = vector.broadcast %7 : vector<1x1xf32> to vector<1x256xf32>
    %72 = arith.mulf %70, %71 : vector<1x256xf32>
    %73 = vector.broadcast %72 : vector<1x256xf32> to vector<128x256xf32>
    %74 = arith.subf %64, %73 : vector<128x256xf32>
    %75 = vector.broadcast %3 : vector<128x1xf32> to vector<128x256xf32>
    %76 = arith.mulf %74, %75 : vector<128x256xf32>
    %77 = arith.mulf %76, %76 : vector<128x256xf32>
    %cst_41 = arith.constant dense<0.000000e+00> : vector<256xf32>
    %78 = vector.multi_reduction <add>, %77, %cst_41 [0] : vector<128x256xf32> to vector<256xf32>
    %79 = vector.shape_cast %78 : vector<256xf32> to vector<1x256xf32>
    %80 = vector.broadcast %7 : vector<1x1xf32> to vector<1x256xf32>
    %81 = arith.mulf %79, %80 : vector<1x256xf32>
    %82 = vector.broadcast %72 : vector<1x256xf32> to vector<128x256xf32>
    %83 = arith.subf %64, %82 : vector<128x256xf32>
    %cst_42 = arith.constant 9.99999974E-6 : f32
    %84 = vector.broadcast %cst_42 : f32 to vector<1x256xf32>
    %85 = arith.addf %81, %84 : vector<1x256xf32>
    %86 = math.rsqrt %85 : vector<1x256xf32>
    %87 = vector.broadcast %86 : vector<1x256xf32> to vector<128x256xf32>
    %88 = arith.mulf %83, %87 : vector<128x256xf32>
    %89 = vector.broadcast %65 : vector<1x256xf32> to vector<128x256xf32>
    %90 = arith.mulf %88, %89 : vector<128x256xf32>
    %91 = vector.broadcast %66 : vector<1x256xf32> to vector<128x256xf32>
    %92 = arith.addf %90, %91 : vector<128x256xf32>
    %cst_43 = arith.constant 0.000000e+00 : f32
    %93 = vector.broadcast %cst_43 : f32 to vector<128x256xf32>
    %94 = arith.maximumf %92, %93 : vector<128x256xf32>
    %95 = arith.truncf %94 : vector<128x256xf32> to vector<128x256xbf16>
    %cst_44 = arith.constant dense<0.000000e+00> : vector<128x256xf32>
    %96 = tpu.matmul %1, %95, %cst_44 {dimension_numbers = #tpu.dot_dimension_numbers<[1], [0], [0], [1], [0, 0, 1, 1], [], []>} : vector<128x128xbf16>, vector<128x256xbf16>, vector<128x256xf32> -> vector<128x256xf32>
    %c0_45 = arith.constant 0 : index
    %c0_46 = arith.constant 0 : index
    %97 = vector.load %arg5[%c0_45, %c0_46] : memref<1x256xf32, #tpu.memory_space<vmem>>, vector<1x256xf32>
    %98 = vector.broadcast %97 : vector<1x256xf32> to vector<128x256xf32>
    %99 = arith.mulf %98, %94 : vector<128x256xf32>
    %100 = arith.addf %96, %99 : vector<128x256xf32>
    %101 = arith.truncf %100 : vector<128x256xf32> to vector<128x256xbf16>
    %c0_47 = arith.constant 0 : index
    %c0_48 = arith.constant 0 : index
    %102 = vector.load %arg17[%c0_47, %c0_48] : memref<256x256xbf16, #tpu.memory_space<vmem>>, vector<256x256xbf16>
    %cst_49 = arith.constant dense<0.000000e+00> : vector<128x256xf32>
    %103 = tpu.matmul %101, %102, %cst_49 {dimension_numbers = #tpu.dot_dimension_numbers<[1], [0], [0], [1], [0, 0, 1, 1], [], []>} : vector<128x256xbf16>, vector<256x256xbf16>, vector<128x256xf32> -> vector<128x256xf32>
    %c0_50 = arith.constant 0 : index
    %c0_51 = arith.constant 0 : index
    %104 = vector.load %arg18[%c0_50, %c0_51] : memref<1x256xf32, #tpu.memory_space<vmem>>, vector<1x256xf32>
    %105 = vector.broadcast %104 : vector<1x256xf32> to vector<128x256xf32>
    %106 = arith.addf %103, %105 : vector<128x256xf32>
    %cst_52 = arith.constant 0.000000e+00 : f32
    %107 = vector.broadcast %cst_52 : f32 to vector<128x256xf32>
    %108 = arith.maximumf %106, %107 : vector<128x256xf32>
    %109 = arith.truncf %108 : vector<128x256xf32> to vector<128x256xbf16>
    %c0_53 = arith.constant 0 : index
    %c0_54 = arith.constant 0 : index
    %110 = vector.load %arg19[%c0_53, %c0_54] : memref<256x256xbf16, #tpu.memory_space<vmem>>, vector<256x256xbf16>
    %cst_55 = arith.constant dense<0.000000e+00> : vector<128x256xf32>
    %111 = tpu.matmul %109, %110, %cst_55 {dimension_numbers = #tpu.dot_dimension_numbers<[1], [0], [0], [1], [0, 0, 1, 1], [], []>} : vector<128x256xbf16>, vector<256x256xbf16>, vector<128x256xf32> -> vector<128x256xf32>
    %c0_56 = arith.constant 0 : index
    %c0_57 = arith.constant 0 : index
    %112 = vector.load %arg20[%c0_56, %c0_57] : memref<1x256xf32, #tpu.memory_space<vmem>>, vector<1x256xf32>
    %113 = vector.broadcast %112 : vector<1x256xf32> to vector<128x256xf32>
    %114 = arith.addf %111, %113 : vector<128x256xf32>
    %cst_58 = arith.constant 0.000000e+00 : f32
    %115 = vector.broadcast %cst_58 : f32 to vector<128x256xf32>
    %116 = arith.maximumf %114, %115 : vector<128x256xf32>
    %c0_59 = arith.constant 0 : index
    %c0_60 = arith.constant 0 : index
    %117 = vector.load %arg21[%c0_59, %c0_60] : memref<1x256xf32, #tpu.memory_space<vmem>>, vector<1x256xf32>
    %c0_61 = arith.constant 0 : index
    %c0_62 = arith.constant 0 : index
    %118 = vector.load %arg22[%c0_61, %c0_62] : memref<1x256xf32, #tpu.memory_space<vmem>>, vector<1x256xf32>
    %119 = vector.broadcast %3 : vector<128x1xf32> to vector<128x256xf32>
    %120 = arith.mulf %116, %119 : vector<128x256xf32>
    %cst_63 = arith.constant dense<0.000000e+00> : vector<256xf32>
    %121 = vector.multi_reduction <add>, %120, %cst_63 [0] : vector<128x256xf32> to vector<256xf32>
    %122 = vector.shape_cast %121 : vector<256xf32> to vector<1x256xf32>
    %123 = vector.broadcast %7 : vector<1x1xf32> to vector<1x256xf32>
    %124 = arith.mulf %122, %123 : vector<1x256xf32>
    %125 = vector.broadcast %124 : vector<1x256xf32> to vector<128x256xf32>
    %126 = arith.subf %116, %125 : vector<128x256xf32>
    %127 = vector.broadcast %3 : vector<128x1xf32> to vector<128x256xf32>
    %128 = arith.mulf %126, %127 : vector<128x256xf32>
    %129 = arith.mulf %128, %128 : vector<128x256xf32>
    %cst_64 = arith.constant dense<0.000000e+00> : vector<256xf32>
    %130 = vector.multi_reduction <add>, %129, %cst_64 [0] : vector<128x256xf32> to vector<256xf32>
    %131 = vector.shape_cast %130 : vector<256xf32> to vector<1x256xf32>
    %132 = vector.broadcast %7 : vector<1x1xf32> to vector<1x256xf32>
    %133 = arith.mulf %131, %132 : vector<1x256xf32>
    %134 = vector.broadcast %124 : vector<1x256xf32> to vector<128x256xf32>
    %135 = arith.subf %116, %134 : vector<128x256xf32>
    %cst_65 = arith.constant 9.99999974E-6 : f32
    %136 = vector.broadcast %cst_65 : f32 to vector<1x256xf32>
    %137 = arith.addf %133, %136 : vector<1x256xf32>
    %138 = math.rsqrt %137 : vector<1x256xf32>
    %139 = vector.broadcast %138 : vector<1x256xf32> to vector<128x256xf32>
    %140 = arith.mulf %135, %139 : vector<128x256xf32>
    %141 = vector.broadcast %117 : vector<1x256xf32> to vector<128x256xf32>
    %142 = arith.mulf %140, %141 : vector<128x256xf32>
    %143 = vector.broadcast %118 : vector<1x256xf32> to vector<128x256xf32>
    %144 = arith.addf %142, %143 : vector<128x256xf32>
    %c0_66 = arith.constant 0 : index
    %c0_67 = arith.constant 0 : index
    %145 = vector.load %arg23[%c0_66, %c0_67] : memref<1x256xf32, #tpu.memory_space<vmem>>, vector<1x256xf32>
    %c0_68 = arith.constant 0 : index
    %c0_69 = arith.constant 0 : index
    %146 = vector.load %arg24[%c0_68, %c0_69] : memref<1x256xf32, #tpu.memory_space<vmem>>, vector<1x256xf32>
    %147 = vector.broadcast %3 : vector<128x1xf32> to vector<128x256xf32>
    %148 = arith.mulf %144, %147 : vector<128x256xf32>
    %cst_70 = arith.constant dense<0.000000e+00> : vector<256xf32>
    %149 = vector.multi_reduction <add>, %148, %cst_70 [0] : vector<128x256xf32> to vector<256xf32>
    %150 = vector.shape_cast %149 : vector<256xf32> to vector<1x256xf32>
    %151 = vector.broadcast %7 : vector<1x1xf32> to vector<1x256xf32>
    %152 = arith.mulf %150, %151 : vector<1x256xf32>
    %153 = vector.broadcast %152 : vector<1x256xf32> to vector<128x256xf32>
    %154 = arith.subf %144, %153 : vector<128x256xf32>
    %155 = vector.broadcast %3 : vector<128x1xf32> to vector<128x256xf32>
    %156 = arith.mulf %154, %155 : vector<128x256xf32>
    %157 = arith.mulf %156, %156 : vector<128x256xf32>
    %cst_71 = arith.constant dense<0.000000e+00> : vector<256xf32>
    %158 = vector.multi_reduction <add>, %157, %cst_71 [0] : vector<128x256xf32> to vector<256xf32>
    %159 = vector.shape_cast %158 : vector<256xf32> to vector<1x256xf32>
    %160 = vector.broadcast %7 : vector<1x1xf32> to vector<1x256xf32>
    %161 = arith.mulf %159, %160 : vector<1x256xf32>
    %162 = vector.broadcast %152 : vector<1x256xf32> to vector<128x256xf32>
    %163 = arith.subf %144, %162 : vector<128x256xf32>
    %cst_72 = arith.constant 9.99999974E-6 : f32
    %164 = vector.broadcast %cst_72 : f32 to vector<1x256xf32>
    %165 = arith.addf %161, %164 : vector<1x256xf32>
    %166 = math.rsqrt %165 : vector<1x256xf32>
    %167 = vector.broadcast %166 : vector<1x256xf32> to vector<128x256xf32>
    %168 = arith.mulf %163, %167 : vector<128x256xf32>
    %169 = vector.broadcast %145 : vector<1x256xf32> to vector<128x256xf32>
    %170 = arith.mulf %168, %169 : vector<128x256xf32>
    %171 = vector.broadcast %146 : vector<1x256xf32> to vector<128x256xf32>
    %172 = arith.addf %170, %171 : vector<128x256xf32>
    %cst_73 = arith.constant 0.000000e+00 : f32
    %173 = vector.broadcast %cst_73 : f32 to vector<128x256xf32>
    %174 = arith.maximumf %172, %173 : vector<128x256xf32>
    %175 = arith.truncf %174 : vector<128x256xf32> to vector<128x256xbf16>
    %cst_74 = arith.constant dense<0.000000e+00> : vector<128x256xf32>
    %176 = tpu.matmul %1, %175, %cst_74 {dimension_numbers = #tpu.dot_dimension_numbers<[1], [0], [0], [1], [0, 0, 1, 1], [], []>} : vector<128x128xbf16>, vector<128x256xbf16>, vector<128x256xf32> -> vector<128x256xf32>
    %c0_75 = arith.constant 0 : index
    %c0_76 = arith.constant 0 : index
    %177 = vector.load %arg6[%c0_75, %c0_76] : memref<1x256xf32, #tpu.memory_space<vmem>>, vector<1x256xf32>
    %178 = vector.broadcast %177 : vector<1x256xf32> to vector<128x256xf32>
    %179 = arith.mulf %178, %174 : vector<128x256xf32>
    %180 = arith.addf %176, %179 : vector<128x256xf32>
    %181 = arith.truncf %180 : vector<128x256xf32> to vector<128x256xbf16>
    %c0_77 = arith.constant 0 : index
    %c0_78 = arith.constant 0 : index
    %182 = vector.load %arg25[%c0_77, %c0_78] : memref<256x128xbf16, #tpu.memory_space<vmem>>, vector<256x128xbf16>
    %cst_79 = arith.constant dense<0.000000e+00> : vector<128x128xf32>
    %183 = tpu.matmul %181, %182, %cst_79 {dimension_numbers = #tpu.dot_dimension_numbers<[1], [0], [0], [1], [0, 0, 1, 1], [], []>} : vector<128x256xbf16>, vector<256x128xbf16>, vector<128x128xf32> -> vector<128x128xf32>
    %c0_80 = arith.constant 0 : index
    %c0_81 = arith.constant 0 : index
    %184 = vector.load %arg26[%c0_80, %c0_81] : memref<1x128xf32, #tpu.memory_space<vmem>>, vector<1x128xf32>
    %185 = vector.broadcast %184 : vector<1x128xf32> to vector<128x128xf32>
    %186 = arith.addf %183, %185 : vector<128x128xf32>
    %cst_82 = arith.constant 0.000000e+00 : f32
    %187 = vector.broadcast %cst_82 : f32 to vector<128x128xf32>
    %188 = arith.maximumf %186, %187 : vector<128x128xf32>
    %189 = arith.truncf %188 : vector<128x128xf32> to vector<128x128xbf16>
    %c0_83 = arith.constant 0 : index
    %c0_84 = arith.constant 0 : index
    %190 = vector.load %arg27[%c0_83, %c0_84] : memref<128x128xbf16, #tpu.memory_space<vmem>>, vector<128x128xbf16>
    %cst_85 = arith.constant dense<0.000000e+00> : vector<128x128xf32>
    %191 = tpu.matmul %189, %190, %cst_85 {dimension_numbers = #tpu.dot_dimension_numbers<[1], [0], [0], [1], [0, 0, 1, 1], [], []>} : vector<128x128xbf16>, vector<128x128xbf16>, vector<128x128xf32> -> vector<128x128xf32>
    %c0_86 = arith.constant 0 : index
    %c0_87 = arith.constant 0 : index
    %192 = vector.load %arg28[%c0_86, %c0_87] : memref<1x128xf32, #tpu.memory_space<vmem>>, vector<1x128xf32>
    %193 = vector.broadcast %192 : vector<1x128xf32> to vector<128x128xf32>
    %194 = arith.addf %191, %193 : vector<128x128xf32>
    %cst_88 = arith.constant 0.000000e+00 : f32
    %195 = vector.broadcast %cst_88 : f32 to vector<128x128xf32>
    %196 = arith.maximumf %194, %195 : vector<128x128xf32>
    %c0_89 = arith.constant 0 : index
    %c0_90 = arith.constant 0 : index
    %197 = vector.load %arg29[%c0_89, %c0_90] : memref<1x128xf32, #tpu.memory_space<vmem>>, vector<1x128xf32>
    %c0_91 = arith.constant 0 : index
    %c0_92 = arith.constant 0 : index
    %198 = vector.load %arg30[%c0_91, %c0_92] : memref<1x128xf32, #tpu.memory_space<vmem>>, vector<1x128xf32>
    %199 = vector.broadcast %3 : vector<128x1xf32> to vector<128x128xf32>
    %200 = arith.mulf %196, %199 : vector<128x128xf32>
    %cst_93 = arith.constant dense<0.000000e+00> : vector<128xf32>
    %201 = vector.multi_reduction <add>, %200, %cst_93 [0] : vector<128x128xf32> to vector<128xf32>
    %202 = vector.shape_cast %201 : vector<128xf32> to vector<1x128xf32>
    %203 = vector.broadcast %7 : vector<1x1xf32> to vector<1x128xf32>
    %204 = arith.mulf %202, %203 : vector<1x128xf32>
    %205 = vector.broadcast %204 : vector<1x128xf32> to vector<128x128xf32>
    %206 = arith.subf %196, %205 : vector<128x128xf32>
    %207 = vector.broadcast %3 : vector<128x1xf32> to vector<128x128xf32>
    %208 = arith.mulf %206, %207 : vector<128x128xf32>
    %209 = arith.mulf %208, %208 : vector<128x128xf32>
    %cst_94 = arith.constant dense<0.000000e+00> : vector<128xf32>
    %210 = vector.multi_reduction <add>, %209, %cst_94 [0] : vector<128x128xf32> to vector<128xf32>
    %211 = vector.shape_cast %210 : vector<128xf32> to vector<1x128xf32>
    %212 = vector.broadcast %7 : vector<1x1xf32> to vector<1x128xf32>
    %213 = arith.mulf %211, %212 : vector<1x128xf32>
    %214 = vector.broadcast %204 : vector<1x128xf32> to vector<128x128xf32>
    %215 = arith.subf %196, %214 : vector<128x128xf32>
    %cst_95 = arith.constant 9.99999974E-6 : f32
    %216 = vector.broadcast %cst_95 : f32 to vector<1x128xf32>
    %217 = arith.addf %213, %216 : vector<1x128xf32>
    %218 = math.rsqrt %217 : vector<1x128xf32>
    %219 = vector.broadcast %218 : vector<1x128xf32> to vector<128x128xf32>
    %220 = arith.mulf %215, %219 : vector<128x128xf32>
    %221 = vector.broadcast %197 : vector<1x128xf32> to vector<128x128xf32>
    %222 = arith.mulf %220, %221 : vector<128x128xf32>
    %223 = vector.broadcast %198 : vector<1x128xf32> to vector<128x128xf32>
    %224 = arith.addf %222, %223 : vector<128x128xf32>
    %c0_96 = arith.constant 0 : index
    %c0_97 = arith.constant 0 : index
    %c0_98 = arith.constant 0 : index
    %225 = vector.load %arg31[%c0_96, %c0_97, %c0_98] : memref<1x128x128xf32, #tpu.memory_space<vmem>>, vector<1x128x128xf32>
    %226 = vector.shape_cast %225 : vector<1x128x128xf32> to vector<128x128xf32>
    %227 = vector.shape_cast %224 : vector<128x128xf32> to vector<1x128x128xf32>
    tpu.vector_store %arg31[%c0_96, %c0_97, %c0_98], %227 {strides = array<i32>} : memref<1x128x128xf32, #tpu.memory_space<vmem>>, vector<1x128x128xf32>,
    return
  }
  func.func @transform_0(%arg0: i32) -> (i32, i32, i32) {
    %c0_i32 = arith.constant 0 : i32
    %c0_i32_0 = arith.constant 0 : i32
    %c0_i32_1 = arith.constant 0 : i32
    return %arg0, %c0_i32, %c0_i32_0 : i32, i32, i32
  }
  func.func @transform_1(%arg0: i32) -> (i32, i32, i32) {
    %c0_i32 = arith.constant 0 : i32
    %c0_i32_0 = arith.constant 0 : i32
    %c0_i32_1 = arith.constant 0 : i32
    return %arg0, %c0_i32, %c0_i32_0 : i32, i32, i32
  }
  func.func @transform_2(%arg0: i32) -> (i32, i32, i32) {
    %c0_i32 = arith.constant 0 : i32
    %c0_i32_0 = arith.constant 0 : i32
    %c0_i32_1 = arith.constant 0 : i32
    return %arg0, %c0_i32, %c0_i32_0 : i32, i32, i32
  }
  func.func @transform_3(%arg0: i32) -> (i32, i32) {
    %c0_i32 = arith.constant 0 : i32
    %c0_i32_0 = arith.constant 0 : i32
    %c0_i32_1 = arith.constant 0 : i32
    return %c0_i32, %c0_i32_0 : i32, i32
  }
  func.func @transform_4(%arg0: i32) -> (i32, i32) {
    %c0_i32 = arith.constant 0 : i32
    %c0_i32_0 = arith.constant 0 : i32
    %c0_i32_1 = arith.constant 0 : i32
    return %c0_i32, %c0_i32_0 : i32, i32
  }
  func.func @transform_5(%arg0: i32) -> (i32, i32) {
    %c0_i32 = arith.constant 0 : i32
    %c0_i32_0 = arith.constant 0 : i32
    %c0_i32_1 = arith.constant 0 : i32
    return %c0_i32, %c0_i32_0 : i32, i32
  }
  func.func @transform_6(%arg0: i32) -> (i32, i32) {
    %c0_i32 = arith.constant 0 : i32
    %c0_i32_0 = arith.constant 0 : i32
    %c0_i32_1 = arith.constant 0 : i32
    return %c0_i32, %c0_i32_0 : i32, i32
  }
  func.func @transform_7(%arg0: i32) -> (i32, i32) {
    %c0_i32 = arith.constant 0 : i32
    %c0_i32_0 = arith.constant 0 : i32
    %c0_i32_1 = arith.constant 0 : i32
    return %c0_i32, %c0_i32_0 : i32, i32
  }
  func.func @transform_8(%arg0: i32) -> (i32, i32) {
    %c0_i32 = arith.constant 0 : i32
    %c0_i32_0 = arith.constant 0 : i32
    %c0_i32_1 = arith.constant 0 : i32
    return %c0_i32, %c0_i32_0 : i32, i32
  }
  func.func @transform_9(%arg0: i32) -> (i32, i32) {
    %c0_i32 = arith.constant 0 : i32
    %c0_i32_0 = arith.constant 0 : i32
    %c0_i32_1 = arith.constant 0 : i32
    return %c0_i32, %c0_i32_0 : i32, i32
  }
  func.func @transform_10(%arg0: i32) -> (i32, i32) {
    %c0_i32 = arith.constant 0 : i32
    %c0_i32_0 = arith.constant 0 : i32
    %c0_i32_1 = arith.constant 0 : i32
    return %c0_i32, %c0_i32_0 : i32, i32
  }
  func.func @transform_11(%arg0: i32) -> (i32, i32) {
    %c0_i32 = arith.constant 0 : i32
    %c0_i32_0 = arith.constant 0 : i32
    %c0_i32_1 = arith.constant 0 : i32
    return %c0_i32, %c0_i32_0 : i32, i32
  }
  func.func @transform_12(%arg0: i32) -> (i32, i32) {
    %c0_i32 = arith.constant 0 : i32
    %c0_i32_0 = arith.constant 0 : i32
    %c0_i32_1 = arith.constant 0 : i32
    return %c0_i32, %c0_i32_0 : i32, i32
  }
  func.func @transform_13(%arg0: i32) -> (i32, i32) {
    %c0_i32 = arith.constant 0 : i32
    %c0_i32_0 = arith.constant 0 : i32
    %c0_i32_1 = arith.constant 0 : i32
    return %c0_i32, %c0_i32_0 : i32, i32
  }
  func.func @transform_14(%arg0: i32) -> (i32, i32) {
    %c0_i32 = arith.constant 0 : i32
    %c0_i32_0 = arith.constant 0 : i32
    %c0_i32_1 = arith.constant 0 : i32
    return %c0_i32, %c0_i32_0 : i32, i32
  }
  func.func @transform_15(%arg0: i32) -> (i32, i32) {
    %c0_i32 = arith.constant 0 : i32
    %c0_i32_0 = arith.constant 0 : i32
    %c0_i32_1 = arith.constant 0 : i32
    return %c0_i32, %c0_i32_0 : i32, i32
  }
  func.func @transform_16(%arg0: i32) -> (i32, i32) {
    %c0_i32 = arith.constant 0 : i32
    %c0_i32_0 = arith.constant 0 : i32
    %c0_i32_1 = arith.constant 0 : i32
    return %c0_i32, %c0_i32_0 : i32, i32
  }
  func.func @transform_17(%arg0: i32) -> (i32, i32) {
    %c0_i32 = arith.constant 0 : i32
    %c0_i32_0 = arith.constant 0 : i32
    %c0_i32_1 = arith.constant 0 : i32
    return %c0_i32, %c0_i32_0 : i32, i32
  }
  func.func @transform_18(%arg0: i32) -> (i32, i32) {
    %c0_i32 = arith.constant 0 : i32
    %c0_i32_0 = arith.constant 0 : i32
    %c0_i32_1 = arith.constant 0 : i32
    return %c0_i32, %c0_i32_0 : i32, i32
  }
  func.func @transform_19(%arg0: i32) -> (i32, i32) {
    %c0_i32 = arith.constant 0 : i32
    %c0_i32_0 = arith.constant 0 : i32
    %c0_i32_1 = arith.constant 0 : i32
    return %c0_i32, %c0_i32_0 : i32, i32
  }
  func.func @transform_20(%arg0: i32) -> (i32, i32) {
    %c0_i32 = arith.constant 0 : i32
    %c0_i32_0 = arith.constant 0 : i32
    %c0_i32_1 = arith.constant 0 : i32
    return %c0_i32, %c0_i32_0 : i32, i32
  }
  func.func @transform_21(%arg0: i32) -> (i32, i32) {
    %c0_i32 = arith.constant 0 : i32
    %c0_i32_0 = arith.constant 0 : i32
    %c0_i32_1 = arith.constant 0 : i32
    return %c0_i32, %c0_i32_0 : i32, i32
  }
  func.func @transform_22(%arg0: i32) -> (i32, i32) {
    %c0_i32 = arith.constant 0 : i32
    %c0_i32_0 = arith.constant 0 : i32
    %c0_i32_1 = arith.constant 0 : i32
    return %c0_i32, %c0_i32_0 : i32, i32
  }
  func.func @transform_23(%arg0: i32) -> (i32, i32) {
    %c0_i32 = arith.constant 0 : i32
    %c0_i32_0 = arith.constant 0 : i32
    %c0_i32_1 = arith.constant 0 : i32
    return %c0_i32, %c0_i32_0 : i32, i32
  }
  func.func @transform_24(%arg0: i32) -> (i32, i32) {
    %c0_i32 = arith.constant 0 : i32
    %c0_i32_0 = arith.constant 0 : i32
    %c0_i32_1 = arith.constant 0 : i32
    return %c0_i32, %c0_i32_0 : i32, i32
  }
  func.func @transform_25(%arg0: i32) -> (i32, i32) {
    %c0_i32 = arith.constant 0 : i32
    %c0_i32_0 = arith.constant 0 : i32
    %c0_i32_1 = arith.constant 0 : i32
    return %c0_i32, %c0_i32_0 : i32, i32
  }
  func.func @transform_26(%arg0: i32) -> (i32, i32) {
    %c0_i32 = arith.constant 0 : i32
    %c0_i32_0 = arith.constant 0 : i32
    %c0_i32_1 = arith.constant 0 : i32
    return %c0_i32, %c0_i32_0 : i32, i32
  }
  func.func @transform_27(%arg0: i32) -> (i32, i32) {
    %c0_i32 = arith.constant 0 : i32
    %c0_i32_0 = arith.constant 0 : i32
    %c0_i32_1 = arith.constant 0 : i32
    return %c0_i32, %c0_i32_0 : i32, i32
  }
  func.func @transform_28(%arg0: i32) -> (i32, i32) {
    %c0_i32 = arith.constant 0 : i32
    %c0_i32_0 = arith.constant 0 : i32
    %c0_i32_1 = arith.constant 0 : i32
    return %c0_i32, %c0_i32_0 : i32, i32
  }
  func.func @transform_29(%arg0: i32) -> (i32, i32) {
    %c0_i32 = arith.constant 0 : i32
    %c0_i32_0 = arith.constant 0 : i32
    %c0_i32_1 = arith.constant 0 : i32
    return %c0_i32, %c0_i32_0 : i32, i32
  }
  func.func @transform_30(%arg0: i32) -> (i32, i32, i32) {
    %c0_i32 = arith.constant 0 : i32
    %c0_i32_0 = arith.constant 0 : i32
    %c0_i32_1 = arith.constant 0 : i32
    return %arg0, %c0_i32, %c0_i32_0 : i32, i32, i32
  }
}

</mosaic_0001>

<llo_original>
// kernel: mul.5
$region0: #{mul.5}
  #allocation0 [shape = 's32[1]{0}', space=sflag, size = 0x4, scoped, tag = 'scoped memory for mul.5']
  %s0 = inlined_call_operand.<no memory space> [shape: f32[], index: 0, kind: input, shape index: {}]
  %s1 = inlined_call_operand.vmem [shape: f32[1,256], index: 1, kind: output, shape index: {}]
  %v2 = vstv %s0
  %3 = vst [vmem:[%s1] sm:$0x1] %v2
  %s4 = scalar_lea.vmem %s1, 1
  %5 = vst [vmem:[%s4] sm:$0x1] %v2

// kernel: mul.3
$region0: #{mul.3}
  #allocation0 [shape = 's32[1]{0}', space=sflag, size = 0x4, scoped, tag = 'scoped memory for mul.3']
  %s0 = inlined_call_operand.<no memory space> [shape: f32[], index: 0, kind: input, shape index: {}]
  %s1 = inlined_call_operand.vmem [shape: f32[1,128], index: 1, kind: output, shape index: {}]
  %v2 = vstv %s0
  %3 = vst [vmem:[%s1] sm:$0x1] %v2

// kernel: gin_encoder_forward_batched.1
$region0: #{gin_encoder_forward_batched.1}
  #allocation0 [shape = 'u32[]', space=smem, size = 0x4, offset = 0x4, fixed_abs, tag = 'smem constant byte address 0x4 - core index']
  #allocation1 [shape = 'u32[144,128]{1,0:T(1,128)}', space=vmem, size = 0x12000, scoped, tag = 'internal scratch']
  %s0 = inlined_call_operand.smem [shape: u32[31], index: -1, kind: input, shape index: {}]
  %s1 = sld [smem:[%s0]]
  %s2 = scalar_lea.smem %s0, 1
  %s3 = sld [smem:[%s2]]
  %s4 = scalar_lea.smem %s0, 2
  %s5 = sld [smem:[%s4]]
  %s6 = scalar_lea.smem %s0, 3
  %s7 = sld [smem:[%s6]]
  %s8 = scalar_lea.smem %s0, 4
  %s9 = sld [smem:[%s8]]
  %s10 = scalar_lea.smem %s0, 5
  %s11 = sld [smem:[%s10]]
  %s12 = scalar_lea.smem %s0, 6
  %s13 = sld [smem:[%s12]]
  %s14 = scalar_lea.smem %s0, 7
  %s15 = sld [smem:[%s14]]
  %s16 = scalar_lea.smem %s0, 8
  %s17 = sld [smem:[%s16]]
  %s18 = scalar_lea.smem %s0, 9
  %s19 = sld [smem:[%s18]]
  %s20 = scalar_lea.smem %s0, 10
  %s21 = sld [smem:[%s20]]
  %s22 = scalar_lea.smem %s0, 11
  %s23 = sld [smem:[%s22]]
  %s24 = scalar_lea.smem %s0, 12
  %s25 = sld [smem:[%s24]]
  %s26 = scalar_lea.smem %s0, 13
  %s27 = sld [smem:[%s26]]
  %s28 = scalar_lea.smem %s0, 14
  %s29 = sld [smem:[%s28]]
  %s30 = scalar_lea.smem %s0, 15
  %s31 = sld [smem:[%s30]]
  %s32 = scalar_lea.smem %s0, 16
  %s33 = sld [smem:[%s32]]
  %s34 = scalar_lea.smem %s0, 17
  %s35 = sld [smem:[%s34]]
  %s36 = scalar_lea.smem %s0, 18
  %s37 = sld [smem:[%s36]]
  %s38 = scalar_lea.smem %s0, 19
  %s39 = sld [smem:[%s38]]
  %s40 = scalar_lea.smem %s0, 20
  %s41 = sld [smem:[%s40]]
  %s42 = scalar_lea.smem %s0, 21
  %s43 = sld [smem:[%s42]]
  %s44 = scalar_lea.smem %s0, 22
  %s45 = sld [smem:[%s44]]
  %s46 = scalar_lea.smem %s0, 23
  %s47 = sld [smem:[%s46]]
  %s48 = scalar_lea.smem %s0, 24
  %s49 = sld [smem:[%s48]]
  %s50 = scalar_lea.smem %s0, 25
  %s51 = sld [smem:[%s50]]
  %s52 = scalar_lea.smem %s0, 26
  %s53 = sld [smem:[%s52]]
  %s54 = scalar_lea.smem %s0, 27
  %s55 = sld [smem:[%s54]]
  %s56 = scalar_lea.smem %s0, 28
  %s57 = sld [smem:[%s56]]
  %s58 = scalar_lea.smem %s0, 29
  %s59 = sld [smem:[%s58]]
  %s60 = scalar_lea.smem %s0, 30
  %s61 = sld [smem:[%s60]]
  %s62 = sld [smem:[#allocation0]]
  $region153: #{gin_encoder_forward_batched.1} parent=0
    _
  %s64 = ssub.s32 1, %s62
  %s65 = scalar_select 0, %s64, %s62
  $region1: #{gin_encoder_forward_batched.1} parent=0
    #allocation2 [shape = 'u8[131072]{0}', space=vmem, size = 0x20000, scoped, tag = 'output window, operand 0']
    #allocation3 [shape = 's32[2]{0}', space=sflag, size = 0x8, scoped, tag = 'scoped memory for gin_encoder_forward_batched.1']
    %66 = vsyncpa [#allocation3], 0
    %s67 = scalar_lea.sflag [#allocation3], 1
    %68 = vsyncpa %s67, 0
    loop: start=0, step=1, limit=6
    $region2: #{gin_encoder_forward_batched.1} parent=1 // loop_pre_header
      _
    $region3: #{gin_encoder_forward_batched.1} parent=1 // loop_header
      %s70 = sphi 0, %s74
      %p71 = scmp.ge.s32.totalorder %s70, 6
      %s80 = sphi 0, %s82
      %s83 = sphi 0, %s80
      %s84 = sphi 0, %s83
      %s100 = sphi 0, %s84
      %s106 = sphi 0, %s108
      %s109 = sphi 0, %s106
      %s110 = sphi 0, %s109
      %s126 = sphi 0, %s110
      %s132 = sphi 0, %s134
      %s135 = sphi 0, %s132
      %s136 = sphi 0, %s135
      %s152 = sphi 0, %s136
      %s156 = sphi 0, %s156
      %s158 = sphi 0, %s156
      %s159 = sphi 0, %s158
      %s173 = sphi 0, %s159
      %s177 = sphi 0, %s177
      %s179 = sphi 0, %s177
      %s180 = sphi 0, %s179
      %s194 = sphi 0, %s180
      %s198 = sphi 0, %s198
      %s200 = sphi 0, %s198
      %s201 = sphi 0, %s200
      %s215 = sphi 0, %s201
      %s219 = sphi 0, %s219
      %s221 = sphi 0, %s219
      %s222 = sphi 0, %s221
      %s236 = sphi 0, %s222
      %s240 = sphi 0, %s240
      %s242 = sphi 0, %s240
      %s243 = sphi 0, %s242
      %s257 = sphi 0, %s243
      %s261 = sphi 0, %s261
      %s263 = sphi 0, %s261
      %s264 = sphi 0, %s263
      %s278 = sphi 0, %s264
      %s282 = sphi 0, %s282
      %s284 = sphi 0, %s282
      %s285 = sphi 0, %s284
      %s299 = sphi 0, %s285
      %s303 = sphi 0, %s303
      %s305 = sphi 0, %s303
      %s306 = sphi 0, %s305
      %s320 = sphi 0, %s306
      %s324 = sphi 0, %s324
      %s326 = sphi 0, %s324
      %s327 = sphi 0, %s326
      %s341 = sphi 0, %s327
      %s345 = sphi 0, %s345
      %s347 = sphi 0, %s345
      %s348 = sphi 0, %s347
      %s362 = sphi 0, %s348
      %s366 = sphi 0, %s366
      %s368 = sphi 0, %s366
      %s369 = sphi 0, %s368
      %s383 = sphi 0, %s369
      %s387 = sphi 0, %s387
      %s389 = sphi 0, %s387
      %s390 = sphi 0, %s389
      %s404 = sphi 0, %s390
      %s408 = sphi 0, %s408
      %s410 = sphi 0, %s408
      %s411 = sphi 0, %s410
      %s425 = sphi 0, %s411
      %s429 = sphi 0, %s429
      %s431 = sphi 0, %s429
      %s432 = sphi 0, %s431
      %s446 = sphi 0, %s432
      %s450 = sphi 0, %s450
      %s452 = sphi 0, %s450
      %s453 = sphi 0, %s452
      %s467 = sphi 0, %s453
      %s471 = sphi 0, %s471
      %s473 = sphi 0, %s471
      %s474 = sphi 0, %s473
      %s488 = sphi 0, %s474
      %s492 = sphi 0, %s492
      %s494 = sphi 0, %s492
      %s495 = sphi 0, %s494
      %s509 = sphi 0, %s495
      %s513 = sphi 0, %s513
      %s515 = sphi 0, %s513
      %s516 = sphi 0, %s515
      %s530 = sphi 0, %s516
      %s534 = sphi 0, %s534
      %s536 = sphi 0, %s534
      %s537 = sphi 0, %s536
      %s551 = sphi 0, %s537
      %s555 = sphi 0, %s555
      %s557 = sphi 0, %s555
      %s558 = sphi 0, %s557
      %s572 = sphi 0, %s558
      %s576 = sphi 0, %s576
      %s578 = sphi 0, %s576
      %s579 = sphi 0, %s578
      %s593 = sphi 0, %s579
      %s597 = sphi 0, %s597
      %s599 = sphi 0, %s597
      %s600 = sphi 0, %s599
      %s614 = sphi 0, %s600
      %s618 = sphi 0, %s618
      %s620 = sphi 0, %s618
      %s621 = sphi 0, %s620
      %s635 = sphi 0, %s621
      %s639 = sphi 0, %s639
      %s641 = sphi 0, %s639
      %s642 = sphi 0, %s641
      %s656 = sphi 0, %s642
      %s660 = sphi 0, %s660
      %s662 = sphi 0, %s660
      %s663 = sphi 0, %s662
      %s677 = sphi 0, %s663
      %s681 = sphi 0, %s681
      %s683 = sphi 0, %s681
      %s684 = sphi 0, %s683
      %s698 = sphi 0, %s684
      %s702 = sphi 0, %s702
      %s704 = sphi 0, %s702
      %s705 = sphi 0, %s704
      %s719 = sphi 0, %s705
      %s725 = sphi 0, %s727
      %s728 = sphi 0, %s725
      %s729 = sphi 0, %s728
      %s745 = sphi 0, %s729
    $region4: #{gin_encoder_forward_batched.1} parent=1 // loop_header_branch
      %73 = sbr.rel (%p71) target = $region8
    $region5: #{gin_encoder_forward_batched.1} parent=1 // loop_body
      %s75 = ssub.s32 %s70, 1
      %s76 = ssub.s32 %s70, 2
      %s77 = sadd.s32 %s70, 1
      %s78 = ssub.s32 %s70, %s77
      %p79 = scmp.eq.s32.totalorder %s78, 0
      %s81 = sadd.s32 %s80, 1
      %s82 = scalar_select %p79, %s80, %s81
      %p85 = pneg %p79
      %p86 = scmp.eq.s32.totalorder %s70, 3
      %p87 = por %p85, %p86
      %p88 = scmp.ne.s32.totalorder %s80, %s83
      %p89 = scmp.eq.s32.totalorder %s70, 0
      %p90 = por %p88, %p89
      %p91 = scmp.ne.s32.totalorder %s80, %s83
      %p92 = scmp.eq.s32.totalorder %s75, 3
      %p93 = por %p91, %p92
      %p94 = scmp.ne.s32.totalorder %s83, %s84
      %p95 = scmp.eq.s32.totalorder %s75, 0
      %p96 = por %p94, %p95
      %p97 = scmp.ne.s32.totalorder %s83, %s84
      %p98 = scmp.eq.s32.totalorder %s76, 3
      %p99 = por %p97, %p98
      %p101 = scmp.ne.s32.totalorder %s84, %s100
      %p102 = scmp.eq.s32.totalorder %s76, 0
      %p103 = por %p101, %p102
      %s104 = ssub.s32 %s70, %s77
      %p105 = scmp.eq.s32.totalorder %s104, 0
      %s107 = sadd.s32 %s106, 1
      %s108 = scalar_select %p105, %s106, %s107
      %p111 = pneg %p105
      %p112 = scmp.eq.s32.totalorder %s70, 3
      %p113 = por %p111, %p112
      %p114 = scmp.ne.s32.totalorder %s106, %s109
      %p115 = scmp.eq.s32.totalorder %s70, 0
      %p116 = por %p114, %p115
      %p117 = scmp.ne.s32.totalorder %s106, %s109
      %p118 = scmp.eq.s32.totalorder %s75, 3
      %p119 = por %p117, %p118
      %p120 = scmp.ne.s32.totalorder %s109, %s110
      %p121 = scmp.eq.s32.totalorder %s75, 0
      %p122 = por %p120, %p121
      %p123 = scmp.ne.s32.totalorder %s109, %s110
      %p124 = scmp.eq.s32.totalorder %s76, 3
      %p125 = por %p123, %p124
      %p127 = scmp.ne.s32.totalorder %s110, %s126
      %p128 = scmp.eq.s32.totalorder %s76, 0
      %p129 = por %p127, %p128
      %s130 = ssub.s32 %s70, %s77
      %p131 = scmp.eq.s32.totalorder %s130, 0
      %s133 = sadd.s32 %s132, 1
      %s134 = scalar_select %p131, %s132, %s133
      %p137 = pneg %p131
      %p138 = scmp.eq.s32.totalorder %s70, 3
      %p139 = por %p137, %p138
      %p140 = scmp.ne.s32.totalorder %s132, %s135
      %p141 = scmp.eq.s32.totalorder %s70, 0
      %p142 = por %p140, %p141
      %p143 = scmp.ne.s32.totalorder %s132, %s135
      %p144 = scmp.eq.s32.totalorder %s75, 3
      %p145 = por %p143, %p144
      %p146 = scmp.ne.s32.totalorder %s135, %s136
      %p147 = scmp.eq.s32.totalorder %s75, 0
      %p148 = por %p146, %p147
      %p149 = scmp.ne.s32.totalorder %s135, %s136
      %p150 = scmp.eq.s32.totalorder %s76, 3
      %p151 = por %p149, %p150
      %p153 = scmp.ne.s32.totalorder %s136, %s152
      %p154 = scmp.eq.s32.totalorder %s76, 0
      %p155 = por %p153, %p154
      %s157 = sadd.s32 %s156, 1
      %p160 = scmp.eq.s32.totalorder %s70, 3
      %p161 = scmp.ne.s32.totalorder %s156, %s158
      %p162 = scmp.eq.s32.totalorder %s70, 0
      %p163 = por %p161, %p162
      %p164 = scmp.ne.s32.totalorder %s156, %s158
      %p165 = scmp.eq.s32.totalorder %s75, 3
      %p166 = por %p164, %p165
      %p167 = scmp.ne.s32.totalorder %s158, %s159
      %p168 = scmp.eq.s32.totalorder %s75, 0
      %p169 = por %p167, %p168
      %p170 = scmp.ne.s32.totalorder %s158, %s159
      %p171 = scmp.eq.s32.totalorder %s76, 3
      %p172 = por %p170, %p171
      %p174 = scmp.ne.s32.totalorder %s159, %s173
      %p175 = scmp.eq.s32.totalorder %s76, 0
      %p176 = por %p174, %p175
      %s178 = sadd.s32 %s177, 1
      %p181 = scmp.eq.s32.totalorder %s70, 3
      %p182 = scmp.ne.s32.totalorder %s177, %s179
      %p183 = scmp.eq.s32.totalorder %s70, 0
      %p184 = por %p182, %p183
      %p185 = scmp.ne.s32.totalorder %s177, %s179
      %p186 = scmp.eq.s32.totalorder %s75, 3
      %p187 = por %p185, %p186
      %p188 = scmp.ne.s32.totalorder %s179, %s180
      %p189 = scmp.eq.s32.totalorder %s75, 0
      %p190 = por %p188, %p189
      %p191 = scmp.ne.s32.totalorder %s179, %s180
      %p192 = scmp.eq.s32.totalorder %s76, 3
      %p193 = por %p191, %p192
      %p195 = scmp.ne.s32.totalorder %s180, %s194
      %p196 = scmp.eq.s32.totalorder %s76, 0
      %p197 = por %p195, %p196
      %s199 = sadd.s32 %s198, 1
      %p202 = scmp.eq.s32.totalorder %s70, 3
      %p203 = scmp.ne.s32.totalorder %s198, %s200
      %p204 = scmp.eq.s32.totalorder %s70, 0
      %p205 = por %p203, %p204
      %p206 = scmp.ne.s32.totalorder %s198, %s200
      %p207 = scmp.eq.s32.totalorder %s75, 3
      %p208 = por %p206, %p207
      %p209 = scmp.ne.s32.totalorder %s200, %s201
      %p210 = scmp.eq.s32.totalorder %s75, 0
      %p211 = por %p209, %p210
      %p212 = scmp.ne.s32.totalorder %s200, %s201
      %p213 = scmp.eq.s32.totalorder %s76, 3
      %p214 = por %p212, %p213
      %p216 = scmp.ne.s32.totalorder %s201, %s215
      %p217 = scmp.eq.s32.totalorder %s76, 0
      %p218 = por %p216, %p217
      %s220 = sadd.s32 %s219, 1
      %p223 = scmp.eq.s32.totalorder %s70, 3
      %p224 = scmp.ne.s32.totalorder %s219, %s221
      %p225 = scmp.eq.s32.totalorder %s70, 0
      %p226 = por %p224, %p225
      %p227 = scmp.ne.s32.totalorder %s219, %s221
      %p228 = scmp.eq.s32.totalorder %s75, 3
      %p229 = por %p227, %p228
      %p230 = scmp.ne.s32.totalorder %s221, %s222
      %p231 = scmp.eq.s32.totalorder %s75, 0
      %p232 = por %p230, %p231
      %p233 = scmp.ne.s32.totalorder %s221, %s222
      %p234 = scmp.eq.s32.totalorder %s76, 3
      %p235 = por %p233, %p234
      %p237 = scmp.ne.s32.totalorder %s222, %s236
      %p238 = scmp.eq.s32.totalorder %s76, 0
      %p239 = por %p237, %p238
      %s241 = sadd.s32 %s240, 1
      %p244 = scmp.eq.s32.totalorder %s70, 3
      %p245 = scmp.ne.s32.totalorder %s240, %s242
      %p246 = scmp.eq.s32.totalorder %s70, 0
      %p247 = por %p245, %p246
      %p248 = scmp.ne.s32.totalorder %s240, %s242
      %p249 = scmp.eq.s32.totalorder %s75, 3
      %p250 = por %p248, %p249
      %p251 = scmp.ne.s32.totalorder %s242, %s243
      %p252 = scmp.eq.s32.totalorder %s75, 0
      %p253 = por %p251, %p252
      %p254 = scmp.ne.s32.totalorder %s242, %s243
      %p255 = scmp.eq.s32.totalorder %s76, 3
      %p256 = por %p254, %p255
      %p258 = scmp.ne.s32.totalorder %s243, %s257
      %p259 = scmp.eq.s32.totalorder %s76, 0
      %p260 = por %p258, %p259
      %s262 = sadd.s32 %s261, 1
      %p265 = scmp.eq.s32.totalorder %s70, 3
      %p266 = scmp.ne.s32.totalorder %s261, %s263
      %p267 = scmp.eq.s32.totalorder %s70, 0
      %p268 = por %p266, %p267
      %p269 = scmp.ne.s32.totalorder %s261, %s263
      %p270 = scmp.eq.s32.totalorder %s75, 3
      %p271 = por %p269, %p270
      %p272 = scmp.ne.s32.totalorder %s263, %s264
      %p273 = scmp.eq.s32.totalorder %s75, 0
      %p274 = por %p272, %p273
      %p275 = scmp.ne.s32.totalorder %s263, %s264
      %p276 = scmp.eq.s32.totalorder %s76, 3
      %p277 = por %p275, %p276
      %p279 = scmp.ne.s32.totalorder %s264, %s278
      %p280 = scmp.eq.s32.totalorder %s76, 0
      %p281 = por %p279, %p280
      %s283 = sadd.s32 %s282, 1
      %p286 = scmp.eq.s32.totalorder %s70, 3
      %p287 = scmp.ne.s32.totalorder %s282, %s284
      %p288 = scmp.eq.s32.totalorder %s70, 0
      %p289 = por %p287, %p288
      %p290 = scmp.ne.s32.totalorder %s282, %s284
      %p291 = scmp.eq.s32.totalorder %s75, 3
      %p292 = por %p290, %p291
      %p293 = scmp.ne.s32.totalorder %s284, %s285
      %p294 = scmp.eq.s32.totalorder %s75, 0
      %p295 = por %p293, %p294
      %p296 = scmp.ne.s32.totalorder %s284, %s285
      %p297 = scmp.eq.s32.totalorder %s76, 3
      %p298 = por %p296, %p297
      %p300 = scmp.ne.s32.totalorder %s285, %s299
      %p301 = scmp.eq.s32.totalorder %s76, 0
      %p302 = por %p300, %p301
      %s304 = sadd.s32 %s303, 1
      %p307 = scmp.eq.s32.totalorder %s70, 3
      %p308 = scmp.ne.s32.totalorder %s303, %s305
      %p309 = scmp.eq.s32.totalorder %s70, 0
      %p310 = por %p308, %p309
      %p311 = scmp.ne.s32.totalorder %s303, %s305
      %p312 = scmp.eq.s32.totalorder %s75, 3
      %p313 = por %p311, %p312
      %p314 = scmp.ne.s32.totalorder %s305, %s306
      %p315 = scmp.eq.s32.totalorder %s75, 0
      %p316 = por %p314, %p315
      %p317 = scmp.ne.s32.totalorder %s305, %s306
      %p318 = scmp.eq.s32.totalorder %s76, 3
      %p319 = por %p317, %p318
      %p321 = scmp.ne.s32.totalorder %s306, %s320
      %p322 = scmp.eq.s32.totalorder %s76, 0
      %p323 = por %p321, %p322
      %s325 = sadd.s32 %s324, 1
      %p328 = scmp.eq.s32.totalorder %s70, 3
      %p329 = scmp.ne.s32.totalorder %s324, %s326
      %p330 = scmp.eq.s32.totalorder %s70, 0
      %p331 = por %p329, %p330
      %p332 = scmp.ne.s32.totalorder %s324, %s326
      %p333 = scmp.eq.s32.totalorder %s75, 3
      %p334 = por %p332, %p333
      %p335 = scmp.ne.s32.totalorder %s326, %s327
      %p336 = scmp.eq.s32.totalorder %s75, 0
      %p337 = por %p335, %p336
      %p338 = scmp.ne.s32.totalorder %s326, %s327
      %p339 = scmp.eq.s32.totalorder %s76, 3
      %p340 = por %p338, %p339
      %p342 = scmp.ne.s32.totalorder %s327, %s341
      %p343 = scmp.eq.s32.totalorder %s76, 0
      %p344 = por %p342, %p343
      %s346 = sadd.s32 %s345, 1
      %p349 = scmp.eq.s32.totalorder %s70, 3
      %p350 = scmp.ne.s32.totalorder %s345, %s347
      %p351 = scmp.eq.s32.totalorder %s70, 0
      %p352 = por %p350, %p351
      %p353 = scmp.ne.s32.totalorder %s345, %s347
      %p354 = scmp.eq.s32.totalorder %s75, 3
      %p355 = por %p353, %p354
      %p356 = scmp.ne.s32.totalorder %s347, %s348
      %p357 = scmp.eq.s32.totalorder %s75, 0
      %p358 = por %p356, %p357
      %p359 = scmp.ne.s32.totalorder %s347, %s348
      %p360 = scmp.eq.s32.totalorder %s76, 3
      %p361 = por %p359, %p360
      %p363 = scmp.ne.s32.totalorder %s348, %s362
      %p364 = scmp.eq.s32.totalorder %s76, 0
      %p365 = por %p363, %p364
      %s367 = sadd.s32 %s366, 1
      %p370 = scmp.eq.s32.totalorder %s70, 3
      %p371 = scmp.ne.s32.totalorder %s366, %s368
      %p372 = scmp.eq.s32.totalorder %s70, 0
      %p373 = por %p371, %p372
      %p374 = scmp.ne.s32.totalorder %s366, %s368
      %p375 = scmp.eq.s32.totalorder %s75, 3
      %p376 = por %p374, %p375
      %p377 = scmp.ne.s32.totalorder %s368, %s369
      %p378 = scmp.eq.s32.totalorder %s75, 0
      %p379 = por %p377, %p378
      %p380 = scmp.ne.s32.totalorder %s368, %s369
      %p381 = scmp.eq.s32.totalorder %s76, 3
      %p382 = por %p380, %p381
      %p384 = scmp.ne.s32.totalorder %s369, %s383
      %p385 = scmp.eq.s32.totalorder %s76, 0
      %p386 = por %p384, %p385
      %s388 = sadd.s32 %s387, 1
      %p391 = scmp.eq.s32.totalorder %s70, 3
      %p392 = scmp.ne.s32.totalorder %s387, %s389
      %p393 = scmp.eq.s32.totalorder %s70, 0
      %p394 = por %p392, %p393
      %p395 = scmp.ne.s32.totalorder %s387, %s389
      %p396 = scmp.eq.s32.totalorder %s75, 3
      %p397 = por %p395, %p396
      %p398 = scmp.ne.s32.totalorder %s389, %s390
      %p399 = scmp.eq.s32.totalorder %s75, 0
      %p400 = por %p398, %p399
      %p401 = scmp.ne.s32.totalorder %s389, %s390
      %p402 = scmp.eq.s32.totalorder %s76, 3
      %p403 = por %p401, %p402
      %p405 = scmp.ne.s32.totalorder %s390, %s404
      %p406 = scmp.eq.s32.totalorder %s76, 0
      %p407 = por %p405, %p406
      %s409 = sadd.s32 %s408, 1
      %p412 = scmp.eq.s32.totalorder %s70, 3
      %p413 = scmp.ne.s32.totalorder %s408, %s410
      %p414 = scmp.eq.s32.totalorder %s70, 0
      %p415 = por %p413, %p414
      %p416 = scmp.ne.s32.totalorder %s408, %s410
      %p417 = scmp.eq.s32.totalorder %s75, 3
      %p418 = por %p416, %p417
      %p419 = scmp.ne.s32.totalorder %s410, %s411
      %p420 = scmp.eq.s32.totalorder %s75, 0
      %p421 = por %p419, %p420
      %p422 = scmp.ne.s32.totalorder %s410, %s411
      %p423 = scmp.eq.s32.totalorder %s76, 3
      %p424 = por %p422, %p423
      %p426 = scmp.ne.s32.totalorder %s411, %s425
      %p427 = scmp.eq.s32.totalorder %s76, 0
      %p428 = por %p426, %p427
      %s430 = sadd.s32 %s429, 1
      %p433 = scmp.eq.s32.totalorder %s70, 3
      %p434 = scmp.ne.s32.totalorder %s429, %s431
      %p435 = scmp.eq.s32.totalorder %s70, 0
      %p436 = por %p434, %p435
      %p437 = scmp.ne.s32.totalorder %s429, %s431
      %p438 = scmp.eq.s32.totalorder %s75, 3
      %p439 = por %p437, %p438
      %p440 = scmp.ne.s32.totalorder %s431, %s432
      %p441 = scmp.eq.s32.totalorder %s75, 0
      %p442 = por %p440, %p441
      %p443 = scmp.ne.s32.totalorder %s431, %s432
      %p444 = scmp.eq.s32.totalorder %s76, 3
      %p445 = por %p443, %p444
      %p447 = scmp.ne.s32.totalorder %s432, %s446
      %p448 = scmp.eq.s32.totalorder %s76, 0
      %p449 = por %p447, %p448
      %s451 = sadd.s32 %s450, 1
      %p454 = scmp.eq.s32.totalorder %s70, 3
      %p455 = scmp.ne.s32.totalorder %s450, %s452
      %p456 = scmp.eq.s32.totalorder %s70, 0
      %p457 = por %p455, %p456
      %p458 = scmp.ne.s32.totalorder %s450, %s452
      %p459 = scmp.eq.s32.totalorder %s75, 3
      %p460 = por %p458, %p459
      %p461 = scmp.ne.s32.totalorder %s452, %s453
      %p462 = scmp.eq.s32.totalorder %s75, 0
      %p463 = por %p461, %p462
      %p464 = scmp.ne.s32.totalorder %s452, %s453
      %p465 = scmp.eq.s32.totalorder %s76, 3
      %p466 = por %p464, %p465
      %p468 = scmp.ne.s32.totalorder %s453, %s467
      %p469 = scmp.eq.s32.totalorder %s76, 0
      %p470 = por %p468, %p469
      %s472 = sadd.s32 %s471, 1
      %p475 = scmp.eq.s32.totalorder %s70, 3
      %p476 = scmp.ne.s32.totalorder %s471, %s473
      %p477 = scmp.eq.s32.totalorder %s70, 0
      %p478 = por %p476, %p477
      %p479 = scmp.ne.s32.totalorder %s471, %s473
      %p480 = scmp.eq.s32.totalorder %s75, 3
      %p481 = por %p479, %p480
      %p482 = scmp.ne.s32.totalorder %s473, %s474
      %p483 = scmp.eq.s32.totalorder %s75, 0
      %p484 = por %p482, %p483
      %p485 = scmp.ne.s32.totalorder %s473, %s474
      %p486 = scmp.eq.s32.totalorder %s76, 3
      %p487 = por %p485, %p486
      %p489 = scmp.ne.s32.totalorder %s474, %s488
      %p490 = scmp.eq.s32.totalorder %s76, 0
      %p491 = por %p489, %p490
      %s493 = sadd.s32 %s492, 1
      %p496 = scmp.eq.s32.totalorder %s70, 3
      %p497 = scmp.ne.s32.totalorder %s492, %s494
      %p498 = scmp.eq.s32.totalorder %s70, 0
      %p499 = por %p497, %p498
      %p500 = scmp.ne.s32.totalorder %s492, %s494
      %p501 = scmp.eq.s32.totalorder %s75, 3
      %p502 = por %p500, %p501
      %p503 = scmp.ne.s32.totalorder %s494, %s495
      %p504 = scmp.eq.s32.totalorder %s75, 0
      %p505 = por %p503, %p504
      %p506 = scmp.ne.s32.totalorder %s494, %s495
      %p507 = scmp.eq.s32.totalorder %s76, 3
      %p508 = por %p506, %p507
      %p510 = scmp.ne.s32.totalorder %s495, %s509
      %p511 = scmp.eq.s32.totalorder %s76, 0
      %p512 = por %p510, %p511
      %s514 = sadd.s32 %s513, 1
      %p517 = scmp.eq.s32.totalorder %s70, 3
      %p518 = scmp.ne.s32.totalorder %s513, %s515
      %p519 = scmp.eq.s32.totalorder %s70, 0
      %p520 = por %p518, %p519
      %p521 = scmp.ne.s32.totalorder %s513, %s515
      %p522 = scmp.eq.s32.totalorder %s75, 3
      %p523 = por %p521, %p522
      %p524 = scmp.ne.s32.totalorder %s515, %s516
      %p525 = scmp.eq.s32.totalorder %s75, 0
      %p526 = por %p524, %p525
      %p527 = scmp.ne.s32.totalorder %s515, %s516
      %p528 = scmp.eq.s32.totalorder %s76, 3
      %p529 = por %p527, %p528
      %p531 = scmp.ne.s32.totalorder %s516, %s530
      %p532 = scmp.eq.s32.totalorder %s76, 0
      %p533 = por %p531, %p532
      %s535 = sadd.s32 %s534, 1
      %p538 = scmp.eq.s32.totalorder %s70, 3
      %p539 = scmp.ne.s32.totalorder %s534, %s536
      %p540 = scmp.eq.s32.totalorder %s70, 0
      %p541 = por %p539, %p540
      %p542 = scmp.ne.s32.totalorder %s534, %s536
      %p543 = scmp.eq.s32.totalorder %s75, 3
      %p544 = por %p542, %p543
      %p545 = scmp.ne.s32.totalorder %s536, %s537
      %p546 = scmp.eq.s32.totalorder %s75, 0
      %p547 = por %p545, %p546
      %p548 = scmp.ne.s32.totalorder %s536, %s537
      %p549 = scmp.eq.s32.totalorder %s76, 3
      %p550 = por %p548, %p549
      %p552 = scmp.ne.s32.totalorder %s537, %s551
      %p553 = scmp.eq.s32.totalorder %s76, 0
      %p554 = por %p552, %p553
      %s556 = sadd.s32 %s555, 1
      %p559 = scmp.eq.s32.totalorder %s70, 3
      %p560 = scmp.ne.s32.totalorder %s555, %s557
      %p561 = scmp.eq.s32.totalorder %s70, 0
      %p562 = por %p560, %p561
      %p563 = scmp.ne.s32.totalorder %s555, %s557
      %p564 = scmp.eq.s32.totalorder %s75, 3
      %p565 = por %p563, %p564
      %p566 = scmp.ne.s32.totalorder %s557, %s558
      %p567 = scmp.eq.s32.totalorder %s75, 0
      %p568 = por %p566, %p567
      %p569 = scmp.ne.s32.totalorder %s557, %s558
      %p570 = scmp.eq.s32.totalorder %s76, 3
      %p571 = por %p569, %p570
      %p573 = scmp.ne.s32.totalorder %s558, %s572
      %p574 = scmp.eq.s32.totalorder %s76, 0
      %p575 = por %p573, %p574
      %s577 = sadd.s32 %s576, 1
      %p580 = scmp.eq.s32.totalorder %s70, 3
      %p581 = scmp.ne.s32.totalorder %s576, %s578
      %p582 = scmp.eq.s32.totalorder %s70, 0
      %p583 = por %p581, %p582
      %p584 = scmp.ne.s32.totalorder %s576, %s578
      %p585 = scmp.eq.s32.totalorder %s75, 3
      %p586 = por %p584, %p585
      %p587 = scmp.ne.s32.totalorder %s578, %s579
      %p588 = scmp.eq.s32.totalorder %s75, 0
      %p589 = por %p587, %p588
      %p590 = scmp.ne.s32.totalorder %s578, %s579
      %p591 = scmp.eq.s32.totalorder %s76, 3
      %p592 = por %p590, %p591
      %p594 = scmp.ne.s32.totalorder %s579, %s593
      %p595 = scmp.eq.s32.totalorder %s76, 0
      %p596 = por %p594, %p595
      %s598 = sadd.s32 %s597, 1
      %p601 = scmp.eq.s32.totalorder %s70, 3
      %p602 = scmp.ne.s32.totalorder %s597, %s599
      %p603 = scmp.eq.s32.totalorder %s70, 0
      %p604 = por %p602, %p603
      %p605 = scmp.ne.s32.totalorder %s597, %s599
      %p606 = scmp.eq.s32.totalorder %s75, 3
      %p607 = por %p605, %p606
      %p608 = scmp.ne.s32.totalorder %s599, %s600
      %p609 = scmp.eq.s32.totalorder %s75, 0
      %p610 = por %p608, %p609
      %p611 = scmp.ne.s32.totalorder %s599, %s600
      %p612 = scmp.eq.s32.totalorder %s76, 3
      %p613 = por %p611, %p612
      %p615 = scmp.ne.s32.totalorder %s600, %s614
      %p616 = scmp.eq.s32.totalorder %s76, 0
      %p617 = por %p615, %p616
      %s619 = sadd.s32 %s618, 1
      %p622 = scmp.eq.s32.totalorder %s70, 3
      %p623 = scmp.ne.s32.totalorder %s618, %s620
      %p624 = scmp.eq.s32.totalorder %s70, 0
      %p625 = por %p623, %p624
      %p626 = scmp.ne.s32.totalorder %s618, %s620
      %p627 = scmp.eq.s32.totalorder %s75, 3
      %p628 = por %p626, %p627
      %p629 = scmp.ne.s32.totalorder %s620, %s621
      %p630 = scmp.eq.s32.totalorder %s75, 0
      %p631 = por %p629, %p630
      %p632 = scmp.ne.s32.totalorder %s620, %s621
      %p633 = scmp.eq.s32.totalorder %s76, 3
      %p634 = por %p632, %p633
      %p636 = scmp.ne.s32.totalorder %s621, %s635
      %p637 = scmp.eq.s32.totalorder %s76, 0
      %p638 = por %p636, %p637
      %s640 = sadd.s32 %s639, 1
      %p643 = scmp.eq.s32.totalorder %s70, 3
      %p644 = scmp.ne.s32.totalorder %s639, %s641
      %p645 = scmp.eq.s32.totalorder %s70, 0
      %p646 = por %p644, %p645
      %p647 = scmp.ne.s32.totalorder %s639, %s641
      %p648 = scmp.eq.s32.totalorder %s75, 3
      %p649 = por %p647, %p648
      %p650 = scmp.ne.s32.totalorder %s641, %s642
      %p651 = scmp.eq.s32.totalorder %s75, 0
      %p652 = por %p650, %p651
      %p653 = scmp.ne.s32.totalorder %s641, %s642
      %p654 = scmp.eq.s32.totalorder %s76, 3
      %p655 = por %p653, %p654
      %p657 = scmp.ne.s32.totalorder %s642, %s656
      %p658 = scmp.eq.s32.totalorder %s76, 0
      %p659 = por %p657, %p658
      %s661 = sadd.s32 %s660, 1
      %p664 = scmp.eq.s32.totalorder %s70, 3
      %p665 = scmp.ne.s32.totalorder %s660, %s662
      %p666 = scmp.eq.s32.totalorder %s70, 0
      %p667 = por %p665, %p666
      %p668 = scmp.ne.s32.totalorder %s660, %s662
      %p669 = scmp.eq.s32.totalorder %s75, 3
      %p670 = por %p668, %p669
      %p671 = scmp.ne.s32.totalorder %s662, %s663
      %p672 = scmp.eq.s32.totalorder %s75, 0
      %p673 = por %p671, %p672
      %p674 = scmp.ne.s32.totalorder %s662, %s663
      %p675 = scmp.eq.s32.totalorder %s76, 3
      %p676 = por %p674, %p675
      %p678 = scmp.ne.s32.totalorder %s663, %s677
      %p679 = scmp.eq.s32.totalorder %s76, 0
      %p680 = por %p678, %p679
      %s682 = sadd.s32 %s681, 1
      %p685 = scmp.eq.s32.totalorder %s70, 3
      %p686 = scmp.ne.s32.totalorder %s681, %s683
      %p687 = scmp.eq.s32.totalorder %s70, 0
      %p688 = por %p686, %p687
      %p689 = scmp.ne.s32.totalorder %s681, %s683
      %p690 = scmp.eq.s32.totalorder %s75, 3
      %p691 = por %p689, %p690
      %p692 = scmp.ne.s32.totalorder %s683, %s684
      %p693 = scmp.eq.s32.totalorder %s75, 0
      %p694 = por %p692, %p693
      %p695 = scmp.ne.s32.totalorder %s683, %s684
      %p696 = scmp.eq.s32.totalorder %s76, 3
      %p697 = por %p695, %p696
      %p699 = scmp.ne.s32.totalorder %s684, %s698
      %p700 = scmp.eq.s32.totalorder %s76, 0
      %p701 = por %p699, %p700
      %s703 = sadd.s32 %s702, 1
      %p706 = scmp.eq.s32.totalorder %s70, 3
      %p707 = scmp.ne.s32.totalorder %s702, %s704
      %p708 = scmp.eq.s32.totalorder %s70, 0
      %p709 = por %p707, %p708
      %p710 = scmp.ne.s32.totalorder %s702, %s704
      %p711 = scmp.eq.s32.totalorder %s75, 3
      %p712 = por %p710, %p711
      %p713 = scmp.ne.s32.totalorder %s704, %s705
      %p714 = scmp.eq.s32.totalorder %s75, 0
      %p715 = por %p713, %p714
      %p716 = scmp.ne.s32.totalorder %s704, %s705
      %p717 = scmp.eq.s32.totalorder %s76, 3
      %p718 = por %p716, %p717
      %p720 = scmp.ne.s32.totalorder %s705, %s719
      %p721 = scmp.eq.s32.totalorder %s76, 0
      %p722 = por %p720, %p721
      %s723 = ssub.s32 %s70, %s77
      %p724 = scmp.eq.s32.totalorder %s723, 0
      %s726 = sadd.s32 %s725, 1
      %s727 = scalar_select %p724, %s725, %s726
      %p730 = pneg %p724
      %p731 = scmp.eq.s32.totalorder %s70, 3
      %p732 = por %p730, %p731
      %p733 = scmp.ne.s32.totalorder %s725, %s728
      %p734 = scmp.eq.s32.totalorder %s70, 0
      %p735 = por %p733, %p734
      %p736 = scmp.ne.s32.totalorder %s725, %s728
      %p737 = scmp.eq.s32.totalorder %s75, 3
      %p738 = por %p736, %p737
      %p739 = scmp.ne.s32.totalorder %s728, %s729
      %p740 = scmp.eq.s32.totalorder %s75, 0
      %p741 = por %p739, %p740
      %p742 = scmp.ne.s32.totalorder %s728, %s729
      %p743 = scmp.eq.s32.totalorder %s76, 3
      %p744 = por %p742, %p743
      %p746 = scmp.ne.s32.totalorder %s729, %s745
      %p747 = scmp.eq.s32.totalorder %s76, 0
      %p748 = por %p746, %p747
      %p749 = scmp.le.s32.totalorder 1, %s70
      %p750 = scmp.lt.s32.totalorder %s70, 5
      %p751 = pnand %p749, %p750
      %p752 = pneg %p751
      // Predicated region
      $region9: #{gin_encoder_forward_batched.1} parent=5 // pred_check
        _
      $region10: #{gin_encoder_forward_batched.1} parent=5 // pred_check_branch
        %754 = sbr.rel (%p751) target = $region12
      $region11: #{gin_encoder_forward_batched.1} parent=5 // pred_region
        %s755 = ssub.s32 %s70, 1
        // Predicated region
        $region13: #{gin_encoder_forward_batched.1} parent=11 // pred_check
          %p756 = pneg %p169
        $region14: #{gin_encoder_forward_batched.1} parent=11 // pred_check_branch
          %758 = sbr.rel (%p756) target = $region16
        $region15: #{gin_encoder_forward_batched.1} parent=11 // pred_region
          _
        $region16: #{gin_encoder_forward_batched.1} parent=11 // pred_fallthru
          _
        // Predicated region
        $region17: #{gin_encoder_forward_batched.1} parent=11 // pred_check
          %p759 = pneg %p190
        $region18: #{gin_encoder_forward_batched.1} parent=11 // pred_check_branch
          %761 = sbr.rel (%p759) target = $region20
        $region19: #{gin_encoder_forward_batched.1} parent=11 // pred_region
          _
        $region20: #{gin_encoder_forward_batched.1} parent=11 // pred_fallthru
          _
        // Predicated region
        $region21: #{gin_encoder_forward_batched.1} parent=11 // pred_check
          %p762 = pneg %p211
        $region22: #{gin_encoder_forward_batched.1} parent=11 // pred_check_branch
          %764 = sbr.rel (%p762) target = $region24
        $region23: #{gin_encoder_forward_batched.1} parent=11 // pred_region
          _
        $region24: #{gin_encoder_forward_batched.1} parent=11 // pred_fallthru
          _
        // Predicated region
        $region25: #{gin_encoder_forward_batched.1} parent=11 // pred_check
          %p765 = pneg %p232
        $region26: #{gin_encoder_forward_batched.1} parent=11 // pred_check_branch
          %767 = sbr.rel (%p765) target = $region28
        $region27: #{gin_encoder_forward_batched.1} parent=11 // pred_region
          _
        $region28: #{gin_encoder_forward_batched.1} parent=11 // pred_fallthru
          _
        // Predicated region
        $region29: #{gin_encoder_forward_batched.1} parent=11 // pred_check
          %p768 = pneg %p253
        $region30: #{gin_encoder_forward_batched.1} parent=11 // pred_check_branch
          %770 = sbr.rel (%p768) target = $region32
        $region31: #{gin_encoder_forward_batched.1} parent=11 // pred_region
          _
        $region32: #{gin_encoder_forward_batched.1} parent=11 // pred_fallthru
          _
        // Predicated region
        $region33: #{gin_encoder_forward_batched.1} parent=11 // pred_check
          %p771 = pneg %p274
        $region34: #{gin_encoder_forward_batched.1} parent=11 // pred_check_branch
          %773 = sbr.rel (%p771) target = $region36
        $region35: #{gin_encoder_forward_batched.1} parent=11 // pred_region
          _
        $region36: #{gin_encoder_forward_batched.1} parent=11 // pred_fallthru
          _
        // Predicated region
        $region37: #{gin_encoder_forward_batched.1} parent=11 // pred_check
          %p774 = pneg %p295
        $region38: #{gin_encoder_forward_batched.1} parent=11 // pred_check_branch
          %776 = sbr.rel (%p774) target = $region40
        $region39: #{gin_encoder_forward_batched.1} parent=11 // pred_region
          _
        $region40: #{gin_encoder_forward_batched.1} parent=11 // pred_fallthru
          _
        // Predicated region
        $region41: #{gin_encoder_forward_batched.1} parent=11 // pred_check
          %p777 = pneg %p316
        $region42: #{gin_encoder_forward_batched.1} parent=11 // pred_check_branch
          %779 = sbr.rel (%p777) target = $region44
        $region43: #{gin_encoder_forward_batched.1} parent=11 // pred_region
          _
        $region44: #{gin_encoder_forward_batched.1} parent=11 // pred_fallthru
          _
        // Predicated region
        $region45: #{gin_encoder_forward_batched.1} parent=11 // pred_check
          %p780 = pneg %p337
        $region46: #{gin_encoder_forward_batched.1} parent=11 // pred_check_branch
          %782 = sbr.rel (%p780) target = $region48
        $region47: #{gin_encoder_forward_batched.1} parent=11 // pred_region
          _
        $region48: #{gin_encoder_forward_batched.1} parent=11 // pred_fallthru
          _
        // Predicated region
        $region49: #{gin_encoder_forward_batched.1} parent=11 // pred_check
          %p783 = pneg %p358
        $region50: #{gin_encoder_forward_batched.1} parent=11 // pred_check_branch
          %785 = sbr.rel (%p783) target = $region52
        $region51: #{gin_encoder_forward_batched.1} parent=11 // pred_region
          _
        $region52: #{gin_encoder_forward_batched.1} parent=11 // pred_fallthru
          _
        // Predicated region
        $region53: #{gin_encoder_forward_batched.1} parent=11 // pred_check
          %p786 = pneg %p379
        $region54: #{gin_encoder_forward_batched.1} parent=11 // pred_check_branch
          %788 = sbr.rel (%p786) target = $region56
        $region55: #{gin_encoder_forward_batched.1} parent=11 // pred_region
          _
        $region56: #{gin_encoder_forward_batched.1} parent=11 // pred_fallthru
          _
        // Predicated region
        $region57: #{gin_encoder_forward_batched.1} parent=11 // pred_check
          %p789 = pneg %p400
        $region58: #{gin_encoder_forward_batched.1} parent=11 // pred_check_branch
          %791 = sbr.rel (%p789) target = $region60
        $region59: #{gin_encoder_forward_batched.1} parent=11 // pred_region
          _
        $region60: #{gin_encoder_forward_batched.1} parent=11 // pred_fallthru
          _
        // Predicated region
        $region61: #{gin_encoder_forward_batched.1} parent=11 // pred_check
          %p792 = pneg %p421
        $region62: #{gin_encoder_forward_batched.1} parent=11 // pred_check_branch
          %794 = sbr.rel (%p792) target = $region64
        $region63: #{gin_encoder_forward_batched.1} parent=11 // pred_region
          _
        $region64: #{gin_encoder_forward_batched.1} parent=11 // pred_fallthru
          _
        // Predicated region
        $region65: #{gin_encoder_forward_batched.1} parent=11 // pred_check
          %p795 = pneg %p442
        $region66: #{gin_encoder_forward_batched.1} parent=11 // pred_check_branch
          %797 = sbr.rel (%p795) target = $region68
        $region67: #{gin_encoder_forward_batched.1} parent=11 // pred_region
          _
        $region68: #{gin_encoder_forward_batched.1} parent=11 // pred_fallthru
          _
        // Predicated region
        $region69: #{gin_encoder_forward_batched.1} parent=11 // pred_check
          %p798 = pneg %p463
        $region70: #{gin_encoder_forward_batched.1} parent=11 // pred_check_branch
          %800 = sbr.rel (%p798) target = $region72
        $region71: #{gin_encoder_forward_batched.1} parent=11 // pred_region
          _
        $region72: #{gin_encoder_forward_batched.1} parent=11 // pred_fallthru
          _
        // Predicated region
        $region73: #{gin_encoder_forward_batched.1} parent=11 // pred_check
          %p801 = pneg %p484
        $region74: #{gin_encoder_forward_batched.1} parent=11 // pred_check_branch
          %803 = sbr.rel (%p801) target = $region76
        $region75: #{gin_encoder_forward_batched.1} parent=11 // pred_region
          _
        $region76: #{gin_encoder_forward_batched.1} parent=11 // pred_fallthru
          _
        // Predicated region
        $region77: #{gin_encoder_forward_batched.1} parent=11 // pred_check
          %p804 = pneg %p505
        $region78: #{gin_encoder_forward_batched.1} parent=11 // pred_check_branch
          %806 = sbr.rel (%p804) target = $region80
        $region79: #{gin_encoder_forward_batched.1} parent=11 // pred_region
          _
        $region80: #{gin_encoder_forward_batched.1} parent=11 // pred_fallthru
          _
        // Predicated region
        $region81: #{gin_encoder_forward_batched.1} parent=11 // pred_check
          %p807 = pneg %p526
        $region82: #{gin_encoder_forward_batched.1} parent=11 // pred_check_branch
          %809 = sbr.rel (%p807) target = $region84
        $region83: #{gin_encoder_forward_batched.1} parent=11 // pred_region
          _
        $region84: #{gin_encoder_forward_batched.1} parent=11 // pred_fallthru
          _
        // Predicated region
        $region85: #{gin_encoder_forward_batched.1} parent=11 // pred_check
          %p810 = pneg %p547
        $region86: #{gin_encoder_forward_batched.1} parent=11 // pred_check_branch
          %812 = sbr.rel (%p810) target = $region88
        $region87: #{gin_encoder_forward_batched.1} parent=11 // pred_region
          _
        $region88: #{gin_encoder_forward_batched.1} parent=11 // pred_fallthru
          _
        // Predicated region
        $region89: #{gin_encoder_forward_batched.1} parent=11 // pred_check
          %p813 = pneg %p568
        $region90: #{gin_encoder_forward_batched.1} parent=11 // pred_check_branch
          %815 = sbr.rel (%p813) target = $region92
        $region91: #{gin_encoder_forward_batched.1} parent=11 // pred_region
          _
        $region92: #{gin_encoder_forward_batched.1} parent=11 // pred_fallthru
          _
        // Predicated region
        $region93: #{gin_encoder_forward_batched.1} parent=11 // pred_check
          %p816 = pneg %p589
        $region94: #{gin_encoder_forward_batched.1} parent=11 // pred_check_branch
          %818 = sbr.rel (%p816) target = $region96
        $region95: #{gin_encoder_forward_batched.1} parent=11 // pred_region
          _
        $region96: #{gin_encoder_forward_batched.1} parent=11 // pred_fallthru
          _
        // Predicated region
        $region97: #{gin_encoder_forward_batched.1} parent=11 // pred_check
          %p819 = pneg %p610
        $region98: #{gin_encoder_forward_batched.1} parent=11 // pred_check_branch
          %821 = sbr.rel (%p819) target = $region100
        $region99: #{gin_encoder_forward_batched.1} parent=11 // pred_region
          _
        $region100: #{gin_encoder_forward_batched.1} parent=11 // pred_fallthru
          _
        // Predicated region
        $region101: #{gin_encoder_forward_batched.1} parent=11 // pred_check
          %p822 = pneg %p631
        $region102: #{gin_encoder_forward_batched.1} parent=11 // pred_check_branch
          %824 = sbr.rel (%p822) target = $region104
        $region103: #{gin_encoder_forward_batched.1} parent=11 // pred_region
          _
        $region104: #{gin_encoder_forward_batched.1} parent=11 // pred_fallthru
          _
        // Predicated region
        $region105: #{gin_encoder_forward_batched.1} parent=11 // pred_check
          %p825 = pneg %p652
        $region106: #{gin_encoder_forward_batched.1} parent=11 // pred_check_branch
          %827 = sbr.rel (%p825) target = $region108
        $region107: #{gin_encoder_forward_batched.1} parent=11 // pred_region
          _
        $region108: #{gin_encoder_forward_batched.1} parent=11 // pred_fallthru
          _
        // Predicated region
        $region109: #{gin_encoder_forward_batched.1} parent=11 // pred_check
          %p828 = pneg %p673
        $region110: #{gin_encoder_forward_batched.1} parent=11 // pred_check_branch
          %830 = sbr.rel (%p828) target = $region112
        $region111: #{gin_encoder_forward_batched.1} parent=11 // pred_region
          _
        $region112: #{gin_encoder_forward_batched.1} parent=11 // pred_fallthru
          _
        // Predicated region
        $region113: #{gin_encoder_forward_batched.1} parent=11 // pred_check
          %p831 = pneg %p694
        $region114: #{gin_encoder_forward_batched.1} parent=11 // pred_check_branch
          %833 = sbr.rel (%p831) target = $region116
        $region115: #{gin_encoder_forward_batched.1} parent=11 // pred_region
          _
        $region116: #{gin_encoder_forward_batched.1} parent=11 // pred_fallthru
          _
        // Predicated region
        $region117: #{gin_encoder_forward_batched.1} parent=11 // pred_check
          %p834 = pneg %p715
        $region118: #{gin_encoder_forward_batched.1} parent=11 // pred_check_branch
          %836 = sbr.rel (%p834) target = $region120
        $region119: #{gin_encoder_forward_batched.1} parent=11 // pred_region
          _
        $region120: #{gin_encoder_forward_batched.1} parent=11 // pred_fallthru
          _
      $region12: #{gin_encoder_forward_batched.1} parent=5 // pred_fallthru
        _
      %p837 = scmp.lt.s32.totalorder %s70, 4
      // Predicated region
      $region121: #{gin_encoder_forward_batched.1} parent=5 // pred_check
        %p838 = pneg %p837
      $region122: #{gin_encoder_forward_batched.1} parent=5 // pred_check_branch
        %840 = sbr.rel (%p838) target = $region124
      $region123: #{gin_encoder_forward_batched.1} parent=5 // pred_region
        // Predicated region
        $region125: #{gin_encoder_forward_batched.1} parent=123 // pred_check
          %p841 = pneg %p90
        $region126: #{gin_encoder_forward_batched.1} parent=123 // pred_check_branch
          %843 = sbr.rel (%p841) target = $region128
        $region127: #{gin_encoder_forward_batched.1} parent=123 // pred_region
          %p844 = scmp.lt.s32.totalorder %s70, 3
          %s845 = scalar_select %p844, %s70, 3
          %s846 = smul.addr %s845, 16
          %s847 = smul.addr %s846, 4
          %s848 = scalar_lea.vmem %s1, %s847
        $region128: #{gin_encoder_forward_batched.1} parent=123 // pred_fallthru
          _
        // Predicated region
        $region129: #{gin_encoder_forward_batched.1} parent=123 // pred_check
          %p849 = pneg %p116
        $region130: #{gin_encoder_forward_batched.1} parent=123 // pred_check_branch
          %851 = sbr.rel (%p849) target = $region132
        $region131: #{gin_encoder_forward_batched.1} parent=123 // pred_region
          %p852 = scmp.lt.s32.totalorder %s70, 3
          %s853 = scalar_select %p852, %s70, 3
          %s854 = smul.addr %s853, 16
          %s855 = smul.addr %s854, 4
          %s856 = scalar_lea.vmem %s3, %s855
        $region132: #{gin_encoder_forward_batched.1} parent=123 // pred_fallthru
          _
        // Predicated region
        $region133: #{gin_encoder_forward_batched.1} parent=123 // pred_check
          %p857 = pneg %p142
        $region134: #{gin_encoder_forward_batched.1} parent=123 // pred_check_branch
          %859 = sbr.rel (%p857) target = $region136
        $region135: #{gin_encoder_forward_batched.1} parent=123 // pred_region
          %p860 = scmp.lt.s32.totalorder %s70, 3
          %s861 = scalar_select %p860, %s70, 3
          %s862 = smul.addr %s861, 16
          %s863 = smul.addr %s862, 8
          %s864 = scalar_lea.vmem %s5, %s863
        $region136: #{gin_encoder_forward_batched.1} parent=123 // pred_fallthru
          _
      $region124: #{gin_encoder_forward_batched.1} parent=5 // pred_fallthru
        _
      %p865 = scmp.le.s32.totalorder 1, %s70
      %p866 = scmp.lt.s32.totalorder %s70, 5
      %p867 = pnand %p865, %p866
      %p868 = pneg %p867
      // Predicated region
      $region137: #{gin_encoder_forward_batched.1} parent=5 // pred_check
        _
      $region138: #{gin_encoder_forward_batched.1} parent=5 // pred_check_branch
        %870 = sbr.rel (%p867) target = $region140
      $region139: #{gin_encoder_forward_batched.1} parent=5 // pred_region
        %s871 = ssub.s32 %s70, 1
        %p872 = scmp.lt.s32.totalorder %s75, 3
        %s873 = scalar_select %p872, %s75, 3
        %s874 = smul.addr %s873, 16
        %s875 = smul.addr %s874, 4
        %s876 = scalar_lea.vmem %s1, %s875
        %p877 = pneg %p96
        %p878 = pneg %p93
        %p879 = scmp.lt.s32.totalorder %s75, 3
        %s880 = scalar_select %p879, %s75, 3
        %s881 = smul.addr %s880, 16
        %s882 = smul.addr %s881, 4
        %s883 = scalar_lea.vmem %s3, %s882
        %p884 = pneg %p122
        %p885 = pneg %p119
        %p886 = scmp.lt.s32.totalorder %s75, 3
        %s887 = scalar_select %p886, %s75, 3
        %s888 = smul.addr %s887, 16
        %s889 = smul.addr %s888, 8
        %s890 = scalar_lea.vmem %s5, %s889
        %p891 = pneg %p148
        %p892 = pneg %p145
        %p893 = pneg %p169
        %p894 = pneg %p166
        %p895 = pneg %p190
        %p896 = pneg %p187
        %p897 = pneg %p211
        %p898 = pneg %p208
        %p899 = pneg %p232
        %p900 = pneg %p229
        %p901 = pneg %p253
        %p902 = pneg %p250
        %p903 = pneg %p274
        %p904 = pneg %p271
        %p905 = pneg %p295
        %p906 = pneg %p292
        %p907 = pneg %p316
        %p908 = pneg %p313
        %p909 = pneg %p337
        %p910 = pneg %p334
        %p911 = pneg %p358
        %p912 = pneg %p355
        %p913 = pneg %p379
        %p914 = pneg %p376
        %p915 = pneg %p400
        %p916 = pneg %p397
        %p917 = pneg %p421
        %p918 = pneg %p418
        %p919 = pneg %p442
        %p920 = pneg %p439
        %p921 = pneg %p463
        %p922 = pneg %p460
        %p923 = pneg %p484
        %p924 = pneg %p481
        %p925 = pneg %p505
        %p926 = pneg %p502
        %p927 = pneg %p526
        %p928 = pneg %p523
        %p929 = pneg %p547
        %p930 = pneg %p544
        %p931 = pneg %p568
        %p932 = pneg %p565
        %p933 = pneg %p589
        %p934 = pneg %p586
        %p935 = pneg %p610
        %p936 = pneg %p607
        %p937 = pneg %p631
        %p938 = pneg %p628
        %p939 = pneg %p652
        %p940 = pneg %p649
        %p941 = pneg %p673
        %p942 = pneg %p670
        %p943 = pneg %p694
        %p944 = pneg %p691
        %p945 = pneg %p715
        %p946 = pneg %p712
        %p947 = pneg %p741
        %p948 = pneg %p738
        %s949 = sand.u32 %s728, 1
        %s950 = scalar_lea.sflag [#allocation3], %s949
        %s951 = sand.u32 %s728, 1
        %s952 = smul.addr %s951, 128
        %s953 = scalar_lea.vmem [#allocation2], %s952
        %p954 = scmp.lt.s32.totalorder %s75, 3
        %s955 = scalar_select %p954, %s75, 3
        %s956 = smul.addr %s955, 16
        %s957 = smul.addr %s956, 4
        %s958 = scalar_lea.vmem %s1, %s957
        %p959 = scmp.lt.s32.totalorder %s75, 3
        %s960 = scalar_select %p959, %s75, 3
        %s961 = smul.addr %s960, 16
        %s962 = smul.addr %s961, 4
        %s963 = scalar_lea.vmem %s3, %s962
        %p964 = scmp.lt.s32.totalorder %s75, 3
        %s965 = scalar_select %p964, %s75, 3
        %s966 = smul.addr %s965, 16
        %s967 = smul.addr %s966, 8
        %s968 = scalar_lea.vmem %s5, %s967
        %v970 = vld [vmem:[%s963] sm:$0xf]
        %v971 = vld [vmem:[%s963 + $0x4] sm:$0xf]
        %v972 = vld [vmem:[%s963 + $0x8] sm:$0xf]
        %v973 = vld [vmem:[%s963 + $0xc] sm:$0xf]
        %v974 = vld [vmem:[%s963 + $0x10] sm:$0xf]
        %v975 = vld [vmem:[%s963 + $0x14] sm:$0xf]
        %v976 = vld [vmem:[%s963 + $0x18] sm:$0xf]
        %v977 = vld [vmem:[%s963 + $0x1c] sm:$0xf]
        %v978 = vld [vmem:[%s963 + $0x20] sm:$0xf]
        %v979 = vld [vmem:[%s963 + $0x24] sm:$0xf]
        %v980 = vld [vmem:[%s963 + $0x28] sm:$0xf]
        %v981 = vld [vmem:[%s963 + $0x2c] sm:$0xf]
        %v982 = vld [vmem:[%s963 + $0x30] sm:$0xf]
        %v983 = vld [vmem:[%s963 + $0x34] sm:$0xf]
        %v984 = vld [vmem:[%s963 + $0x38] sm:$0xf]
        %v985 = vld [vmem:[%s963 + $0x3c] sm:$0xf]
        %v986 = vld [vmem:[%s968] sm:$0xff]
        %v987 = vld [vmem:[%s968 + $0x8] sm:$0xff]
        %v988 = vld [vmem:[%s968 + $0x10] sm:$0xff]
        %v989 = vld [vmem:[%s968 + $0x18] sm:$0xff]
        %v990 = vld [vmem:[%s968 + $0x20] sm:$0xff]
        %v991 = vld [vmem:[%s968 + $0x28] sm:$0xff]
        %v992 = vld [vmem:[%s968 + $0x30] sm:$0xff]
        %v993 = vld [vmem:[%s968 + $0x38] sm:$0xff]
        %v994 = vld [vmem:[%s968 + $0x40] sm:$0xff]
        %v995 = vld [vmem:[%s968 + $0x48] sm:$0xff]
        %v996 = vld [vmem:[%s968 + $0x50] sm:$0xff]
        %v997 = vld [vmem:[%s968 + $0x58] sm:$0xff]
        %v998 = vld [vmem:[%s968 + $0x60] sm:$0xff]
        %v999 = vld [vmem:[%s968 + $0x68] sm:$0xff]
        %v1000 = vld [vmem:[%s968 + $0x70] sm:$0xff]
        %v1001 = vld [vmem:[%s968 + $0x78] sm:$0xff]
        %vm1002 = vcmask 7168
        %v1003 = vsel %vm1002, %v986, 0.0
        %v1004 = vsel %vm1002, %v987, 0.0
        %v1005 = vadd.f32 %v1003, %v1004
        %v1006 = vsel %vm1002, %v988, 0.0
        %v1007 = vadd.f32 %v1005, %v1006
        %v1008 = vsel %vm1002, %v989, 0.0
        %v1009 = vadd.f32 %v1007, %v1008
        %v1010 = vsel %vm1002, %v990, 0.0
        %v1011 = vadd.f32 %v1009, %v1010
        %v1012 = vsel %vm1002, %v991, 0.0
        %v1013 = vadd.f32 %v1011, %v1012
        %v1014 = vsel %vm1002, %v992, 0.0
        %v1015 = vadd.f32 %v1013, %v1014
        %v1016 = vsel %vm1002, %v993, 0.0
        %v1017 = vadd.f32 %v1015, %v1016
        %v1018 = vsel %vm1002, %v994, 0.0
        %v1019 = vadd.f32 %v1017, %v1018
        %v1020 = vsel %vm1002, %v995, 0.0
        %v1021 = vadd.f32 %v1019, %v1020
        %v1022 = vsel %vm1002, %v996, 0.0
        %v1023 = vadd.f32 %v1021, %v1022
        %v1024 = vsel %vm1002, %v997, 0.0
        %v1025 = vadd.f32 %v1023, %v1024
        %v1026 = vsel %vm1002, %v998, 0.0
        %v1027 = vadd.f32 %v1025, %v1026
        %v1028 = vsel %vm1002, %v999, 0.0
        %v1029 = vadd.f32 %v1027, %v1028
        %v1030 = vsel %vm1002, %v1000, 0.0
        %v1031 = vadd.f32 %v1029, %v1030
        %v1032 = vsel %vm1002, %v1001, 0.0
        %v1033 = vadd.f32 %v1031, %v1032
        %v1034 = vrot.slane %v1033, 4
        %v1035 = vadd.f32 %v1033, %v1034
        %v1036 = vrot.slane %v1035, 2
        %v1037 = vadd.f32 %v1035, %v1036
        %v1038 = vrot.slane %v1037, 1
        %v1039 = vadd.f32 %v1037, %v1038
        %v1040 = vrcp.pop %v1039
        %v1041 = vmul.f32 1.0, %v1040
        %v1042 = vld [vmem:[%s958] sm:$0xf]
        %v1043 = vld [vmem:[%s958 + $0x4] sm:$0xf]
        %v1044 = vld [vmem:[%s958 + $0x8] sm:$0xf]
        %v1045 = vld [vmem:[%s958 + $0xc] sm:$0xf]
        %v1046 = vld [vmem:[%s958 + $0x10] sm:$0xf]
        %v1047 = vld [vmem:[%s958 + $0x14] sm:$0xf]
        %v1048 = vld [vmem:[%s958 + $0x18] sm:$0xf]
        %v1049 = vld [vmem:[%s958 + $0x1c] sm:$0xf]
        %v1050 = vld [vmem:[%s958 + $0x20] sm:$0xf]
        %v1051 = vld [vmem:[%s958 + $0x24] sm:$0xf]
        %v1052 = vld [vmem:[%s958 + $0x28] sm:$0xf]
        %v1053 = vld [vmem:[%s958 + $0x2c] sm:$0xf]
        %v1054 = vld [vmem:[%s958 + $0x30] sm:$0xf]
        %v1055 = vld [vmem:[%s958 + $0x34] sm:$0xf]
        %v1056 = vld [vmem:[%s958 + $0x38] sm:$0xf]
        %v1057 = vld [vmem:[%s958 + $0x3c] sm:$0xf]
        %v1058 = vld [vmem:[%s13] sm:$0xf]
        %v1059 = vld [vmem:[%s13 + $0x4] sm:$0xf]
        %v1060 = vld [vmem:[%s13 + $0x8] sm:$0xf]
        %v1061 = vld [vmem:[%s13 + $0xc] sm:$0xf]
        %v1062 = vld [vmem:[%s13 + $0x10] sm:$0xf]
        %v1063 = vld [vmem:[%s13 + $0x14] sm:$0xf]
        %v1064 = vld [vmem:[%s13 + $0x18] sm:$0xf]
        %v1065 = vld [vmem:[%s13 + $0x1c] sm:$0xf]
        %v1066 = vld [vmem:[%s13 + $0x20] sm:$0xf]
        %v1067 = vld [vmem:[%s13 + $0x24] sm:$0xf]
        %v1068 = vld [vmem:[%s13 + $0x28] sm:$0xf]
        %v1069 = vld [vmem:[%s13 + $0x2c] sm:$0xf]
        %v1070 = vld [vmem:[%s13 + $0x30] sm:$0xf]
        %v1071 = vld [vmem:[%s13 + $0x34] sm:$0xf]
        %v1072 = vld [vmem:[%s13 + $0x38] sm:$0xf]
        %v1073 = vld [vmem:[%s13 + $0x3c] sm:$0xf]
        %v1074 = vld [vmem:[%s15] sm:$0x1]
        %v1076 = vlaneseq
        %v1077 = vshrl.u32 %v1076, 7
        %v1078 = vsub.s32 0, %v1077
        %v1079 = vrot.slane %v1074, %v1078
        %v1097 = vunpack.c.l.b16 %v1042
        %v1098 = vunpack.c.l.b16 %v1043
        %v1099 = vunpack.c.l.b16 %v1044
        %v1100 = vunpack.c.l.b16 %v1045
        %v1101 = vunpack.c.l.b16 %v1046
        %v1102 = vunpack.c.l.b16 %v1047
        %v1103 = vunpack.c.l.b16 %v1048
        %v1104 = vunpack.c.l.b16 %v1049
        %v1105 = vunpack.c.l.b16 %v1050
        %v1106 = vunpack.c.l.b16 %v1051
        %v1107 = vunpack.c.l.b16 %v1052
        %v1108 = vunpack.c.l.b16 %v1053
        %v1109 = vunpack.c.l.b16 %v1054
        %v1110 = vunpack.c.l.b16 %v1055
        %v1111 = vunpack.c.l.b16 %v1056
        %v1112 = vunpack.c.l.b16 %v1057
        %v1113 = vpack.c.b16 %v1098, %v1097
        %v1114 = vpack.c.b16 %v1100, %v1099
        %v1115 = vpack.c.b16 %v1102, %v1101
        %v1116 = vpack.c.b16 %v1104, %v1103
        %v1117 = vpack.c.b16 %v1106, %v1105
        %v1118 = vpack.c.b16 %v1108, %v1107
        %v1119 = vpack.c.b16 %v1110, %v1109
        %v1120 = vpack.c.b16 %v1112, %v1111
        %v1145 = vunpack.c.l.b16 %v1058
        %v1146 = vunpack.c.l.b16 %v1059
        %v1147 = vunpack.c.l.b16 %v1060
        %v1148 = vunpack.c.l.b16 %v1061
        %v1149 = vunpack.c.l.b16 %v1062
        %v1150 = vunpack.c.l.b16 %v1063
        %v1151 = vunpack.c.l.b16 %v1064
        %v1152 = vunpack.c.l.b16 %v1065
        %v1153 = vunpack.c.l.b16 %v1066
        %v1154 = vunpack.c.l.b16 %v1067
        %v1155 = vunpack.c.l.b16 %v1068
        %v1156 = vunpack.c.l.b16 %v1069
        %v1157 = vunpack.c.l.b16 %v1070
        %v1158 = vunpack.c.l.b16 %v1071
        %v1159 = vunpack.c.l.b16 %v1072
        %v1160 = vunpack.c.l.b16 %v1073
        %v1161 = vpack.c.b16 %v1146, %v1145
        %v1162 = vpack.c.b16 %v1148, %v1147
        %v1163 = vpack.c.b16 %v1150, %v1149
        %v1164 = vpack.c.b16 %v1152, %v1151
        %v1165 = vpack.c.b16 %v1154, %v1153
        %v1166 = vpack.c.b16 %v1156, %v1155
        %v1167 = vpack.c.b16 %v1158, %v1157
        %v1168 = vpack.c.b16 %v1160, %v1159
        %1177 = vmatprep.subr.bf16.mxu0 0
        %1178 = vmatpush1.bf16.msra.mxu0 %v1161
        %1179 = vmatprep.subr.bf16.mxu0 0
        %1180 = vmatpush1.bf16.msra.mxu0 %v1162
        %1181 = vmatprep.subr.bf16.mxu0 0
        %1182 = vmatpush1.bf16.msra.mxu0 %v1163
        %1183 = vmatprep.subr.bf16.mxu0 0
        %1184 = vmatpush1.bf16.msra.mxu0 %v1164
        %1185 = vmatprep.subr.bf16.mxu0 0
        %1186 = vmatpush1.bf16.msra.mxu0 %v1165
        %1187 = vmatprep.subr.bf16.mxu0 0
        %1188 = vmatpush1.bf16.msra.mxu0 %v1166
        %1189 = vmatprep.subr.bf16.mxu0 0
        %1190 = vmatpush1.bf16.msra.mxu0 %v1167
        %1191 = vmatprep.subr.bf16.mxu0 0
        %1192 = vmatpush1.bf16.msra.mxu0 %v1168
        %1193 = vmatprep.subr.bf16.mxu0 0
        %1194 = vmatpush1.bf16.msra.mxu0 0
        %1195 = vmatprep.subr.bf16.mxu0 0
        %1196 = vmatpush1.bf16.msra.mxu0 0
        %1197 = vmatprep.subr.bf16.mxu0 0
        %1198 = vmatpush1.bf16.msra.mxu0 0
        %1199 = vmatprep.subr.bf16.mxu0 0
        %1200 = vmatpush1.bf16.msra.mxu0 0
        %1201 = vmatprep.subr.bf16.mxu0 0
        %1202 = vmatpush1.bf16.msra.mxu0 0
        %1203 = vmatprep.subr.bf16.mxu0 0
        %1204 = vmatpush1.bf16.msra.mxu0 0
        %1205 = vmatprep.subr.bf16.mxu0 0
        %1206 = vmatpush1.bf16.msra.mxu0 0
        %1207 = vmatprep.subr.bf16.mxu0 0
        %1208 = vmatpush1.bf16.msra.mxu0 0
        %1209 = vmatprep.mubr.bf16.mxu0 0
        %1210 = vmatmul.mubr.bf16.gmra.mrb[0].mxu0 %v1113
        %v1211 = vpop.f32.mrb[0].mxu0
        %v1212 = vadd.f32 %v1079, %v1211
        %v1213 = vpop.f32.mrb[0].mxu0
        %v1214 = vpop.f32.mrb[0].mxu0
        %v1215 = vadd.f32 %v1079, %v1214
        %v1216 = vpop.f32.mrb[0].mxu0
        %1217 = vmatprep.mubr.bf16.mxu0 0
        %1218 = vmatmul.mubr.bf16.gmra.mrb[0].mxu0 %v1114
        %v1219 = vpop.f32.mrb[0].mxu0
        %v1220 = vadd.f32 %v1079, %v1219
        %v1221 = vpop.f32.mrb[0].mxu0
        %v1222 = vpop.f32.mrb[0].mxu0
        %v1223 = vadd.f32 %v1079, %v1222
        %v1224 = vpop.f32.mrb[0].mxu0
        %1225 = vmatprep.mubr.bf16.mxu0 0
        %1226 = vmatmul.mubr.bf16.gmra.mrb[0].mxu0 %v1115
        %v1227 = vpop.f32.mrb[0].mxu0
        %v1228 = vadd.f32 %v1079, %v1227
        %v1229 = vpop.f32.mrb[0].mxu0
        %v1230 = vpop.f32.mrb[0].mxu0
        %v1231 = vadd.f32 %v1079, %v1230
        %v1232 = vpop.f32.mrb[0].mxu0
        %1233 = vmatprep.mubr.bf16.mxu0 0
        %1234 = vmatmul.mubr.bf16.gmra.mrb[0].mxu0 %v1116
        %v1235 = vpop.f32.mrb[0].mxu0
        %v1236 = vadd.f32 %v1079, %v1235
        %v1237 = vpop.f32.mrb[0].mxu0
        %v1238 = vpop.f32.mrb[0].mxu0
        %v1239 = vadd.f32 %v1079, %v1238
        %v1240 = vpop.f32.mrb[0].mxu0
        %1241 = vmatprep.mubr.bf16.mxu0 0
        %1242 = vmatmul.mubr.bf16.gmra.mrb[0].mxu0 %v1117
        %v1243 = vpop.f32.mrb[0].mxu0
        %v1244 = vadd.f32 %v1079, %v1243
        %v1245 = vpop.f32.mrb[0].mxu0
        %v1246 = vpop.f32.mrb[0].mxu0
        %v1247 = vadd.f32 %v1079, %v1246
        %v1248 = vpop.f32.mrb[0].mxu0
        %1249 = vmatprep.mubr.bf16.mxu0 0
        %1250 = vmatmul.mubr.bf16.gmra.mrb[0].mxu0 %v1118
        %v1251 = vpop.f32.mrb[0].mxu0
        %v1252 = vadd.f32 %v1079, %v1251
        %v1253 = vpop.f32.mrb[0].mxu0
        %v1254 = vpop.f32.mrb[0].mxu0
        %v1255 = vadd.f32 %v1079, %v1254
        %v1256 = vpop.f32.mrb[0].mxu0
        %1257 = vmatprep.mubr.bf16.mxu0 0
        %1258 = vmatmul.mubr.bf16.gmra.mrb[0].mxu0 %v1119
        %v1259 = vpop.f32.mrb[0].mxu0
        %v1260 = vadd.f32 %v1079, %v1259
        %v1261 = vpop.f32.mrb[0].mxu0
        %v1262 = vpop.f32.mrb[0].mxu0
        %v1263 = vadd.f32 %v1079, %v1262
        %v1264 = vpop.f32.mrb[0].mxu0
        %1265 = vmatprep.mubr.bf16.mxu0 0
        %1266 = vmatmul.mubr.bf16.gmra.mrb[0].mxu0 %v1120
        %v1267 = vpop.f32.mrb[0].mxu0
        %v1268 = vadd.f32 %v1079, %v1267
        %v1269 = vpop.f32.mrb[0].mxu0
        %v1270 = vpop.f32.mrb[0].mxu0
        %v1271 = vadd.f32 %v1079, %v1270
        %v1272 = vpop.f32.mrb[0].mxu0
        %1273 = vdwg.mxu0
        %v1274 = vpack.c.bf16 %v1215, %v1212
        %v1275 = vpack.c.bf16 %v1223, %v1220
        %v1276 = vpack.c.bf16 %v1231, %v1228
        %v1277 = vpack.c.bf16 %v1239, %v1236
        %v1278 = vpack.c.bf16 %v1247, %v1244
        %v1279 = vpack.c.bf16 %v1255, %v1252
        %v1280 = vpack.c.bf16 %v1263, %v1260
        %v1281 = vpack.c.bf16 %v1271, %v1268
        %v1282 = vld [vmem:[%s7] sm:$0x1]
        %v1284 = vlaneseq
        %v1285 = vshrl.u32 %v1284, 7
        %v1286 = vsub.s32 0, %v1285
        %v1287 = vrot.slane %v1282, %v1286
        %v1289 = vmul.f32 %v1287, %v1212
        %v1290 = vmul.f32 %v1287, %v1215
        %v1291 = vmul.f32 %v1287, %v1220
        %v1292 = vmul.f32 %v1287, %v1223
        %v1293 = vmul.f32 %v1287, %v1228
        %v1294 = vmul.f32 %v1287, %v1231
        %v1295 = vmul.f32 %v1287, %v1236
        %v1296 = vmul.f32 %v1287, %v1239
        %v1297 = vmul.f32 %v1287, %v1244
        %v1298 = vmul.f32 %v1287, %v1247
        %v1299 = vmul.f32 %v1287, %v1252
        %v1300 = vmul.f32 %v1287, %v1255
        %v1301 = vmul.f32 %v1287, %v1260
        %v1302 = vmul.f32 %v1287, %v1263
        %v1303 = vmul.f32 %v1287, %v1268
        %v1304 = vmul.f32 %v1287, %v1271
        %v1321 = vunpack.c.l.b16 %v970
        %v1322 = vunpack.c.l.b16 %v971
        %v1323 = vunpack.c.l.b16 %v972
        %v1324 = vunpack.c.l.b16 %v973
        %v1325 = vunpack.c.l.b16 %v974
        %v1326 = vunpack.c.l.b16 %v975
        %v1327 = vunpack.c.l.b16 %v976
        %v1328 = vunpack.c.l.b16 %v977
        %v1329 = vunpack.c.l.b16 %v978
        %v1330 = vunpack.c.l.b16 %v979
        %v1331 = vunpack.c.l.b16 %v980
        %v1332 = vunpack.c.l.b16 %v981
        %v1333 = vunpack.c.l.b16 %v982
        %v1334 = vunpack.c.l.b16 %v983
        %v1335 = vunpack.c.l.b16 %v984
        %v1336 = vunpack.c.l.b16 %v985
        %v1337 = vpack.c.b16 %v1322, %v1321
        %v1338 = vpack.c.b16 %v1324, %v1323
        %v1339 = vpack.c.b16 %v1326, %v1325
        %v1340 = vpack.c.b16 %v1328, %v1327
        %v1341 = vpack.c.b16 %v1330, %v1329
        %v1342 = vpack.c.b16 %v1332, %v1331
        %v1343 = vpack.c.b16 %v1334, %v1333
        %v1344 = vpack.c.b16 %v1336, %v1335
        %1353 = vmatprep.subr.bf16.mxu0 0
        %1354 = vmatpush1.bf16.msra.mxu0 %v1274
        %1355 = vmatprep.subr.bf16.mxu0 0
        %1356 = vmatpush1.bf16.msra.mxu0 %v1275
        %1357 = vmatprep.subr.bf16.mxu0 0
        %1358 = vmatpush1.bf16.msra.mxu0 %v1276
        %1359 = vmatprep.subr.bf16.mxu0 0
        %1360 = vmatpush1.bf16.msra.mxu0 %v1277
        %1361 = vmatprep.subr.bf16.mxu0 0
        %1362 = vmatpush1.bf16.msra.mxu0 %v1278
        %1363 = vmatprep.subr.bf16.mxu0 0
        %1364 = vmatpush1.bf16.msra.mxu0 %v1279
        %1365 = vmatprep.subr.bf16.mxu0 0
        %1366 = vmatpush1.bf16.msra.mxu0 %v1280
        %1367 = vmatprep.subr.bf16.mxu0 0
        %1368 = vmatpush1.bf16.msra.mxu0 %v1281
        %1369 = vmatprep.subr.bf16.mxu0 0
        %1370 = vmatpush1.bf16.msra.mxu0 0
        %1371 = vmatprep.subr.bf16.mxu0 0
        %1372 = vmatpush1.bf16.msra.mxu0 0
        %1373 = vmatprep.subr.bf16.mxu0 0
        %1374 = vmatpush1.bf16.msra.mxu0 0
        %1375 = vmatprep.subr.bf16.mxu0 0
        %1376 = vmatpush1.bf16.msra.mxu0 0
        %1377 = vmatprep.subr.bf16.mxu0 0
        %1378 = vmatpush1.bf16.msra.mxu0 0
        %1379 = vmatprep.subr.bf16.mxu0 0
        %1380 = vmatpush1.bf16.msra.mxu0 0
        %1381 = vmatprep.subr.bf16.mxu0 0
        %1382 = vmatpush1.bf16.msra.mxu0 0
        %1383 = vmatprep.subr.bf16.mxu0 0
        %1384 = vmatpush1.bf16.msra.mxu0 0
        %1385 = vmatprep.mubr.bf16.mxu0 0
        %1386 = vmatmul.mubr.bf16.gmra.mrb[0].mxu0 %v1337
        %v1387 = vpop.f32.mrb[0].mxu0
        %v1388 = vadd.f32 %v1289, %v1387
        %v1389 = vpop.f32.mrb[0].mxu0
        %v1390 = vpop.f32.mrb[0].mxu0
        %v1391 = vadd.f32 %v1290, %v1390
        %v1392 = vpop.f32.mrb[0].mxu0
        %1393 = vmatprep.mubr.bf16.mxu0 0
        %1394 = vmatmul.mubr.bf16.gmra.mrb[0].mxu0 %v1338
        %v1395 = vpop.f32.mrb[0].mxu0
        %v1396 = vadd.f32 %v1291, %v1395
        %v1397 = vpop.f32.mrb[0].mxu0
        %v1398 = vpop.f32.mrb[0].mxu0
        %v1399 = vadd.f32 %v1292, %v1398
        %v1400 = vpop.f32.mrb[0].mxu0
        %1401 = vmatprep.mubr.bf16.mxu0 0
        %1402 = vmatmul.mubr.bf16.gmra.mrb[0].mxu0 %v1339
        %v1403 = vpop.f32.mrb[0].mxu0
        %v1404 = vadd.f32 %v1293, %v1403
        %v1405 = vpop.f32.mrb[0].mxu0
        %v1406 = vpop.f32.mrb[0].mxu0
        %v1407 = vadd.f32 %v1294, %v1406
        %v1408 = vpop.f32.mrb[0].mxu0
        %1409 = vmatprep.mubr.bf16.mxu0 0
        %1410 = vmatmul.mubr.bf16.gmra.mrb[0].mxu0 %v1340
        %v1411 = vpop.f32.mrb[0].mxu0
        %v1412 = vadd.f32 %v1295, %v1411
        %v1413 = vpop.f32.mrb[0].mxu0
        %v1414 = vpop.f32.mrb[0].mxu0
        %v1415 = vadd.f32 %v1296, %v1414
        %v1416 = vpop.f32.mrb[0].mxu0
        %1417 = vmatprep.mubr.bf16.mxu0 0
        %1418 = vmatmul.mubr.bf16.gmra.mrb[0].mxu0 %v1341
        %v1419 = vpop.f32.mrb[0].mxu0
        %v1420 = vadd.f32 %v1297, %v1419
        %v1421 = vpop.f32.mrb[0].mxu0
        %v1422 = vpop.f32.mrb[0].mxu0
        %v1423 = vadd.f32 %v1298, %v1422
        %v1424 = vpop.f32.mrb[0].mxu0
        %1425 = vmatprep.mubr.bf16.mxu0 0
        %1426 = vmatmul.mubr.bf16.gmra.mrb[0].mxu0 %v1342
        %v1427 = vpop.f32.mrb[0].mxu0
        %v1428 = vadd.f32 %v1299, %v1427
        %v1429 = vpop.f32.mrb[0].mxu0
        %v1430 = vpop.f32.mrb[0].mxu0
        %v1431 = vadd.f32 %v1300, %v1430
        %v1432 = vpop.f32.mrb[0].mxu0
        %1433 = vmatprep.mubr.bf16.mxu0 0
        %1434 = vmatmul.mubr.bf16.gmra.mrb[0].mxu0 %v1343
        %v1435 = vpop.f32.mrb[0].mxu0
        %v1436 = vadd.f32 %v1301, %v1435
        %v1437 = vpop.f32.mrb[0].mxu0
        %v1438 = vpop.f32.mrb[0].mxu0
        %v1439 = vadd.f32 %v1302, %v1438
        %v1440 = vpop.f32.mrb[0].mxu0
        %1441 = vmatprep.mubr.bf16.mxu0 0
        %1442 = vmatmul.mubr.bf16.gmra.mrb[0].mxu0 %v1344
        %v1443 = vpop.f32.mrb[0].mxu0
        %v1444 = vadd.f32 %v1303, %v1443
        %v1445 = vpop.f32.mrb[0].mxu0
        %v1446 = vpop.f32.mrb[0].mxu0
        %v1447 = vadd.f32 %v1304, %v1446
        %v1448 = vpop.f32.mrb[0].mxu0
        %1449 = vdwg.mxu0
        %v1450 = vpack.c.bf16 %v1391, %v1388
        %v1451 = vpack.c.bf16 %v1399, %v1396
        %v1452 = vpack.c.bf16 %v1407, %v1404
        %v1453 = vpack.c.bf16 %v1415, %v1412
        %v1454 = vpack.c.bf16 %v1423, %v1420
        %v1455 = vpack.c.bf16 %v1431, %v1428
        %v1456 = vpack.c.bf16 %v1439, %v1436
        %v1457 = vpack.c.bf16 %v1447, %v1444
        %v1458 = vld [vmem:[%s17] sm:$0xff]
        %v1459 = vld [vmem:[%s17 + $0x8] sm:$0xff]
        %v1460 = vld [vmem:[%s17 + $0x10] sm:$0xff]
        %v1461 = vld [vmem:[%s17 + $0x18] sm:$0xff]
        %v1462 = vld [vmem:[%s17 + $0x20] sm:$0xff]
        %v1463 = vld [vmem:[%s17 + $0x28] sm:$0xff]
        %v1464 = vld [vmem:[%s17 + $0x30] sm:$0xff]
        %v1465 = vld [vmem:[%s17 + $0x38] sm:$0xff]
        %v1466 = vld [vmem:[%s17 + $0x40] sm:$0xff]
        %v1467 = vld [vmem:[%s17 + $0x48] sm:$0xff]
        %v1468 = vld [vmem:[%s17 + $0x50] sm:$0xff]
        %v1469 = vld [vmem:[%s17 + $0x58] sm:$0xff]
        %v1470 = vld [vmem:[%s17 + $0x60] sm:$0xff]
        %v1471 = vld [vmem:[%s17 + $0x68] sm:$0xff]
        %v1472 = vld [vmem:[%s17 + $0x70] sm:$0xff]
        %v1473 = vld [vmem:[%s17 + $0x78] sm:$0xff]
        %v1474 = vld [vmem:[%s19] sm:$0x3]
        %v1476 = vlaneseq
        %v1477 = vshrl.u32 %v1476, 7
        %v1478 = vsub.s32 0, %v1477
        %v1479 = vrot.slane %v1474, %v1478
        %v1480 = vlaneseq
        %v1481 = vshrl.u32 %v1480, 7
        %v1482 = vsub.s32 1, %v1481
        %v1483 = vrot.slane %v1474, %v1482
        %v1502 = vunpack.c.l.b16 %v1458
        %v1503 = vunpack.c.h.b16 %v1458
        %v1504 = vunpack.c.l.b16 %v1459
        %v1505 = vunpack.c.h.b16 %v1459
        %v1506 = vunpack.c.l.b16 %v1460
        %v1507 = vunpack.c.h.b16 %v1460
        %v1508 = vunpack.c.l.b16 %v1461
        %v1509 = vunpack.c.h.b16 %v1461
        %v1510 = vunpack.c.l.b16 %v1462
        %v1511 = vunpack.c.h.b16 %v1462
        %v1512 = vunpack.c.l.b16 %v1463
        %v1513 = vunpack.c.h.b16 %v1463
        %v1514 = vunpack.c.l.b16 %v1464
        %v1515 = vunpack.c.h.b16 %v1464
        %v1516 = vunpack.c.l.b16 %v1465
        %v1517 = vunpack.c.h.b16 %v1465
        %v1518 = vunpack.c.l.b16 %v1466
        %v1519 = vunpack.c.h.b16 %v1466
        %v1520 = vunpack.c.l.b16 %v1467
        %v1521 = vunpack.c.h.b16 %v1467
        %v1522 = vunpack.c.l.b16 %v1468
        %v1523 = vunpack.c.h.b16 %v1468
        %v1524 = vunpack.c.l.b16 %v1469
        %v1525 = vunpack.c.h.b16 %v1469
        %v1526 = vunpack.c.l.b16 %v1470
        %v1527 = vunpack.c.h.b16 %v1470
        %v1528 = vunpack.c.l.b16 %v1471
        %v1529 = vunpack.c.h.b16 %v1471
        %v1530 = vunpack.c.l.b16 %v1472
        %v1531 = vunpack.c.h.b16 %v1472
        %v1532 = vunpack.c.l.b16 %v1473
        %v1533 = vunpack.c.h.b16 %v1473
        %v1534 = vpack.c.b16 %v1504, %v1502
        %v1535 = vpack.c.b16 %v1505, %v1503
        %v1536 = vpack.c.b16 %v1508, %v1506
        %v1537 = vpack.c.b16 %v1509, %v1507
        %v1538 = vpack.c.b16 %v1512, %v1510
        %v1539 = vpack.c.b16 %v1513, %v1511
        %v1540 = vpack.c.b16 %v1516, %v1514
        %v1541 = vpack.c.b16 %v1517, %v1515
        %v1542 = vpack.c.b16 %v1520, %v1518
        %v1543 = vpack.c.b16 %v1521, %v1519
        %v1544 = vpack.c.b16 %v1524, %v1522
        %v1545 = vpack.c.b16 %v1525, %v1523
        %v1546 = vpack.c.b16 %v1528, %v1526
        %v1547 = vpack.c.b16 %v1529, %v1527
        %v1548 = vpack.c.b16 %v1532, %v1530
        %v1549 = vpack.c.b16 %v1533, %v1531
        %1566 = vmatprep.subr.bf16.mxu0 %v1535
        %1567 = vmatpush1.bf16.msra.mxu0 %v1534
        %1568 = vmatprep.subr.bf16.mxu0 %v1537
        %1569 = vmatpush1.bf16.msra.mxu0 %v1536
        %1570 = vmatprep.subr.bf16.mxu0 %v1539
        %1571 = vmatpush1.bf16.msra.mxu0 %v1538
        %1572 = vmatprep.subr.bf16.mxu0 %v1541
        %1573 = vmatpush1.bf16.msra.mxu0 %v1540
        %1574 = vmatprep.subr.bf16.mxu0 %v1543
        %1575 = vmatpush1.bf16.msra.mxu0 %v1542
        %1576 = vmatprep.subr.bf16.mxu0 %v1545
        %1577 = vmatpush1.bf16.msra.mxu0 %v1544
        %1578 = vmatprep.subr.bf16.mxu0 %v1547
        %1579 = vmatpush1.bf16.msra.mxu0 %v1546
        %1580 = vmatprep.subr.bf16.mxu0 %v1549
        %1581 = vmatpush1.bf16.msra.mxu0 %v1548
        %1582 = vmatprep.subr.bf16.mxu0 0
        %1583 = vmatpush1.bf16.msra.mxu0 0
        %1584 = vmatprep.subr.bf16.mxu0 0
        %1585 = vmatpush1.bf16.msra.mxu0 0
        %1586 = vmatprep.subr.bf16.mxu0 0
        %1587 = vmatpush1.bf16.msra.mxu0 0
        %1588 = vmatprep.subr.bf16.mxu0 0
        %1589 = vmatpush1.bf16.msra.mxu0 0
        %1590 = vmatprep.subr.bf16.mxu0 0
        %1591 = vmatpush1.bf16.msra.mxu0 0
        %1592 = vmatprep.subr.bf16.mxu0 0
        %1593 = vmatpush1.bf16.msra.mxu0 0
        %1594 = vmatprep.subr.bf16.mxu0 0
        %1595 = vmatpush1.bf16.msra.mxu0 0
        %1596 = vmatprep.subr.bf16.mxu0 0
        %1597 = vmatpush1.bf16.msra.mxu0 0
        %1598 = vmatprep.mubr.bf16.mxu0 0
        %1599 = vmatmul.mubr.bf16.gmra.mrb[0].mxu0 %v1450
        %v1600 = vpop.f32.mrb[0].mxu0
        %v1601 = vadd.f32 %v1479, %v1600
        %v1602 = vpop.f32.mrb[0].mxu0
        %v1603 = vadd.f32 %v1483, %v1602
        %v1604 = vpop.f32.mrb[0].mxu0
        %v1605 = vadd.f32 %v1479, %v1604
        %v1606 = vpop.f32.mrb[0].mxu0
        %v1607 = vadd.f32 %v1483, %v1606
        %1608 = vmatprep.mubr.bf16.mxu0 0
        %1609 = vmatmul.mubr.bf16.gmra.mrb[0].mxu0 %v1451
        %v1610 = vpop.f32.mrb[0].mxu0
        %v1611 = vadd.f32 %v1479, %v1610
        %v1612 = vpop.f32.mrb[0].mxu0
        %v1613 = vadd.f32 %v1483, %v1612
        %v1614 = vpop.f32.mrb[0].mxu0
        %v1615 = vadd.f32 %v1479, %v1614
        %v1616 = vpop.f32.mrb[0].mxu0
        %v1617 = vadd.f32 %v1483, %v1616
        %1618 = vmatprep.mubr.bf16.mxu0 0
        %1619 = vmatmul.mubr.bf16.gmra.mrb[0].mxu0 %v1452
        %v1620 = vpop.f32.mrb[0].mxu0
        %v1621 = vadd.f32 %v1479, %v1620
        %v1622 = vpop.f32.mrb[0].mxu0
        %v1623 = vadd.f32 %v1483, %v1622
        %v1624 = vpop.f32.mrb[0].mxu0
        %v1625 = vadd.f32 %v1479, %v1624
        %v1626 = vpop.f32.mrb[0].mxu0
        %v1627 = vadd.f32 %v1483, %v1626
        %1628 = vmatprep.mubr.bf16.mxu0 0
        %1629 = vmatmul.mubr.bf16.gmra.mrb[0].mxu0 %v1453
        %v1630 = vpop.f32.mrb[0].mxu0
        %v1631 = vadd.f32 %v1479, %v1630
        %v1632 = vpop.f32.mrb[0].mxu0
        %v1633 = vadd.f32 %v1483, %v1632
        %v1634 = vpop.f32.mrb[0].mxu0
        %v1635 = vadd.f32 %v1479, %v1634
        %v1636 = vpop.f32.mrb[0].mxu0
        %v1637 = vadd.f32 %v1483, %v1636
        %1638 = vmatprep.mubr.bf16.mxu0 0
        %1639 = vmatmul.mubr.bf16.gmra.mrb[0].mxu0 %v1454
        %v1640 = vpop.f32.mrb[0].mxu0
        %v1641 = vadd.f32 %v1479, %v1640
        %v1642 = vpop.f32.mrb[0].mxu0
        %v1643 = vadd.f32 %v1483, %v1642
        %v1644 = vpop.f32.mrb[0].mxu0
        %v1645 = vadd.f32 %v1479, %v1644
        %v1646 = vpop.f32.mrb[0].mxu0
        %v1647 = vadd.f32 %v1483, %v1646
        %1648 = vmatprep.mubr.bf16.mxu0 0
        %1649 = vmatmul.mubr.bf16.gmra.mrb[0].mxu0 %v1455
        %v1650 = vpop.f32.mrb[0].mxu0
        %v1651 = vadd.f32 %v1479, %v1650
        %v1652 = vpop.f32.mrb[0].mxu0
        %v1653 = vadd.f32 %v1483, %v1652
        %v1654 = vpop.f32.mrb[0].mxu0
        %v1655 = vadd.f32 %v1479, %v1654
        %v1656 = vpop.f32.mrb[0].mxu0
        %v1657 = vadd.f32 %v1483, %v1656
        %1658 = vmatprep.mubr.bf16.mxu0 0
        %1659 = vmatmul.mubr.bf16.gmra.mrb[0].mxu0 %v1456
        %v1660 = vpop.f32.mrb[0].mxu0
        %v1661 = vadd.f32 %v1479, %v1660
        %v1662 = vpop.f32.mrb[0].mxu0
        %v1663 = vadd.f32 %v1483, %v1662
        %v1664 = vpop.f32.mrb[0].mxu0
        %v1665 = vadd.f32 %v1479, %v1664
        %v1666 = vpop.f32.mrb[0].mxu0
        %v1667 = vadd.f32 %v1483, %v1666
        %1668 = vmatprep.mubr.bf16.mxu0 0
        %1669 = vmatmul.mubr.bf16.gmra.mrb[0].mxu0 %v1457
        %v1670 = vpop.f32.mrb[0].mxu0
        %v1671 = vadd.f32 %v1479, %v1670
        %v1672 = vpop.f32.mrb[0].mxu0
        %v1673 = vadd.f32 %v1483, %v1672
        %v1674 = vpop.f32.mrb[0].mxu0
        %v1675 = vadd.f32 %v1479, %v1674
        %v1676 = vpop.f32.mrb[0].mxu0
        %v1677 = vadd.f32 %v1483, %v1676
        %1678 = vdwg.mxu0
        %v1679 = vmax.f32 %v1601, 0.0
        %v1680 = vmax.f32 %v1603, 0.0
        %v1681 = vmax.f32 %v1605, 0.0
        %v1682 = vmax.f32 %v1607, 0.0
        %v1683 = vmax.f32 %v1611, 0.0
        %v1684 = vmax.f32 %v1613, 0.0
        %v1685 = vmax.f32 %v1615, 0.0
        %v1686 = vmax.f32 %v1617, 0.0
        %v1687 = vmax.f32 %v1621, 0.0
        %v1688 = vmax.f32 %v1623, 0.0
        %v1689 = vmax.f32 %v1625, 0.0
        %v1690 = vmax.f32 %v1627, 0.0
        %v1691 = vmax.f32 %v1631, 0.0
        %v1692 = vmax.f32 %v1633, 0.0
        %v1693 = vmax.f32 %v1635, 0.0
        %v1694 = vmax.f32 %v1637, 0.0
        %v1695 = vmax.f32 %v1641, 0.0
        %v1696 = vmax.f32 %v1643, 0.0
        %v1697 = vmax.f32 %v1645, 0.0
        %v1698 = vmax.f32 %v1647, 0.0
        %v1699 = vmax.f32 %v1651, 0.0
        %v1700 = vmax.f32 %v1653, 0.0
        %v1701 = vmax.f32 %v1655, 0.0
        %v1702 = vmax.f32 %v1657, 0.0
        %v1703 = vmax.f32 %v1661, 0.0
        %v1704 = vmax.f32 %v1663, 0.0
        %v1705 = vmax.f32 %v1665, 0.0
        %v1706 = vmax.f32 %v1667, 0.0
        %v1707 = vmax.f32 %v1671, 0.0
        %v1708 = vmax.f32 %v1673, 0.0
        %v1709 = vmax.f32 %v1675, 0.0
        %v1710 = vmax.f32 %v1677, 0.0
        %v1711 = vpack.c.bf16 %v1681, %v1679
        %v1712 = vpack.c.bf16 %v1682, %v1680
        %v1713 = vpack.c.bf16 %v1685, %v1683
        %v1714 = vpack.c.bf16 %v1686, %v1684
        %v1715 = vpack.c.bf16 %v1689, %v1687
        %v1716 = vpack.c.bf16 %v1690, %v1688
        %v1717 = vpack.c.bf16 %v1693, %v1691
        %v1718 = vpack.c.bf16 %v1694, %v1692
        %v1719 = vpack.c.bf16 %v1697, %v1695
        %v1720 = vpack.c.bf16 %v1698, %v1696
        %v1721 = vpack.c.bf16 %v1701, %v1699
        %v1722 = vpack.c.bf16 %v1702, %v1700
        %v1723 = vpack.c.bf16 %v1705, %v1703
        %v1724 = vpack.c.bf16 %v1706, %v1704
        %v1725 = vpack.c.bf16 %v1709, %v1707
        %v1726 = vpack.c.bf16 %v1710, %v1708
        %v1727 = vld [vmem:[%s21] sm:$0xff]
        %v1728 = vld [vmem:[%s21 + $0x8] sm:$0xff]
        %v1729 = vld [vmem:[%s21 + $0x10] sm:$0xff]
        %v1730 = vld [vmem:[%s21 + $0x18] sm:$0xff]
        %v1731 = vld [vmem:[%s21 + $0x20] sm:$0xff]
        %v1732 = vld [vmem:[%s21 + $0x28] sm:$0xff]
        %v1733 = vld [vmem:[%s21 + $0x30] sm:$0xff]
        %v1734 = vld [vmem:[%s21 + $0x38] sm:$0xff]
        %v1735 = vld [vmem:[%s21 + $0x40] sm:$0xff]
        %v1736 = vld [vmem:[%s21 + $0x48] sm:$0xff]
        %v1737 = vld [vmem:[%s21 + $0x50] sm:$0xff]
        %v1738 = vld [vmem:[%s21 + $0x58] sm:$0xff]
        %v1739 = vld [vmem:[%s21 + $0x60] sm:$0xff]
        %v1740 = vld [vmem:[%s21 + $0x68] sm:$0xff]
        %v1741 = vld [vmem:[%s21 + $0x70] sm:$0xff]
        %v1742 = vld [vmem:[%s21 + $0x78] sm:$0xff]
        %v1743 = vld [vmem:[%s21 + $0x80] sm:$0xff]
        %v1744 = vld [vmem:[%s21 + $0x88] sm:$0xff]
        %v1745 = vld [vmem:[%s21 + $0x90] sm:$0xff]
        %v1746 = vld [vmem:[%s21 + $0x98] sm:$0xff]
        %v1747 = vld [vmem:[%s21 + $0xa0] sm:$0xff]
        %v1748 = vld [vmem:[%s21 + $0xa8] sm:$0xff]
        %v1749 = vld [vmem:[%s21 + $0xb0] sm:$0xff]
        %v1750 = vld [vmem:[%s21 + $0xb8] sm:$0xff]
        %v1751 = vld [vmem:[%s21 + $0xc0] sm:$0xff]
        %v1752 = vld [vmem:[%s21 + $0xc8] sm:$0xff]
        %v1753 = vld [vmem:[%s21 + $0xd0] sm:$0xff]
        %v1754 = vld [vmem:[%s21 + $0xd8] sm:$0xff]
        %v1755 = vld [vmem:[%s21 + $0xe0] sm:$0xff]
        %v1756 = vld [vmem:[%s21 + $0xe8] sm:$0xff]
        %v1757 = vld [vmem:[%s21 + $0xf0] sm:$0xff]
        %v1758 = vld [vmem:[%s21 + $0xf8] sm:$0xff]
        %v1759 = vld [vmem:[%s23] sm:$0x3]
        %v1761 = vlaneseq
        %v1762 = vshrl.u32 %v1761, 7
        %v1763 = vsub.s32 0, %v1762
        %v1764 = vrot.slane %v1759, %v1763
        %v1765 = vlaneseq
        %v1766 = vshrl.u32 %v1765, 7
        %v1767 = vsub.s32 1, %v1766
        %v1768 = vrot.slane %v1759, %v1767
        %v1803 = vunpack.c.l.b16 %v1727
        %v1804 = vunpack.c.h.b16 %v1727
        %v1805 = vunpack.c.l.b16 %v1728
        %v1806 = vunpack.c.h.b16 %v1728
        %v1807 = vunpack.c.l.b16 %v1729
        %v1808 = vunpack.c.h.b16 %v1729
        %v1809 = vunpack.c.l.b16 %v1730
        %v1810 = vunpack.c.h.b16 %v1730
        %v1811 = vunpack.c.l.b16 %v1731
        %v1812 = vunpack.c.h.b16 %v1731
        %v1813 = vunpack.c.l.b16 %v1732
        %v1814 = vunpack.c.h.b16 %v1732
        %v1815 = vunpack.c.l.b16 %v1733
        %v1816 = vunpack.c.h.b16 %v1733
        %v1817 = vunpack.c.l.b16 %v1734
        %v1818 = vunpack.c.h.b16 %v1734
        %v1819 = vunpack.c.l.b16 %v1735
        %v1820 = vunpack.c.h.b16 %v1735
        %v1821 = vunpack.c.l.b16 %v1736
        %v1822 = vunpack.c.h.b16 %v1736
        %v1823 = vunpack.c.l.b16 %v1737
        %v1824 = vunpack.c.h.b16 %v1737
        %v1825 = vunpack.c.l.b16 %v1738
        %v1826 = vunpack.c.h.b16 %v1738
        %v1827 = vunpack.c.l.b16 %v1739
        %v1828 = vunpack.c.h.b16 %v1739
        %v1829 = vunpack.c.l.b16 %v1740
        %v1830 = vunpack.c.h.b16 %v1740
        %v1831 = vunpack.c.l.b16 %v1741
        %v1832 = vunpack.c.h.b16 %v1741
        %v1833 = vunpack.c.l.b16 %v1742
        %v1834 = vunpack.c.h.b16 %v1742
        %v1835 = vunpack.c.l.b16 %v1743
        %v1836 = vunpack.c.h.b16 %v1743
        %v1837 = vunpack.c.l.b16 %v1744
        %v1838 = vunpack.c.h.b16 %v1744
        %v1839 = vunpack.c.l.b16 %v1745
        %v1840 = vunpack.c.h.b16 %v1745
        %v1841 = vunpack.c.l.b16 %v1746
        %v1842 = vunpack.c.h.b16 %v1746
        %v1843 = vunpack.c.l.b16 %v1747
        %v1844 = vunpack.c.h.b16 %v1747
        %v1845 = vunpack.c.l.b16 %v1748
        %v1846 = vunpack.c.h.b16 %v1748
        %v1847 = vunpack.c.l.b16 %v1749
        %v1848 = vunpack.c.h.b16 %v1749
        %v1849 = vunpack.c.l.b16 %v1750
        %v1850 = vunpack.c.h.b16 %v1750
        %v1851 = vunpack.c.l.b16 %v1751
        %v1852 = vunpack.c.h.b16 %v1751
        %v1853 = vunpack.c.l.b16 %v1752
        %v1854 = vunpack.c.h.b16 %v1752
        %v1855 = vunpack.c.l.b16 %v1753
        %v1856 = vunpack.c.h.b16 %v1753
        %v1857 = vunpack.c.l.b16 %v1754
        %v1858 = vunpack.c.h.b16 %v1754
        %v1859 = vunpack.c.l.b16 %v1755
        %v1860 = vunpack.c.h.b16 %v1755
        %v1861 = vunpack.c.l.b16 %v1756
        %v1862 = vunpack.c.h.b16 %v1756
        %v1863 = vunpack.c.l.b16 %v1757
        %v1864 = vunpack.c.h.b16 %v1757
        %v1865 = vunpack.c.l.b16 %v1758
        %v1866 = vunpack.c.h.b16 %v1758
        %v1867 = vpack.c.b16 %v1805, %v1803
        %v1868 = vpack.c.b16 %v1806, %v1804
        %v1869 = vpack.c.b16 %v1809, %v1807
        %v1870 = vpack.c.b16 %v1810, %v1808
        %v1871 = vpack.c.b16 %v1813, %v1811
        %v1872 = vpack.c.b16 %v1814, %v1812
        %v1873 = vpack.c.b16 %v1817, %v1815
        %v1874 = vpack.c.b16 %v1818, %v1816
        %v1875 = vpack.c.b16 %v1821, %v1819
        %v1876 = vpack.c.b16 %v1822, %v1820
        %v1877 = vpack.c.b16 %v1825, %v1823
        %v1878 = vpack.c.b16 %v1826, %v1824
        %v1879 = vpack.c.b16 %v1829, %v1827
        %v1880 = vpack.c.b16 %v1830, %v1828
        %v1881 = vpack.c.b16 %v1833, %v1831
        %v1882 = vpack.c.b16 %v1834, %v1832
        %v1883 = vpack.c.b16 %v1837, %v1835
        %v1884 = vpack.c.b16 %v1838, %v1836
        %v1885 = vpack.c.b16 %v1841, %v1839
        %v1886 = vpack.c.b16 %v1842, %v1840
        %v1887 = vpack.c.b16 %v1845, %v1843
        %v1888 = vpack.c.b16 %v1846, %v1844
        %v1889 = vpack.c.b16 %v1849, %v1847
        %v1890 = vpack.c.b16 %v1850, %v1848
        %v1891 = vpack.c.b16 %v1853, %v1851
        %v1892 = vpack.c.b16 %v1854, %v1852
        %v1893 = vpack.c.b16 %v1857, %v1855
        %v1894 = vpack.c.b16 %v1858, %v1856
        %v1895 = vpack.c.b16 %v1861, %v1859
        %v1896 = vpack.c.b16 %v1862, %v1860
        %v1897 = vpack.c.b16 %v1865, %v1863
        %v1898 = vpack.c.b16 %v1866, %v1864
        %1931 = vmatprep.subr.bf16.mxu0 %v1868
        %1932 = vmatpush1.bf16.msra.mxu0 %v1867
        %1933 = vmatprep.subr.bf16.mxu0 %v1870
        %1934 = vmatpush1.bf16.msra.mxu0 %v1869
        %1935 = vmatprep.subr.bf16.mxu0 %v1872
        %1936 = vmatpush1.bf16.msra.mxu0 %v1871
        %1937 = vmatprep.subr.bf16.mxu0 %v1874
        %1938 = vmatpush1.bf16.msra.mxu0 %v1873
        %1939 = vmatprep.subr.bf16.mxu0 %v1876
        %1940 = vmatpush1.bf16.msra.mxu0 %v1875
        %1941 = vmatprep.subr.bf16.mxu0 %v1878
        %1942 = vmatpush1.bf16.msra.mxu0 %v1877
        %1943 = vmatprep.subr.bf16.mxu0 %v1880
        %1944 = vmatpush1.bf16.msra.mxu0 %v1879
        %1945 = vmatprep.subr.bf16.mxu0 %v1882
        %1946 = vmatpush1.bf16.msra.mxu0 %v1881
        %1947 = vmatprep.subr.bf16.mxu0 %v1884
        %1948 = vmatpush1.bf16.msra.mxu0 %v1883
        %1949 = vmatprep.subr.bf16.mxu0 %v1886
        %1950 = vmatpush1.bf16.msra.mxu0 %v1885
        %1951 = vmatprep.subr.bf16.mxu0 %v1888
        %1952 = vmatpush1.bf16.msra.mxu0 %v1887
        %1953 = vmatprep.subr.bf16.mxu0 %v1890
        %1954 = vmatpush1.bf16.msra.mxu0 %v1889
        %1955 = vmatprep.subr.bf16.mxu0 %v1892
        %1956 = vmatpush1.bf16.msra.mxu0 %v1891
        %1957 = vmatprep.subr.bf16.mxu0 %v1894
        %1958 = vmatpush1.bf16.msra.mxu0 %v1893
        %1959 = vmatprep.subr.bf16.mxu0 %v1896
        %1960 = vmatpush1.bf16.msra.mxu0 %v1895
        %1961 = vmatprep.subr.bf16.mxu0 %v1898
        %1962 = vmatpush1.bf16.msra.mxu0 %v1897
        %1963 = vmatprep.mubr.bf16.mxu0 %v1712
        %1964 = vmatmul.mubr.bf16.gmra.mrb[0].mxu0 %v1711
        %v1965 = vpop.f32.mrb[0].mxu0
        %v1966 = vadd.f32 %v1764, %v1965
        %v1967 = vpop.f32.mrb[0].mxu0
        %v1968 = vadd.f32 %v1768, %v1967
        %v1969 = vpop.f32.mrb[0].mxu0
        %v1970 = vadd.f32 %v1764, %v1969
        %v1971 = vpop.f32.mrb[0].mxu0
        %v1972 = vadd.f32 %v1768, %v1971
        %1973 = vmatprep.mubr.bf16.mxu0 %v1714
        %1974 = vmatmul.mubr.bf16.gmra.mrb[0].mxu0 %v1713
        %v1975 = vpop.f32.mrb[0].mxu0
        %v1976 = vadd.f32 %v1764, %v1975
        %v1977 = vpop.f32.mrb[0].mxu0
        %v1978 = vadd.f32 %v1768, %v1977
        %v1979 = vpop.f32.mrb[0].mxu0
        %v1980 = vadd.f32 %v1764, %v1979
        %v1981 = vpop.f32.mrb[0].mxu0
        %v1982 = vadd.f32 %v1768, %v1981
        %1983 = vmatprep.mubr.bf16.mxu0 %v1716
        %1984 = vmatmul.mubr.bf16.gmra.mrb[0].mxu0 %v1715
        %v1985 = vpop.f32.mrb[0].mxu0
        %v1986 = vadd.f32 %v1764, %v1985
        %v1987 = vpop.f32.mrb[0].mxu0
        %v1988 = vadd.f32 %v1768, %v1987
        %v1989 = vpop.f32.mrb[0].mxu0
        %v1990 = vadd.f32 %v1764, %v1989
        %v1991 = vpop.f32.mrb[0].mxu0
        %v1992 = vadd.f32 %v1768, %v1991
        %1993 = vmatprep.mubr.bf16.mxu0 %v1718
        %1994 = vmatmul.mubr.bf16.gmra.mrb[0].mxu0 %v1717
        %v1995 = vpop.f32.mrb[0].mxu0
        %v1996 = vadd.f32 %v1764, %v1995
        %v1997 = vpop.f32.mrb[0].mxu0
        %v1998 = vadd.f32 %v1768, %v1997
        %v1999 = vpop.f32.mrb[0].mxu0
        %v2000 = vadd.f32 %v1764, %v1999
        %v2001 = vpop.f32.mrb[0].mxu0
        %v2002 = vadd.f32 %v1768, %v2001
        %2003 = vmatprep.mubr.bf16.mxu0 %v1720
        %2004 = vmatmul.mubr.bf16.gmra.mrb[0].mxu0 %v1719
        %v2005 = vpop.f32.mrb[0].mxu0
        %v2006 = vadd.f32 %v1764, %v2005
        %v2007 = vpop.f32.mrb[0].mxu0
        %v2008 = vadd.f32 %v1768, %v2007
        %v2009 = vpop.f32.mrb[0].mxu0
        %v2010 = vadd.f32 %v1764, %v2009
        %v2011 = vpop.f32.mrb[0].mxu0
        %v2012 = vadd.f32 %v1768, %v2011
        %2013 = vmatprep.mubr.bf16.mxu0 %v1722
        %2014 = vmatmul.mubr.bf16.gmra.mrb[0].mxu0 %v1721
        %v2015 = vpop.f32.mrb[0].mxu0
        %v2016 = vadd.f32 %v1764, %v2015
        %v2017 = vpop.f32.mrb[0].mxu0
        %v2018 = vadd.f32 %v1768, %v2017
        %v2019 = vpop.f32.mrb[0].mxu0
        %v2020 = vadd.f32 %v1764, %v2019
        %v2021 = vpop.f32.mrb[0].mxu0
        %v2022 = vadd.f32 %v1768, %v2021
        %2023 = vmatprep.mubr.bf16.mxu0 %v1724
        %2024 = vmatmul.mubr.bf16.gmra.mrb[0].mxu0 %v1723
        %v2025 = vpop.f32.mrb[0].mxu0
        %v2026 = vadd.f32 %v1764, %v2025
        %v2027 = vpop.f32.mrb[0].mxu0
        %v2028 = vadd.f32 %v1768, %v2027
        %v2029 = vpop.f32.mrb[0].mxu0
        %v2030 = vadd.f32 %v1764, %v2029
        %v2031 = vpop.f32.mrb[0].mxu0
        %v2032 = vadd.f32 %v1768, %v2031
        %2033 = vmatprep.mubr.bf16.mxu0 %v1726
        %2034 = vmatmul.mubr.bf16.gmra.mrb[0].mxu0 %v1725
        %v2035 = vpop.f32.mrb[0].mxu0
        %v2036 = vadd.f32 %v1764, %v2035
        %v2037 = vpop.f32.mrb[0].mxu0
        %v2038 = vadd.f32 %v1768, %v2037
        %v2039 = vpop.f32.mrb[0].mxu0
        %v2040 = vadd.f32 %v1764, %v2039
        %v2041 = vpop.f32.mrb[0].mxu0
        %v2042 = vadd.f32 %v1768, %v2041
        %2043 = vdwg.mxu0
        %v2044 = vmax.f32 %v1966, 0.0
        %v2045 = vmax.f32 %v1968, 0.0
        %v2046 = vmax.f32 %v1970, 0.0
        %v2047 = vmax.f32 %v1972, 0.0
        %v2048 = vmax.f32 %v1976, 0.0
        %v2049 = vmax.f32 %v1978, 0.0
        %v2050 = vmax.f32 %v1980, 0.0
        %v2051 = vmax.f32 %v1982, 0.0
        %v2052 = vmax.f32 %v1986, 0.0
        %v2053 = vmax.f32 %v1988, 0.0
        %v2054 = vmax.f32 %v1990, 0.0
        %v2055 = vmax.f32 %v1992, 0.0
        %v2056 = vmax.f32 %v1996, 0.0
        %v2057 = vmax.f32 %v1998, 0.0
        %v2058 = vmax.f32 %v2000, 0.0
        %v2059 = vmax.f32 %v2002, 0.0
        %v2060 = vmax.f32 %v2006, 0.0
        %v2061 = vmax.f32 %v2008, 0.0
        %v2062 = vmax.f32 %v2010, 0.0
        %v2063 = vmax.f32 %v2012, 0.0
        %v2064 = vmax.f32 %v2016, 0.0
        %v2065 = vmax.f32 %v2018, 0.0
        %v2066 = vmax.f32 %v2020, 0.0
        %v2067 = vmax.f32 %v2022, 0.0
        %v2068 = vmax.f32 %v2026, 0.0
        %v2069 = vmax.f32 %v2028, 0.0
        %v2070 = vmax.f32 %v2030, 0.0
        %v2071 = vmax.f32 %v2032, 0.0
        %v2072 = vmax.f32 %v2036, 0.0
        %v2073 = vmax.f32 %v2038, 0.0
        %v2074 = vmax.f32 %v2040, 0.0
        %v2075 = vmax.f32 %v2042, 0.0
        %v2076 = vld [vmem:[%s25] sm:$0x3]
        %v2077 = vld [vmem:[%s27] sm:$0x3]
        %2079 = vset.pattern.permute.xlu0 0
        %2080 = vperm.xlu0 %2079, %v986
        %v2081 = vpop.permute.xlu0 %2080
        %2084 = vset.pattern.permute.xlu0 0
        %2085 = vperm.xlu0 %2084, %v987
        %v2086 = vpop.permute.xlu0 %2085
        %2089 = vset.pattern.permute.xlu0 0
        %2090 = vperm.xlu0 %2089, %v988
        %v2091 = vpop.permute.xlu0 %2090
        %2094 = vset.pattern.permute.xlu0 0
        %2095 = vperm.xlu0 %2094, %v989
        %v2096 = vpop.permute.xlu0 %2095
        %2099 = vset.pattern.permute.xlu0 0
        %2100 = vperm.xlu0 %2099, %v990
        %v2101 = vpop.permute.xlu0 %2100
        %2104 = vset.pattern.permute.xlu0 0
        %2105 = vperm.xlu0 %2104, %v991
        %v2106 = vpop.permute.xlu0 %2105
        %2109 = vset.pattern.permute.xlu0 0
        %2110 = vperm.xlu0 %2109, %v992
        %v2111 = vpop.permute.xlu0 %2110
        %2114 = vset.pattern.permute.xlu0 0
        %2115 = vperm.xlu0 %2114, %v993
        %v2116 = vpop.permute.xlu0 %2115
        %2119 = vset.pattern.permute.xlu0 0
        %2120 = vperm.xlu0 %2119, %v994
        %v2121 = vpop.permute.xlu0 %2120
        %2124 = vset.pattern.permute.xlu0 0
        %2125 = vperm.xlu0 %2124, %v995
        %v2126 = vpop.permute.xlu0 %2125
        %2129 = vset.pattern.permute.xlu0 0
        %2130 = vperm.xlu0 %2129, %v996
        %v2131 = vpop.permute.xlu0 %2130
        %2134 = vset.pattern.permute.xlu0 0
        %2135 = vperm.xlu0 %2134, %v997
        %v2136 = vpop.permute.xlu0 %2135
        %2139 = vset.pattern.permute.xlu0 0
        %2140 = vperm.xlu0 %2139, %v998
        %v2141 = vpop.permute.xlu0 %2140
        %2144 = vset.pattern.permute.xlu0 0
        %2145 = vperm.xlu0 %2144, %v999
        %v2146 = vpop.permute.xlu0 %2145
        %2149 = vset.pattern.permute.xlu0 0
        %2150 = vperm.xlu0 %2149, %v1000
        %v2151 = vpop.permute.xlu0 %2150
        %2154 = vset.pattern.permute.xlu0 0
        %2155 = vperm.xlu0 %2154, %v1001
        %v2156 = vpop.permute.xlu0 %2155
        %v2158 = vmul.f32 %v2044, %v2081
        %v2159 = vmul.f32 %v2045, %v2081
        %v2160 = vmul.f32 %v2046, %v2086
        %v2161 = vmul.f32 %v2047, %v2086
        %v2162 = vmul.f32 %v2048, %v2091
        %v2163 = vmul.f32 %v2049, %v2091
        %v2164 = vmul.f32 %v2050, %v2096
        %v2165 = vmul.f32 %v2051, %v2096
        %v2166 = vmul.f32 %v2052, %v2101
        %v2167 = vmul.f32 %v2053, %v2101
        %v2168 = vmul.f32 %v2054, %v2106
        %v2169 = vmul.f32 %v2055, %v2106
        %v2170 = vmul.f32 %v2056, %v2111
        %v2171 = vmul.f32 %v2057, %v2111
        %v2172 = vmul.f32 %v2058, %v2116
        %v2173 = vmul.f32 %v2059, %v2116
        %v2174 = vmul.f32 %v2060, %v2121
        %v2175 = vmul.f32 %v2061, %v2121
        %v2176 = vmul.f32 %v2062, %v2126
        %v2177 = vmul.f32 %v2063, %v2126
        %v2178 = vmul.f32 %v2064, %v2131
        %v2179 = vmul.f32 %v2065, %v2131
        %v2180 = vmul.f32 %v2066, %v2136
        %v2181 = vmul.f32 %v2067, %v2136
        %v2182 = vmul.f32 %v2068, %v2141
        %v2183 = vmul.f32 %v2069, %v2141
        %v2184 = vmul.f32 %v2070, %v2146
        %v2185 = vmul.f32 %v2071, %v2146
        %v2186 = vmul.f32 %v2072, %v2151
        %v2187 = vmul.f32 %v2073, %v2151
        %v2188 = vmul.f32 %v2074, %v2156
        %v2189 = vmul.f32 %v2075, %v2156
        %v2190 = vadd.f32 %v2158, %v2160
        %v2191 = vadd.f32 %v2190, %v2162
        %v2192 = vadd.f32 %v2191, %v2164
        %v2193 = vadd.f32 %v2192, %v2166
        %v2194 = vadd.f32 %v2193, %v2168
        %v2195 = vadd.f32 %v2194, %v2170
        %v2196 = vadd.f32 %v2195, %v2172
        %v2197 = vadd.f32 %v2196, %v2174
        %v2198 = vadd.f32 %v2197, %v2176
        %v2199 = vadd.f32 %v2198, %v2178
        %v2200 = vadd.f32 %v2199, %v2180
        %v2201 = vadd.f32 %v2200, %v2182
        %v2202 = vadd.f32 %v2201, %v2184
        %v2203 = vadd.f32 %v2202, %v2186
        %v2204 = vadd.f32 %v2203, %v2188
        %v2205 = vrot.slane %v2204, 4
        %v2206 = vadd.f32 %v2204, %v2205
        %v2207 = vrot.slane %v2206, 2
        %v2208 = vadd.f32 %v2206, %v2207
        %v2209 = vrot.slane %v2208, 1
        %v2210 = vadd.f32 %v2208, %v2209
        %v2211 = vadd.f32 %v2159, %v2161
        %v2212 = vadd.f32 %v2211, %v2163
        %v2213 = vadd.f32 %v2212, %v2165
        %v2214 = vadd.f32 %v2213, %v2167
        %v2215 = vadd.f32 %v2214, %v2169
        %v2216 = vadd.f32 %v2215, %v2171
        %v2217 = vadd.f32 %v2216, %v2173
        %v2218 = vadd.f32 %v2217, %v2175
        %v2219 = vadd.f32 %v2218, %v2177
        %v2220 = vadd.f32 %v2219, %v2179
        %v2221 = vadd.f32 %v2220, %v2181
        %v2222 = vadd.f32 %v2221, %v2183
        %v2223 = vadd.f32 %v2222, %v2185
        %v2224 = vadd.f32 %v2223, %v2187
        %v2225 = vadd.f32 %v2224, %v2189
        %v2226 = vrot.slane %v2225, 4
        %v2227 = vadd.f32 %v2225, %v2226
        %v2228 = vrot.slane %v2227, 2
        %v2229 = vadd.f32 %v2227, %v2228
        %v2230 = vrot.slane %v2229, 1
        %v2231 = vadd.f32 %v2229, %v2230
        %2233 = vset.pattern.permute.xlu0 0
        %2234 = vperm.xlu0 %2233, %v1041
        %v2235 = vpop.permute.xlu0 %2234
        %v2237 = vmul.f32 %v2210, %v2235
        %v2238 = vmul.f32 %v2231, %v2235
        %v2239 = vsub.f32 %v2044, %v2237
        %v2240 = vsub.f32 %v2045, %v2238
        %v2241 = vsub.f32 %v2046, %v2237
        %v2242 = vsub.f32 %v2047, %v2238
        %v2243 = vsub.f32 %v2048, %v2237
        %v2244 = vsub.f32 %v2049, %v2238
        %v2245 = vsub.f32 %v2050, %v2237
        %v2246 = vsub.f32 %v2051, %v2238
        %v2247 = vsub.f32 %v2052, %v2237
        %v2248 = vsub.f32 %v2053, %v2238
        %v2249 = vsub.f32 %v2054, %v2237
        %v2250 = vsub.f32 %v2055, %v2238
        %v2251 = vsub.f32 %v2056, %v2237
        %v2252 = vsub.f32 %v2057, %v2238
        %v2253 = vsub.f32 %v2058, %v2237
        %v2254 = vsub.f32 %v2059, %v2238
        %v2255 = vsub.f32 %v2060, %v2237
        %v2256 = vsub.f32 %v2061, %v2238
        %v2257 = vsub.f32 %v2062, %v2237
        %v2258 = vsub.f32 %v2063, %v2238
        %v2259 = vsub.f32 %v2064, %v2237
        %v2260 = vsub.f32 %v2065, %v2238
        %v2261 = vsub.f32 %v2066, %v2237
        %v2262 = vsub.f32 %v2067, %v2238
        %v2263 = vsub.f32 %v2068, %v2237
        %v2264 = vsub.f32 %v2069, %v2238
        %v2265 = vsub.f32 %v2070, %v2237
        %v2266 = vsub.f32 %v2071, %v2238
        %v2267 = vsub.f32 %v2072, %v2237
        %v2268 = vsub.f32 %v2073, %v2238
        %v2269 = vsub.f32 %v2074, %v2237
        %v2270 = vsub.f32 %v2075, %v2238
        %v2271 = vmul.f32 %v2239, %v2081
        %v2272 = vmul.f32 %v2240, %v2081
        %v2273 = vmul.f32 %v2241, %v2086
        %v2274 = vmul.f32 %v2242, %v2086
        %v2275 = vmul.f32 %v2243, %v2091
        %v2276 = vmul.f32 %v2244, %v2091
        %v2277 = vmul.f32 %v2245, %v2096
        %v2278 = vmul.f32 %v2246, %v2096
        %v2279 = vmul.f32 %v2247, %v2101
        %v2280 = vmul.f32 %v2248, %v2101
        %v2281 = vmul.f32 %v2249, %v2106
        %v2282 = vmul.f32 %v2250, %v2106
        %v2283 = vmul.f32 %v2251, %v2111
        %v2284 = vmul.f32 %v2252, %v2111
        %v2285 = vmul.f32 %v2253, %v2116
        %v2286 = vmul.f32 %v2254, %v2116
        %v2287 = vmul.f32 %v2255, %v2121
        %v2288 = vmul.f32 %v2256, %v2121
        %v2289 = vmul.f32 %v2257, %v2126
        %v2290 = vmul.f32 %v2258, %v2126
        %v2291 = vmul.f32 %v2259, %v2131
        %v2292 = vmul.f32 %v2260, %v2131
        %v2293 = vmul.f32 %v2261, %v2136
        %v2294 = vmul.f32 %v2262, %v2136
        %v2295 = vmul.f32 %v2263, %v2141
        %v2296 = vmul.f32 %v2264, %v2141
        %v2297 = vmul.f32 %v2265, %v2146
        %v2298 = vmul.f32 %v2266, %v2146
        %v2299 = vmul.f32 %v2267, %v2151
        %v2300 = vmul.f32 %v2268, %v2151
        %v2301 = vmul.f32 %v2269, %v2156
        %v2302 = vmul.f32 %v2270, %v2156
        %v2303 = vmul.f32 %v2271, %v2271
        %v2304 = vmul.f32 %v2272, %v2272
        %v2305 = vmul.f32 %v2273, %v2273
        %v2306 = vmul.f32 %v2274, %v2274
        %v2307 = vmul.f32 %v2275, %v2275
        %v2308 = vmul.f32 %v2276, %v2276
        %v2309 = vmul.f32 %v2277, %v2277
        %v2310 = vmul.f32 %v2278, %v2278
        %v2311 = vmul.f32 %v2279, %v2279
        %v2312 = vmul.f32 %v2280, %v2280
        %v2313 = vmul.f32 %v2281, %v2281
        %v2314 = vmul.f32 %v2282, %v2282
        %v2315 = vmul.f32 %v2283, %v2283
        %v2316 = vmul.f32 %v2284, %v2284
        %v2317 = vmul.f32 %v2285, %v2285
        %v2318 = vmul.f32 %v2286, %v2286
        %v2319 = vmul.f32 %v2287, %v2287
        %v2320 = vmul.f32 %v2288, %v2288
        %v2321 = vmul.f32 %v2289, %v2289
        %v2322 = vmul.f32 %v2290, %v2290
        %v2323 = vmul.f32 %v2291, %v2291
        %v2324 = vmul.f32 %v2292, %v2292
        %v2325 = vmul.f32 %v2293, %v2293
        %v2326 = vmul.f32 %v2294, %v2294
        %v2327 = vmul.f32 %v2295, %v2295
        %v2328 = vmul.f32 %v2296, %v2296
        %v2329 = vmul.f32 %v2297, %v2297
        %v2330 = vmul.f32 %v2298, %v2298
        %v2331 = vmul.f32 %v2299, %v2299
        %v2332 = vmul.f32 %v2300, %v2300
        %v2333 = vmul.f32 %v2301, %v2301
        %v2334 = vmul.f32 %v2302, %v2302
        %v2335 = vadd.f32 %v2303, %v2305
        %v2336 = vadd.f32 %v2335, %v2307
        %v2337 = vadd.f32 %v2336, %v2309
        %v2338 = vadd.f32 %v2337, %v2311
        %v2339 = vadd.f32 %v2338, %v2313
        %v2340 = vadd.f32 %v2339, %v2315
        %v2341 = vadd.f32 %v2340, %v2317
        %v2342 = vadd.f32 %v2341, %v2319
        %v2343 = vadd.f32 %v2342, %v2321
        %v2344 = vadd.f32 %v2343, %v2323
        %v2345 = vadd.f32 %v2344, %v2325
        %v2346 = vadd.f32 %v2345, %v2327
        %v2347 = vadd.f32 %v2346, %v2329
        %v2348 = vadd.f32 %v2347, %v2331
        %v2349 = vadd.f32 %v2348, %v2333
        %v2350 = vrot.slane %v2349, 4
        %v2351 = vadd.f32 %v2349, %v2350
        %v2352 = vrot.slane %v2351, 2
        %v2353 = vadd.f32 %v2351, %v2352
        %v2354 = vrot.slane %v2353, 1
        %v2355 = vadd.f32 %v2353, %v2354
        %v2356 = vadd.f32 %v2304, %v2306
        %v2357 = vadd.f32 %v2356, %v2308
        %v2358 = vadd.f32 %v2357, %v2310
        %v2359 = vadd.f32 %v2358, %v2312
        %v2360 = vadd.f32 %v2359, %v2314
        %v2361 = vadd.f32 %v2360, %v2316
        %v2362 = vadd.f32 %v2361, %v2318
        %v2363 = vadd.f32 %v2362, %v2320
        %v2364 = vadd.f32 %v2363, %v2322
        %v2365 = vadd.f32 %v2364, %v2324
        %v2366 = vadd.f32 %v2365, %v2326
        %v2367 = vadd.f32 %v2366, %v2328
        %v2368 = vadd.f32 %v2367, %v2330
        %v2369 = vadd.f32 %v2368, %v2332
        %v2370 = vadd.f32 %v2369, %v2334
        %v2371 = vrot.slane %v2370, 4
        %v2372 = vadd.f32 %v2370, %v2371
        %v2373 = vrot.slane %v2372, 2
        %v2374 = vadd.f32 %v2372, %v2373
        %v2375 = vrot.slane %v2374, 1
        %v2376 = vadd.f32 %v2374, %v2375
        %v2377 = vmul.f32 %v2355, %v2235
        %v2378 = vmul.f32 %v2376, %v2235
        %v2379 = vadd.f32 %v2377, 1e-05
        %v2380 = vadd.f32 %v2378, 1e-05
        %v2381 = vrsqrt.pop %v2379
        %v2382 = vrsqrt.pop %v2380
        %v2383 = vmul.f32 %v2239, %v2381
        %v2384 = vmul.f32 %v2240, %v2382
        %v2385 = vmul.f32 %v2241, %v2381
        %v2386 = vmul.f32 %v2242, %v2382
        %v2387 = vmul.f32 %v2243, %v2381
        %v2388 = vmul.f32 %v2244, %v2382
        %v2389 = vmul.f32 %v2245, %v2381
        %v2390 = vmul.f32 %v2246, %v2382
        %v2391 = vmul.f32 %v2247, %v2381
        %v2392 = vmul.f32 %v2248, %v2382
        %v2393 = vmul.f32 %v2249, %v2381
        %v2394 = vmul.f32 %v2250, %v2382
        %v2395 = vmul.f32 %v2251, %v2381
        %v2396 = vmul.f32 %v2252, %v2382
        %v2397 = vmul.f32 %v2253, %v2381
        %v2398 = vmul.f32 %v2254, %v2382
        %v2399 = vmul.f32 %v2255, %v2381
        %v2400 = vmul.f32 %v2256, %v2382
        %v2401 = vmul.f32 %v2257, %v2381
        %v2402 = vmul.f32 %v2258, %v2382
        %v2403 = vmul.f32 %v2259, %v2381
        %v2404 = vmul.f32 %v2260, %v2382
        %v2405 = vmul.f32 %v2261, %v2381
        %v2406 = vmul.f32 %v2262, %v2382
        %v2407 = vmul.f32 %v2263, %v2381
        %v2408 = vmul.f32 %v2264, %v2382
        %v2409 = vmul.f32 %v2265, %v2381
        %v2410 = vmul.f32 %v2266, %v2382
        %v2411 = vmul.f32 %v2267, %v2381
        %v2412 = vmul.f32 %v2268, %v2382
        %v2413 = vmul.f32 %v2269, %v2381
        %v2414 = vmul.f32 %v2270, %v2382
        %v2416 = vlaneseq
        %v2417 = vshrl.u32 %v2416, 7
        %v2418 = vsub.s32 0, %v2417
        %v2419 = vrot.slane %v2076, %v2418
        %v2420 = vlaneseq
        %v2421 = vshrl.u32 %v2420, 7
        %v2422 = vsub.s32 1, %v2421
        %v2423 = vrot.slane %v2076, %v2422
        %v2426 = vmul.f32 %v2383, %v2419
        %v2427 = vmul.f32 %v2384, %v2423
        %v2428 = vmul.f32 %v2385, %v2419
        %v2429 = vmul.f32 %v2386, %v2423
        %v2430 = vmul.f32 %v2387, %v2419
        %v2431 = vmul.f32 %v2388, %v2423
        %v2432 = vmul.f32 %v2389, %v2419
        %v2433 = vmul.f32 %v2390, %v2423
        %v2434 = vmul.f32 %v2391, %v2419
        %v2435 = vmul.f32 %v2392, %v2423
        %v2436 = vmul.f32 %v2393, %v2419
        %v2437 = vmul.f32 %v2394, %v2423
        %v2438 = vmul.f32 %v2395, %v2419
        %v2439 = vmul.f32 %v2396, %v2423
        %v2440 = vmul.f32 %v2397, %v2419
        %v2441 = vmul.f32 %v2398, %v2423
        %v2442 = vmul.f32 %v2399, %v2419
        %v2443 = vmul.f32 %v2400, %v2423
        %v2444 = vmul.f32 %v2401, %v2419
        %v2445 = vmul.f32 %v2402, %v2423
        %v2446 = vmul.f32 %v2403, %v2419
        %v2447 = vmul.f32 %v2404, %v2423
        %v2448 = vmul.f32 %v2405, %v2419
        %v2449 = vmul.f32 %v2406, %v2423
        %v2450 = vmul.f32 %v2407, %v2419
        %v2451 = vmul.f32 %v2408, %v2423
        %v2452 = vmul.f32 %v2409, %v2419
        %v2453 = vmul.f32 %v2410, %v2423
        %v2454 = vmul.f32 %v2411, %v2419
        %v2455 = vmul.f32 %v2412, %v2423
        %v2456 = vmul.f32 %v2413, %v2419
        %v2457 = vmul.f32 %v2414, %v2423
        %v2459 = vlaneseq
        %v2460 = vshrl.u32 %v2459, 7
        %v2461 = vsub.s32 0, %v2460
        %v2462 = vrot.slane %v2077, %v2461
        %v2463 = vlaneseq
        %v2464 = vshrl.u32 %v2463, 7
        %v2465 = vsub.s32 1, %v2464
        %v2466 = vrot.slane %v2077, %v2465
        %v2469 = vadd.f32 %v2426, %v2462
        %v2470 = vadd.f32 %v2427, %v2466
        %v2471 = vadd.f32 %v2428, %v2462
        %v2472 = vadd.f32 %v2429, %v2466
        %v2473 = vadd.f32 %v2430, %v2462
        %v2474 = vadd.f32 %v2431, %v2466
        %v2475 = vadd.f32 %v2432, %v2462
        %v2476 = vadd.f32 %v2433, %v2466
        %v2477 = vadd.f32 %v2434, %v2462
        %v2478 = vadd.f32 %v2435, %v2466
        %v2479 = vadd.f32 %v2436, %v2462
        %v2480 = vadd.f32 %v2437, %v2466
        %v2481 = vadd.f32 %v2438, %v2462
        %v2482 = vadd.f32 %v2439, %v2466
        %v2483 = vadd.f32 %v2440, %v2462
        %v2484 = vadd.f32 %v2441, %v2466
        %v2485 = vadd.f32 %v2442, %v2462
        %v2486 = vadd.f32 %v2443, %v2466
        %v2487 = vadd.f32 %v2444, %v2462
        %v2488 = vadd.f32 %v2445, %v2466
        %v2489 = vadd.f32 %v2446, %v2462
        %v2490 = vadd.f32 %v2447, %v2466
        %v2491 = vadd.f32 %v2448, %v2462
        %v2492 = vadd.f32 %v2449, %v2466
        %v2493 = vadd.f32 %v2450, %v2462
        %v2494 = vadd.f32 %v2451, %v2466
        %v2495 = vadd.f32 %v2452, %v2462
        %v2496 = vadd.f32 %v2453, %v2466
        %v2497 = vadd.f32 %v2454, %v2462
        %v2498 = vadd.f32 %v2455, %v2466
        %v2499 = vadd.f32 %v2456, %v2462
        %v2500 = vadd.f32 %v2457, %v2466
        %v2501 = vld [vmem:[%s29] sm:$0x3]
        %v2502 = vld [vmem:[%s31] sm:$0x3]
        %v2503 = vmul.f32 %v2469, %v2081
        %v2504 = vmul.f32 %v2470, %v2081
        %v2505 = vmul.f32 %v2471, %v2086
        %v2506 = vmul.f32 %v2472, %v2086
        %v2507 = vmul.f32 %v2473, %v2091
        %v2508 = vmul.f32 %v2474, %v2091
        %v2509 = vmul.f32 %v2475, %v2096
        %v2510 = vmul.f32 %v2476, %v2096
        %v2511 = vmul.f32 %v2477, %v2101
        %v2512 = vmul.f32 %v2478, %v2101
        %v2513 = vmul.f32 %v2479, %v2106
        %v2514 = vmul.f32 %v2480, %v2106
        %v2515 = vmul.f32 %v2481, %v2111
        %v2516 = vmul.f32 %v2482, %v2111
        %v2517 = vmul.f32 %v2483, %v2116
        %v2518 = vmul.f32 %v2484, %v2116
        %v2519 = vmul.f32 %v2485, %v2121
        %v2520 = vmul.f32 %v2486, %v2121
        %v2521 = vmul.f32 %v2487, %v2126
        %v2522 = vmul.f32 %v2488, %v2126
        %v2523 = vmul.f32 %v2489, %v2131
        %v2524 = vmul.f32 %v2490, %v2131
        %v2525 = vmul.f32 %v2491, %v2136
        %v2526 = vmul.f32 %v2492, %v2136
        %v2527 = vmul.f32 %v2493, %v2141
        %v2528 = vmul.f32 %v2494, %v2141
        %v2529 = vmul.f32 %v2495, %v2146
        %v2530 = vmul.f32 %v2496, %v2146
        %v2531 = vmul.f32 %v2497, %v2151
        %v2532 = vmul.f32 %v2498, %v2151
        %v2533 = vmul.f32 %v2499, %v2156
        %v2534 = vmul.f32 %v2500, %v2156
        %v2535 = vadd.f32 %v2503, %v2505
        %v2536 = vadd.f32 %v2535, %v2507
        %v2537 = vadd.f32 %v2536, %v2509
        %v2538 = vadd.f32 %v2537, %v2511
        %v2539 = vadd.f32 %v2538, %v2513
        %v2540 = vadd.f32 %v2539, %v2515
        %v2541 = vadd.f32 %v2540, %v2517
        %v2542 = vadd.f32 %v2541, %v2519
        %v2543 = vadd.f32 %v2542, %v2521
        %v2544 = vadd.f32 %v2543, %v2523
        %v2545 = vadd.f32 %v2544, %v2525
        %v2546 = vadd.f32 %v2545, %v2527
        %v2547 = vadd.f32 %v2546, %v2529
        %v2548 = vadd.f32 %v2547, %v2531
        %v2549 = vadd.f32 %v2548, %v2533
        %v2550 = vrot.slane %v2549, 4
        %v2551 = vadd.f32 %v2549, %v2550
        %v2552 = vrot.slane %v2551, 2
        %v2553 = vadd.f32 %v2551, %v2552
        %v2554 = vrot.slane %v2553, 1
        %v2555 = vadd.f32 %v2553, %v2554
        %v2556 = vadd.f32 %v2504, %v2506
        %v2557 = vadd.f32 %v2556, %v2508
        %v2558 = vadd.f32 %v2557, %v2510
        %v2559 = vadd.f32 %v2558, %v2512
        %v2560 = vadd.f32 %v2559, %v2514
        %v2561 = vadd.f32 %v2560, %v2516
        %v2562 = vadd.f32 %v2561, %v2518
        %v2563 = vadd.f32 %v2562, %v2520
        %v2564 = vadd.f32 %v2563, %v2522
        %v2565 = vadd.f32 %v2564, %v2524
        %v2566 = vadd.f32 %v2565, %v2526
        %v2567 = vadd.f32 %v2566, %v2528
        %v2568 = vadd.f32 %v2567, %v2530
        %v2569 = vadd.f32 %v2568, %v2532
        %v2570 = vadd.f32 %v2569, %v2534
        %v2571 = vrot.slane %v2570, 4
        %v2572 = vadd.f32 %v2570, %v2571
        %v2573 = vrot.slane %v2572, 2
        %v2574 = vadd.f32 %v2572, %v2573
        %v2575 = vrot.slane %v2574, 1
        %v2576 = vadd.f32 %v2574, %v2575
        %v2577 = vmul.f32 %v2555, %v2235
        %v2578 = vmul.f32 %v2576, %v2235
        %v2579 = vsub.f32 %v2469, %v2577
        %v2580 = vsub.f32 %v2470, %v2578
        %v2581 = vsub.f32 %v2471, %v2577
        %v2582 = vsub.f32 %v2472, %v2578
        %v2583 = vsub.f32 %v2473, %v2577
        %v2584 = vsub.f32 %v2474, %v2578
        %v2585 = vsub.f32 %v2475, %v2577
        %v2586 = vsub.f32 %v2476, %v2578
        %v2587 = vsub.f32 %v2477, %v2577
        %v2588 = vsub.f32 %v2478, %v2578
        %v2589 = vsub.f32 %v2479, %v2577
        %v2590 = vsub.f32 %v2480, %v2578
        %v2591 = vsub.f32 %v2481, %v2577
        %v2592 = vsub.f32 %v2482, %v2578
        %v2593 = vsub.f32 %v2483, %v2577
        %v2594 = vsub.f32 %v2484, %v2578
        %v2595 = vsub.f32 %v2485, %v2577
        %v2596 = vsub.f32 %v2486, %v2578
        %v2597 = vsub.f32 %v2487, %v2577
        %v2598 = vsub.f32 %v2488, %v2578
        %v2599 = vsub.f32 %v2489, %v2577
        %v2600 = vsub.f32 %v2490, %v2578
        %v2601 = vsub.f32 %v2491, %v2577
        %v2602 = vsub.f32 %v2492, %v2578
        %v2603 = vsub.f32 %v2493, %v2577
        %v2604 = vsub.f32 %v2494, %v2578
        %v2605 = vsub.f32 %v2495, %v2577
        %v2606 = vsub.f32 %v2496, %v2578
        %v2607 = vsub.f32 %v2497, %v2577
        %v2608 = vsub.f32 %v2498, %v2578
        %v2609 = vsub.f32 %v2499, %v2577
        %v2610 = vsub.f32 %v2500, %v2578
        %v2611 = vmul.f32 %v2579, %v2081
        %v2612 = vmul.f32 %v2580, %v2081
        %v2613 = vmul.f32 %v2581, %v2086
        %v2614 = vmul.f32 %v2582, %v2086
        %v2615 = vmul.f32 %v2583, %v2091
        %v2616 = vmul.f32 %v2584, %v2091
        %v2617 = vmul.f32 %v2585, %v2096
        %v2618 = vmul.f32 %v2586, %v2096
        %v2619 = vmul.f32 %v2587, %v2101
        %v2620 = vmul.f32 %v2588, %v2101
        %v2621 = vmul.f32 %v2589, %v2106
        %v2622 = vmul.f32 %v2590, %v2106
        %v2623 = vmul.f32 %v2591, %v2111
        %v2624 = vmul.f32 %v2592, %v2111
        %v2625 = vmul.f32 %v2593, %v2116
        %v2626 = vmul.f32 %v2594, %v2116
        %v2627 = vmul.f32 %v2595, %v2121
        %v2628 = vmul.f32 %v2596, %v2121
        %v2629 = vmul.f32 %v2597, %v2126
        %v2630 = vmul.f32 %v2598, %v2126
        %v2631 = vmul.f32 %v2599, %v2131
        %v2632 = vmul.f32 %v2600, %v2131
        %v2633 = vmul.f32 %v2601, %v2136
        %v2634 = vmul.f32 %v2602, %v2136
        %v2635 = vmul.f32 %v2603, %v2141
        %v2636 = vmul.f32 %v2604, %v2141
        %v2637 = vmul.f32 %v2605, %v2146
        %v2638 = vmul.f32 %v2606, %v2146
        %v2639 = vmul.f32 %v2607, %v2151
        %v2640 = vmul.f32 %v2608, %v2151
        %v2641 = vmul.f32 %v2609, %v2156
        %v2642 = vmul.f32 %v2610, %v2156
        %v2643 = vmul.f32 %v2611, %v2611
        %v2644 = vmul.f32 %v2612, %v2612
        %v2645 = vmul.f32 %v2613, %v2613
        %v2646 = vmul.f32 %v2614, %v2614
        %v2647 = vmul.f32 %v2615, %v2615
        %v2648 = vmul.f32 %v2616, %v2616
        %v2649 = vmul.f32 %v2617, %v2617
        %v2650 = vmul.f32 %v2618, %v2618
        %v2651 = vmul.f32 %v2619, %v2619
        %v2652 = vmul.f32 %v2620, %v2620
        %v2653 = vmul.f32 %v2621, %v2621
        %v2654 = vmul.f32 %v2622, %v2622
        %v2655 = vmul.f32 %v2623, %v2623
        %v2656 = vmul.f32 %v2624, %v2624
        %v2657 = vmul.f32 %v2625, %v2625
        %v2658 = vmul.f32 %v2626, %v2626
        %v2659 = vmul.f32 %v2627, %v2627
        %v2660 = vmul.f32 %v2628, %v2628
        %v2661 = vmul.f32 %v2629, %v2629
        %v2662 = vmul.f32 %v2630, %v2630
        %v2663 = vmul.f32 %v2631, %v2631
        %v2664 = vmul.f32 %v2632, %v2632
        %v2665 = vmul.f32 %v2633, %v2633
        %v2666 = vmul.f32 %v2634, %v2634
        %v2667 = vmul.f32 %v2635, %v2635
        %v2668 = vmul.f32 %v2636, %v2636
        %v2669 = vmul.f32 %v2637, %v2637
        %v2670 = vmul.f32 %v2638, %v2638
        %v2671 = vmul.f32 %v2639, %v2639
        %v2672 = vmul.f32 %v2640, %v2640
        %v2673 = vmul.f32 %v2641, %v2641
        %v2674 = vmul.f32 %v2642, %v2642
        %v2675 = vadd.f32 %v2643, %v2645
        %v2676 = vadd.f32 %v2675, %v2647
        %v2677 = vadd.f32 %v2676, %v2649
        %v2678 = vadd.f32 %v2677, %v2651
        %v2679 = vadd.f32 %v2678, %v2653
        %v2680 = vadd.f32 %v2679, %v2655
        %v2681 = vadd.f32 %v2680, %v2657
        %v2682 = vadd.f32 %v2681, %v2659
        %v2683 = vadd.f32 %v2682, %v2661
        %v2684 = vadd.f32 %v2683, %v2663
        %v2685 = vadd.f32 %v2684, %v2665
        %v2686 = vadd.f32 %v2685, %v2667
        %v2687 = vadd.f32 %v2686, %v2669
        %v2688 = vadd.f32 %v2687, %v2671
        %v2689 = vadd.f32 %v2688, %v2673
        %v2690 = vrot.slane %v2689, 4
        %v2691 = vadd.f32 %v2689, %v2690
        %v2692 = vrot.slane %v2691, 2
        %v2693 = vadd.f32 %v2691, %v2692
        %v2694 = vrot.slane %v2693, 1
        %v2695 = vadd.f32 %v2693, %v2694
        %v2696 = vadd.f32 %v2644, %v2646
        %v2697 = vadd.f32 %v2696, %v2648
        %v2698 = vadd.f32 %v2697, %v2650
        %v2699 = vadd.f32 %v2698, %v2652
        %v2700 = vadd.f32 %v2699, %v2654
        %v2701 = vadd.f32 %v2700, %v2656
        %v2702 = vadd.f32 %v2701, %v2658
        %v2703 = vadd.f32 %v2702, %v2660
        %v2704 = vadd.f32 %v2703, %v2662
        %v2705 = vadd.f32 %v2704, %v2664
        %v2706 = vadd.f32 %v2705, %v2666
        %v2707 = vadd.f32 %v2706, %v2668
        %v2708 = vadd.f32 %v2707, %v2670
        %v2709 = vadd.f32 %v2708, %v2672
        %v2710 = vadd.f32 %v2709, %v2674
        %v2711 = vrot.slane %v2710, 4
        %v2712 = vadd.f32 %v2710, %v2711
        %v2713 = vrot.slane %v2712, 2
        %v2714 = vadd.f32 %v2712, %v2713
        %v2715 = vrot.slane %v2714, 1
        %v2716 = vadd.f32 %v2714, %v2715
        %v2717 = vmul.f32 %v2695, %v2235
        %v2718 = vmul.f32 %v2716, %v2235
        %v2719 = vadd.f32 %v2717, 1e-05
        %v2720 = vadd.f32 %v2718, 1e-05
        %v2721 = vrsqrt.pop %v2719
        %v2722 = vrsqrt.pop %v2720
        %v2723 = vmul.f32 %v2579, %v2721
        %v2724 = vmul.f32 %v2580, %v2722
        %v2725 = vmul.f32 %v2581, %v2721
        %v2726 = vmul.f32 %v2582, %v2722
        %v2727 = vmul.f32 %v2583, %v2721
        %v2728 = vmul.f32 %v2584, %v2722
        %v2729 = vmul.f32 %v2585, %v2721
        %v2730 = vmul.f32 %v2586, %v2722
        %v2731 = vmul.f32 %v2587, %v2721
        %v2732 = vmul.f32 %v2588, %v2722
        %v2733 = vmul.f32 %v2589, %v2721
        %v2734 = vmul.f32 %v2590, %v2722
        %v2735 = vmul.f32 %v2591, %v2721
        %v2736 = vmul.f32 %v2592, %v2722
        %v2737 = vmul.f32 %v2593, %v2721
        %v2738 = vmul.f32 %v2594, %v2722
        %v2739 = vmul.f32 %v2595, %v2721
        %v2740 = vmul.f32 %v2596, %v2722
        %v2741 = vmul.f32 %v2597, %v2721
        %v2742 = vmul.f32 %v2598, %v2722
        %v2743 = vmul.f32 %v2599, %v2721
        %v2744 = vmul.f32 %v2600, %v2722
        %v2745 = vmul.f32 %v2601, %v2721
        %v2746 = vmul.f32 %v2602, %v2722
        %v2747 = vmul.f32 %v2603, %v2721
        %v2748 = vmul.f32 %v2604, %v2722
        %v2749 = vmul.f32 %v2605, %v2721
        %v2750 = vmul.f32 %v2606, %v2722
        %v2751 = vmul.f32 %v2607, %v2721
        %v2752 = vmul.f32 %v2608, %v2722
        %v2753 = vmul.f32 %v2609, %v2721
        %v2754 = vmul.f32 %v2610, %v2722
        %v2756 = vlaneseq
        %v2757 = vshrl.u32 %v2756, 7
        %v2758 = vsub.s32 0, %v2757
        %v2759 = vrot.slane %v2501, %v2758
        %v2760 = vlaneseq
        %v2761 = vshrl.u32 %v2760, 7
        %v2762 = vsub.s32 1, %v2761
        %v2763 = vrot.slane %v2501, %v2762
        %v2766 = vmul.f32 %v2723, %v2759
        %v2767 = vmul.f32 %v2724, %v2763
        %v2768 = vmul.f32 %v2725, %v2759
        %v2769 = vmul.f32 %v2726, %v2763
        %v2770 = vmul.f32 %v2727, %v2759
        %v2771 = vmul.f32 %v2728, %v2763
        %v2772 = vmul.f32 %v2729, %v2759
        %v2773 = vmul.f32 %v2730, %v2763
        %v2774 = vmul.f32 %v2731, %v2759
        %v2775 = vmul.f32 %v2732, %v2763
        %v2776 = vmul.f32 %v2733, %v2759
        %v2777 = vmul.f32 %v2734, %v2763
        %v2778 = vmul.f32 %v2735, %v2759
        %v2779 = vmul.f32 %v2736, %v2763
        %v2780 = vmul.f32 %v2737, %v2759
        %v2781 = vmul.f32 %v2738, %v2763
        %v2782 = vmul.f32 %v2739, %v2759
        %v2783 = vmul.f32 %v2740, %v2763
        %v2784 = vmul.f32 %v2741, %v2759
        %v2785 = vmul.f32 %v2742, %v2763
        %v2786 = vmul.f32 %v2743, %v2759
        %v2787 = vmul.f32 %v2744, %v2763
        %v2788 = vmul.f32 %v2745, %v2759
        %v2789 = vmul.f32 %v2746, %v2763
        %v2790 = vmul.f32 %v2747, %v2759
        %v2791 = vmul.f32 %v2748, %v2763
        %v2792 = vmul.f32 %v2749, %v2759
        %v2793 = vmul.f32 %v2750, %v2763
        %v2794 = vmul.f32 %v2751, %v2759
        %v2795 = vmul.f32 %v2752, %v2763
        %v2796 = vmul.f32 %v2753, %v2759
        %v2797 = vmul.f32 %v2754, %v2763
        %v2799 = vlaneseq
        %v2800 = vshrl.u32 %v2799, 7
        %v2801 = vsub.s32 0, %v2800
        %v2802 = vrot.slane %v2502, %v2801
        %v2803 = vlaneseq
        %v2804 = vshrl.u32 %v2803, 7
        %v2805 = vsub.s32 1, %v2804
        %v2806 = vrot.slane %v2502, %v2805
        %v2809 = vadd.f32 %v2766, %v2802
        %v2810 = vadd.f32 %v2767, %v2806
        %v2811 = vadd.f32 %v2768, %v2802
        %v2812 = vadd.f32 %v2769, %v2806
        %v2813 = vadd.f32 %v2770, %v2802
        %v2814 = vadd.f32 %v2771, %v2806
        %v2815 = vadd.f32 %v2772, %v2802
        %v2816 = vadd.f32 %v2773, %v2806
        %v2817 = vadd.f32 %v2774, %v2802
        %v2818 = vadd.f32 %v2775, %v2806
        %v2819 = vadd.f32 %v2776, %v2802
        %v2820 = vadd.f32 %v2777, %v2806
        %v2821 = vadd.f32 %v2778, %v2802
        %v2822 = vadd.f32 %v2779, %v2806
        %v2823 = vadd.f32 %v2780, %v2802
        %v2824 = vadd.f32 %v2781, %v2806
        %v2825 = vadd.f32 %v2782, %v2802
        %v2826 = vadd.f32 %v2783, %v2806
        %v2827 = vadd.f32 %v2784, %v2802
        %v2828 = vadd.f32 %v2785, %v2806
        %v2829 = vadd.f32 %v2786, %v2802
        %v2830 = vadd.f32 %v2787, %v2806
        %v2831 = vadd.f32 %v2788, %v2802
        %v2832 = vadd.f32 %v2789, %v2806
        %v2833 = vadd.f32 %v2790, %v2802
        %v2834 = vadd.f32 %v2791, %v2806
        %v2835 = vadd.f32 %v2792, %v2802
        %v2836 = vadd.f32 %v2793, %v2806
        %v2837 = vadd.f32 %v2794, %v2802
        %v2838 = vadd.f32 %v2795, %v2806
        %v2839 = vadd.f32 %v2796, %v2802
        %v2840 = vadd.f32 %v2797, %v2806
        %v2841 = vmax.f32 %v2809, 0.0
        %v2842 = vmax.f32 %v2810, 0.0
        %v2843 = vmax.f32 %v2811, 0.0
        %v2844 = vmax.f32 %v2812, 0.0
        %v2845 = vmax.f32 %v2813, 0.0
        %v2846 = vmax.f32 %v2814, 0.0
        %v2847 = vmax.f32 %v2815, 0.0
        %v2848 = vmax.f32 %v2816, 0.0
        %v2849 = vmax.f32 %v2817, 0.0
        %v2850 = vmax.f32 %v2818, 0.0
        %v2851 = vmax.f32 %v2819, 0.0
        %v2852 = vmax.f32 %v2820, 0.0
        %v2853 = vmax.f32 %v2821, 0.0
        %v2854 = vmax.f32 %v2822, 0.0
        %v2855 = vmax.f32 %v2823, 0.0
        %v2856 = vmax.f32 %v2824, 0.0
        %v2857 = vmax.f32 %v2825, 0.0
        %v2858 = vmax.f32 %v2826, 0.0
        %v2859 = vmax.f32 %v2827, 0.0
        %v2860 = vmax.f32 %v2828, 0.0
        %v2861 = vmax.f32 %v2829, 0.0
        %v2862 = vmax.f32 %v2830, 0.0
        %v2863 = vmax.f32 %v2831, 0.0
        %v2864 = vmax.f32 %v2832, 0.0
        %v2865 = vmax.f32 %v2833, 0.0
        %v2866 = vmax.f32 %v2834, 0.0
        %v2867 = vmax.f32 %v2835, 0.0
        %v2868 = vmax.f32 %v2836, 0.0
        %v2869 = vmax.f32 %v2837, 0.0
        %v2870 = vmax.f32 %v2838, 0.0
        %v2871 = vmax.f32 %v2839, 0.0
        %v2872 = vmax.f32 %v2840, 0.0
        %v2873 = vpack.c.bf16 %v2843, %v2841
        %v2874 = vpack.c.bf16 %v2844, %v2842
        %v2875 = vpack.c.bf16 %v2847, %v2845
        %v2876 = vpack.c.bf16 %v2848, %v2846
        %v2877 = vpack.c.bf16 %v2851, %v2849
        %v2878 = vpack.c.bf16 %v2852, %v2850
        %v2879 = vpack.c.bf16 %v2855, %v2853
        %v2880 = vpack.c.bf16 %v2856, %v2854
        %v2881 = vpack.c.bf16 %v2859, %v2857
        %v2882 = vpack.c.bf16 %v2860, %v2858
        %v2883 = vpack.c.bf16 %v2863, %v2861
        %v2884 = vpack.c.bf16 %v2864, %v2862
        %v2885 = vpack.c.bf16 %v2867, %v2865
        %v2886 = vpack.c.bf16 %v2868, %v2866
        %v2887 = vpack.c.bf16 %v2871, %v2869
        %v2888 = vpack.c.bf16 %v2872, %v2870
        %v2889 = vld [vmem:[%s9] sm:$0x3]
        %v2891 = vlaneseq
        %v2892 = vshrl.u32 %v2891, 7
        %v2893 = vsub.s32 0, %v2892
        %v2894 = vrot.slane %v2889, %v2893
        %v2895 = vlaneseq
        %v2896 = vshrl.u32 %v2895, 7
        %v2897 = vsub.s32 1, %v2896
        %v2898 = vrot.slane %v2889, %v2897
        %v2901 = vmul.f32 %v2894, %v2841
        %v2902 = vmul.f32 %v2898, %v2842
        %v2903 = vmul.f32 %v2894, %v2843
        %v2904 = vmul.f32 %v2898, %v2844
        %v2905 = vmul.f32 %v2894, %v2845
        %v2906 = vmul.f32 %v2898, %v2846
        %v2907 = vmul.f32 %v2894, %v2847
        %v2908 = vmul.f32 %v2898, %v2848
        %v2909 = vmul.f32 %v2894, %v2849
        %v2910 = vmul.f32 %v2898, %v2850
        %v2911 = vmul.f32 %v2894, %v2851
        %v2912 = vmul.f32 %v2898, %v2852
        %v2913 = vmul.f32 %v2894, %v2853
        %v2914 = vmul.f32 %v2898, %v2854
        %v2915 = vmul.f32 %v2894, %v2855
        %v2916 = vmul.f32 %v2898, %v2856
        %v2917 = vmul.f32 %v2894, %v2857
        %v2918 = vmul.f32 %v2898, %v2858
        %v2919 = vmul.f32 %v2894, %v2859
        %v2920 = vmul.f32 %v2898, %v2860
        %v2921 = vmul.f32 %v2894, %v2861
        %v2922 = vmul.f32 %v2898, %v2862
        %v2923 = vmul.f32 %v2894, %v2863
        %v2924 = vmul.f32 %v2898, %v2864
        %v2925 = vmul.f32 %v2894, %v2865
        %v2926 = vmul.f32 %v2898, %v2866
        %v2927 = vmul.f32 %v2894, %v2867
        %v2928 = vmul.f32 %v2898, %v2868
        %v2929 = vmul.f32 %v2894, %v2869
        %v2930 = vmul.f32 %v2898, %v2870
        %v2931 = vmul.f32 %v2894, %v2871
        %v2932 = vmul.f32 %v2898, %v2872
        %2933 = vmatprep.subr.bf16.mxu0 %v2874
        %2934 = vmatpush1.bf16.msra.mxu0 %v2873
        %2935 = vmatprep.subr.bf16.mxu0 %v2876
        %2936 = vmatpush1.bf16.msra.mxu0 %v2875
        %2937 = vmatprep.subr.bf16.mxu0 %v2878
        %2938 = vmatpush1.bf16.msra.mxu0 %v2877
        %2939 = vmatprep.subr.bf16.mxu0 %v2880
        %2940 = vmatpush1.bf16.msra.mxu0 %v2879
        %2941 = vmatprep.subr.bf16.mxu0 %v2882
        %2942 = vmatpush1.bf16.msra.mxu0 %v2881
        %2943 = vmatprep.subr.bf16.mxu0 %v2884
        %2944 = vmatpush1.bf16.msra.mxu0 %v2883
        %2945 = vmatprep.subr.bf16.mxu0 %v2886
        %2946 = vmatpush1.bf16.msra.mxu0 %v2885
        %2947 = vmatprep.subr.bf16.mxu0 %v2888
        %2948 = vmatpush1.bf16.msra.mxu0 %v2887
        %2949 = vmatprep.subr.bf16.mxu0 0
        %2950 = vmatpush1.bf16.msra.mxu0 0
        %2951 = vmatprep.subr.bf16.mxu0 0
        %2952 = vmatpush1.bf16.msra.mxu0 0
        %2953 = vmatprep.subr.bf16.mxu0 0
        %2954 = vmatpush1.bf16.msra.mxu0 0
        %2955 = vmatprep.subr.bf16.mxu0 0
        %2956 = vmatpush1.bf16.msra.mxu0 0
        %2957 = vmatprep.subr.bf16.mxu0 0
        %2958 = vmatpush1.bf16.msra.mxu0 0
        %2959 = vmatprep.subr.bf16.mxu0 0
        %2960 = vmatpush1.bf16.msra.mxu0 0
        %2961 = vmatprep.subr.bf16.mxu0 0
        %2962 = vmatpush1.bf16.msra.mxu0 0
        %2963 = vmatprep.subr.bf16.mxu0 0
        %2964 = vmatpush1.bf16.msra.mxu0 0
        %2965 = vmatprep.mubr.bf16.mxu0 0
        %2966 = vmatmul.mubr.bf16.gmra.mrb[0].mxu0 %v1337
        %v2967 = vpop.f32.mrb[0].mxu0
        %v2968 = vadd.f32 %v2901, %v2967
        %v2969 = vpop.f32.mrb[0].mxu0
        %v2970 = vadd.f32 %v2902, %v2969
        %v2971 = vpop.f32.mrb[0].mxu0
        %v2972 = vadd.f32 %v2903, %v2971
        %v2973 = vpop.f32.mrb[0].mxu0
        %v2974 = vadd.f32 %v2904, %v2973
        %2975 = vmatprep.mubr.bf16.mxu0 0
        %2976 = vmatmul.mubr.bf16.gmra.mrb[0].mxu0 %v1338
        %v2977 = vpop.f32.mrb[0].mxu0
        %v2978 = vadd.f32 %v2905, %v2977
        %v2979 = vpop.f32.mrb[0].mxu0
        %v2980 = vadd.f32 %v2906, %v2979
        %v2981 = vpop.f32.mrb[0].mxu0
        %v2982 = vadd.f32 %v2907, %v2981
        %v2983 = vpop.f32.mrb[0].mxu0
        %v2984 = vadd.f32 %v2908, %v2983
        %2985 = vmatprep.mubr.bf16.mxu0 0
        %2986 = vmatmul.mubr.bf16.gmra.mrb[0].mxu0 %v1339
        %v2987 = vpop.f32.mrb[0].mxu0
        %v2988 = vadd.f32 %v2909, %v2987
        %v2989 = vpop.f32.mrb[0].mxu0
        %v2990 = vadd.f32 %v2910, %v2989
        %v2991 = vpop.f32.mrb[0].mxu0
        %v2992 = vadd.f32 %v2911, %v2991
        %v2993 = vpop.f32.mrb[0].mxu0
        %v2994 = vadd.f32 %v2912, %v2993
        %2995 = vmatprep.mubr.bf16.mxu0 0
        %2996 = vmatmul.mubr.bf16.gmra.mrb[0].mxu0 %v1340
        %v2997 = vpop.f32.mrb[0].mxu0
        %v2998 = vadd.f32 %v2913, %v2997
        %v2999 = vpop.f32.mrb[0].mxu0
        %v3000 = vadd.f32 %v2914, %v2999
        %v3001 = vpop.f32.mrb[0].mxu0
        %v3002 = vadd.f32 %v2915, %v3001
        %v3003 = vpop.f32.mrb[0].mxu0
        %v3004 = vadd.f32 %v2916, %v3003
        %3005 = vmatprep.mubr.bf16.mxu0 0
        %3006 = vmatmul.mubr.bf16.gmra.mrb[0].mxu0 %v1341
        %v3007 = vpop.f32.mrb[0].mxu0
        %v3008 = vadd.f32 %v2917, %v3007
        %v3009 = vpop.f32.mrb[0].mxu0
        %v3010 = vadd.f32 %v2918, %v3009
        %v3011 = vpop.f32.mrb[0].mxu0
        %v3012 = vadd.f32 %v2919, %v3011
        %v3013 = vpop.f32.mrb[0].mxu0
        %v3014 = vadd.f32 %v2920, %v3013
        %3015 = vmatprep.mubr.bf16.mxu0 0
        %3016 = vmatmul.mubr.bf16.gmra.mrb[0].mxu0 %v1342
        %v3017 = vpop.f32.mrb[0].mxu0
        %v3018 = vadd.f32 %v2921, %v3017
        %v3019 = vpop.f32.mrb[0].mxu0
        %v3020 = vadd.f32 %v2922, %v3019
        %v3021 = vpop.f32.mrb[0].mxu0
        %v3022 = vadd.f32 %v2923, %v3021
        %v3023 = vpop.f32.mrb[0].mxu0
        %v3024 = vadd.f32 %v2924, %v3023
        %3025 = vmatprep.mubr.bf16.mxu0 0
        %3026 = vmatmul.mubr.bf16.gmra.mrb[0].mxu0 %v1343
        %v3027 = vpop.f32.mrb[0].mxu0
        %v3028 = vadd.f32 %v2925, %v3027
        %v3029 = vpop.f32.mrb[0].mxu0
        %v3030 = vadd.f32 %v2926, %v3029
        %v3031 = vpop.f32.mrb[0].mxu0
        %v3032 = vadd.f32 %v2927, %v3031
        %v3033 = vpop.f32.mrb[0].mxu0
        %v3034 = vadd.f32 %v2928, %v3033
        %3035 = vmatprep.mubr.bf16.mxu0 0
        %3036 = vmatmul.mubr.bf16.gmra.mrb[0].mxu0 %v1344
        %v3037 = vpop.f32.mrb[0].mxu0
        %v3038 = vadd.f32 %v2929, %v3037
        %v3039 = vpop.f32.mrb[0].mxu0
        %v3040 = vadd.f32 %v2930, %v3039
        %v3041 = vpop.f32.mrb[0].mxu0
        %v3042 = vadd.f32 %v2931, %v3041
        %v3043 = vpop.f32.mrb[0].mxu0
        %v3044 = vadd.f32 %v2932, %v3043
        %3045 = vdwg.mxu0
        %v3046 = vpack.c.bf16 %v2972, %v2968
        %v3047 = vpack.c.bf16 %v2974, %v2970
        %v3048 = vpack.c.bf16 %v2982, %v2978
        %v3049 = vpack.c.bf16 %v2984, %v2980
        %v3050 = vpack.c.bf16 %v2992, %v2988
        %v3051 = vpack.c.bf16 %v2994, %v2990
        %v3052 = vpack.c.bf16 %v3002, %v2998
        %v3053 = vpack.c.bf16 %v3004, %v3000
        %v3054 = vpack.c.bf16 %v3012, %v3008
        %v3055 = vpack.c.bf16 %v3014, %v3010
        %v3056 = vpack.c.bf16 %v3022, %v3018
        %v3057 = vpack.c.bf16 %v3024, %v3020
        %v3058 = vpack.c.bf16 %v3032, %v3028
        %v3059 = vpack.c.bf16 %v3034, %v3030
        %v3060 = vpack.c.bf16 %v3042, %v3038
        %v3061 = vpack.c.bf16 %v3044, %v3040
        %v3062 = vld [vmem:[%s33] sm:$0xff]
        %v3063 = vld [vmem:[%s33 + $0x8] sm:$0xff]
        %v3064 = vld [vmem:[%s33 + $0x10] sm:$0xff]
        %v3065 = vld [vmem:[%s33 + $0x18] sm:$0xff]
        %v3066 = vld [vmem:[%s33 + $0x20] sm:$0xff]
        %v3067 = vld [vmem:[%s33 + $0x28] sm:$0xff]
        %v3068 = vld [vmem:[%s33 + $0x30] sm:$0xff]
        %v3069 = vld [vmem:[%s33 + $0x38] sm:$0xff]
        %v3070 = vld [vmem:[%s33 + $0x40] sm:$0xff]
        %v3071 = vld [vmem:[%s33 + $0x48] sm:$0xff]
        %v3072 = vld [vmem:[%s33 + $0x50] sm:$0xff]
        %v3073 = vld [vmem:[%s33 + $0x58] sm:$0xff]
        %v3074 = vld [vmem:[%s33 + $0x60] sm:$0xff]
        %v3075 = vld [vmem:[%s33 + $0x68] sm:$0xff]
        %v3076 = vld [vmem:[%s33 + $0x70] sm:$0xff]
        %v3077 = vld [vmem:[%s33 + $0x78] sm:$0xff]
        %v3078 = vld [vmem:[%s33 + $0x80] sm:$0xff]
        %v3079 = vld [vmem:[%s33 + $0x88] sm:$0xff]
        %v3080 = vld [vmem:[%s33 + $0x90] sm:$0xff]
        %v3081 = vld [vmem:[%s33 + $0x98] sm:$0xff]
        %v3082 = vld [vmem:[%s33 + $0xa0] sm:$0xff]
        %v3083 = vld [vmem:[%s33 + $0xa8] sm:$0xff]
        %v3084 = vld [vmem:[%s33 + $0xb0] sm:$0xff]
        %v3085 = vld [vmem:[%s33 + $0xb8] sm:$0xff]
        %v3086 = vld [vmem:[%s33 + $0xc0] sm:$0xff]
        %v3087 = vld [vmem:[%s33 + $0xc8] sm:$0xff]
        %v3088 = vld [vmem:[%s33 + $0xd0] sm:$0xff]
        %v3089 = vld [vmem:[%s33 + $0xd8] sm:$0xff]
        %v3090 = vld [vmem:[%s33 + $0xe0] sm:$0xff]
        %v3091 = vld [vmem:[%s33 + $0xe8] sm:$0xff]
        %v3092 = vld [vmem:[%s33 + $0xf0] sm:$0xff]
        %v3093 = vld [vmem:[%s33 + $0xf8] sm:$0xff]
        %v3094 = vld [vmem:[%s35] sm:$0x3]
        %v3096 = vlaneseq
        %v3097 = vshrl.u32 %v3096, 7
        %v3098 = vsub.s32 0, %v3097
        %v3099 = vrot.slane %v3094, %v3098
        %v3100 = vlaneseq
        %v3101 = vshrl.u32 %v3100, 7
        %v3102 = vsub.s32 1, %v3101
        %v3103 = vrot.slane %v3094, %v3102
        %v3138 = vunpack.c.l.b16 %v3062
        %v3139 = vunpack.c.h.b16 %v3062
        %v3140 = vunpack.c.l.b16 %v3063
        %v3141 = vunpack.c.h.b16 %v3063
        %v3142 = vunpack.c.l.b16 %v3064
        %v3143 = vunpack.c.h.b16 %v3064
        %v3144 = vunpack.c.l.b16 %v3065
        %v3145 = vunpack.c.h.b16 %v3065
        %v3146 = vunpack.c.l.b16 %v3066
        %v3147 = vunpack.c.h.b16 %v3066
        %v3148 = vunpack.c.l.b16 %v3067
        %v3149 = vunpack.c.h.b16 %v3067
        %v3150 = vunpack.c.l.b16 %v3068
        %v3151 = vunpack.c.h.b16 %v3068
        %v3152 = vunpack.c.l.b16 %v3069
        %v3153 = vunpack.c.h.b16 %v3069
        %v3154 = vunpack.c.l.b16 %v3070
        %v3155 = vunpack.c.h.b16 %v3070
        %v3156 = vunpack.c.l.b16 %v3071
        %v3157 = vunpack.c.h.b16 %v3071
        %v3158 = vunpack.c.l.b16 %v3072
        %v3159 = vunpack.c.h.b16 %v3072
        %v3160 = vunpack.c.l.b16 %v3073
        %v3161 = vunpack.c.h.b16 %v3073
        %v3162 = vunpack.c.l.b16 %v3074
        %v3163 = vunpack.c.h.b16 %v3074
        %v3164 = vunpack.c.l.b16 %v3075
        %v3165 = vunpack.c.h.b16 %v3075
        %v3166 = vunpack.c.l.b16 %v3076
        %v3167 = vunpack.c.h.b16 %v3076
        %v3168 = vunpack.c.l.b16 %v3077
        %v3169 = vunpack.c.h.b16 %v3077
        %v3170 = vunpack.c.l.b16 %v3078
        %v3171 = vunpack.c.h.b16 %v3078
        %v3172 = vunpack.c.l.b16 %v3079
        %v3173 = vunpack.c.h.b16 %v3079
        %v3174 = vunpack.c.l.b16 %v3080
        %v3175 = vunpack.c.h.b16 %v3080
        %v3176 = vunpack.c.l.b16 %v3081
        %v3177 = vunpack.c.h.b16 %v3081
        %v3178 = vunpack.c.l.b16 %v3082
        %v3179 = vunpack.c.h.b16 %v3082
        %v3180 = vunpack.c.l.b16 %v3083
        %v3181 = vunpack.c.h.b16 %v3083
        %v3182 = vunpack.c.l.b16 %v3084
        %v3183 = vunpack.c.h.b16 %v3084
        %v3184 = vunpack.c.l.b16 %v3085
        %v3185 = vunpack.c.h.b16 %v3085
        %v3186 = vunpack.c.l.b16 %v3086
        %v3187 = vunpack.c.h.b16 %v3086
        %v3188 = vunpack.c.l.b16 %v3087
        %v3189 = vunpack.c.h.b16 %v3087
        %v3190 = vunpack.c.l.b16 %v3088
        %v3191 = vunpack.c.h.b16 %v3088
        %v3192 = vunpack.c.l.b16 %v3089
        %v3193 = vunpack.c.h.b16 %v3089
        %v3194 = vunpack.c.l.b16 %v3090
        %v3195 = vunpack.c.h.b16 %v3090
        %v3196 = vunpack.c.l.b16 %v3091
        %v3197 = vunpack.c.h.b16 %v3091
        %v3198 = vunpack.c.l.b16 %v3092
        %v3199 = vunpack.c.h.b16 %v3092
        %v3200 = vunpack.c.l.b16 %v3093
        %v3201 = vunpack.c.h.b16 %v3093
        %v3202 = vpack.c.b16 %v3140, %v3138
        %v3203 = vpack.c.b16 %v3141, %v3139
        %v3204 = vpack.c.b16 %v3144, %v3142
        %v3205 = vpack.c.b16 %v3145, %v3143
        %v3206 = vpack.c.b16 %v3148, %v3146
        %v3207 = vpack.c.b16 %v3149, %v3147
        %v3208 = vpack.c.b16 %v3152, %v3150
        %v3209 = vpack.c.b16 %v3153, %v3151
        %v3210 = vpack.c.b16 %v3156, %v3154
        %v3211 = vpack.c.b16 %v3157, %v3155
        %v3212 = vpack.c.b16 %v3160, %v3158
        %v3213 = vpack.c.b16 %v3161, %v3159
        %v3214 = vpack.c.b16 %v3164, %v3162
        %v3215 = vpack.c.b16 %v3165, %v3163
        %v3216 = vpack.c.b16 %v3168, %v3166
        %v3217 = vpack.c.b16 %v3169, %v3167
        %v3218 = vpack.c.b16 %v3172, %v3170
        %v3219 = vpack.c.b16 %v3173, %v3171
        %v3220 = vpack.c.b16 %v3176, %v3174
        %v3221 = vpack.c.b16 %v3177, %v3175
        %v3222 = vpack.c.b16 %v3180, %v3178
        %v3223 = vpack.c.b16 %v3181, %v3179
        %v3224 = vpack.c.b16 %v3184, %v3182
        %v3225 = vpack.c.b16 %v3185, %v3183
        %v3226 = vpack.c.b16 %v3188, %v3186
        %v3227 = vpack.c.b16 %v3189, %v3187
        %v3228 = vpack.c.b16 %v3192, %v3190
        %v3229 = vpack.c.b16 %v3193, %v3191
        %v3230 = vpack.c.b16 %v3196, %v3194
        %v3231 = vpack.c.b16 %v3197, %v3195
        %v3232 = vpack.c.b16 %v3200, %v3198
        %v3233 = vpack.c.b16 %v3201, %v3199
        %3266 = vmatprep.subr.bf16.mxu0 %v3203
        %3267 = vmatpush1.bf16.msra.mxu0 %v3202
        %3268 = vmatprep.subr.bf16.mxu0 %v3205
        %3269 = vmatpush1.bf16.msra.mxu0 %v3204
        %3270 = vmatprep.subr.bf16.mxu0 %v3207
        %3271 = vmatpush1.bf16.msra.mxu0 %v3206
        %3272 = vmatprep.subr.bf16.mxu0 %v3209
        %3273 = vmatpush1.bf16.msra.mxu0 %v3208
        %3274 = vmatprep.subr.bf16.mxu0 %v3211
        %3275 = vmatpush1.bf16.msra.mxu0 %v3210
        %3276 = vmatprep.subr.bf16.mxu0 %v3213
        %3277 = vmatpush1.bf16.msra.mxu0 %v3212
        %3278 = vmatprep.subr.bf16.mxu0 %v3215
        %3279 = vmatpush1.bf16.msra.mxu0 %v3214
        %3280 = vmatprep.subr.bf16.mxu0 %v3217
        %3281 = vmatpush1.bf16.msra.mxu0 %v3216
        %3282 = vmatprep.subr.bf16.mxu0 %v3219
        %3283 = vmatpush1.bf16.msra.mxu0 %v3218
        %3284 = vmatprep.subr.bf16.mxu0 %v3221
        %3285 = vmatpush1.bf16.msra.mxu0 %v3220
        %3286 = vmatprep.subr.bf16.mxu0 %v3223
        %3287 = vmatpush1.bf16.msra.mxu0 %v3222
        %3288 = vmatprep.subr.bf16.mxu0 %v3225
        %3289 = vmatpush1.bf16.msra.mxu0 %v3224
        %3290 = vmatprep.subr.bf16.mxu0 %v3227
        %3291 = vmatpush1.bf16.msra.mxu0 %v3226
        %3292 = vmatprep.subr.bf16.mxu0 %v3229
        %3293 = vmatpush1.bf16.msra.mxu0 %v3228
        %3294 = vmatprep.subr.bf16.mxu0 %v3231
        %3295 = vmatpush1.bf16.msra.mxu0 %v3230
        %3296 = vmatprep.subr.bf16.mxu0 %v3233
        %3297 = vmatpush1.bf16.msra.mxu0 %v3232
        %3298 = vmatprep.mubr.bf16.mxu0 %v3047
        %3299 = vmatmul.mubr.bf16.gmra.mrb[0].mxu0 %v3046
        %v3300 = vpop.f32.mrb[0].mxu0
        %v3301 = vadd.f32 %v3099, %v3300
        %v3302 = vpop.f32.mrb[0].mxu0
        %v3303 = vadd.f32 %v3103, %v3302
        %v3304 = vpop.f32.mrb[0].mxu0
        %v3305 = vadd.f32 %v3099, %v3304
        %v3306 = vpop.f32.mrb[0].mxu0
        %v3307 = vadd.f32 %v3103, %v3306
        %3308 = vmatprep.mubr.bf16.mxu0 %v3049
        %3309 = vmatmul.mubr.bf16.gmra.mrb[0].mxu0 %v3048
        %v3310 = vpop.f32.mrb[0].mxu0
        %v3311 = vadd.f32 %v3099, %v3310
        %v3312 = vpop.f32.mrb[0].mxu0
        %v3313 = vadd.f32 %v3103, %v3312
        %v3314 = vpop.f32.mrb[0].mxu0
        %v3315 = vadd.f32 %v3099, %v3314
        %v3316 = vpop.f32.mrb[0].mxu0
        %v3317 = vadd.f32 %v3103, %v3316
        %3318 = vmatprep.mubr.bf16.mxu0 %v3051
        %3319 = vmatmul.mubr.bf16.gmra.mrb[0].mxu0 %v3050
        %v3320 = vpop.f32.mrb[0].mxu0
        %v3321 = vadd.f32 %v3099, %v3320
        %v3322 = vpop.f32.mrb[0].mxu0
        %v3323 = vadd.f32 %v3103, %v3322
        %v3324 = vpop.f32.mrb[0].mxu0
        %v3325 = vadd.f32 %v3099, %v3324
        %v3326 = vpop.f32.mrb[0].mxu0
        %v3327 = vadd.f32 %v3103, %v3326
        %3328 = vmatprep.mubr.bf16.mxu0 %v3053
        %3329 = vmatmul.mubr.bf16.gmra.mrb[0].mxu0 %v3052
        %v3330 = vpop.f32.mrb[0].mxu0
        %v3331 = vadd.f32 %v3099, %v3330
        %v3332 = vpop.f32.mrb[0].mxu0
        %v3333 = vadd.f32 %v3103, %v3332
        %v3334 = vpop.f32.mrb[0].mxu0
        %v3335 = vadd.f32 %v3099, %v3334
        %v3336 = vpop.f32.mrb[0].mxu0
        %v3337 = vadd.f32 %v3103, %v3336
        %3338 = vmatprep.mubr.bf16.mxu0 %v3055
        %3339 = vmatmul.mubr.bf16.gmra.mrb[0].mxu0 %v3054
        %v3340 = vpop.f32.mrb[0].mxu0
        %v3341 = vadd.f32 %v3099, %v3340
        %v3342 = vpop.f32.mrb[0].mxu0
        %v3343 = vadd.f32 %v3103, %v3342
        %v3344 = vpop.f32.mrb[0].mxu0
        %v3345 = vadd.f32 %v3099, %v3344
        %v3346 = vpop.f32.mrb[0].mxu0
        %v3347 = vadd.f32 %v3103, %v3346
        %3348 = vmatprep.mubr.bf16.mxu0 %v3057
        %3349 = vmatmul.mubr.bf16.gmra.mrb[0].mxu0 %v3056
        %v3350 = vpop.f32.mrb[0].mxu0
        %v3351 = vadd.f32 %v3099, %v3350
        %v3352 = vpop.f32.mrb[0].mxu0
        %v3353 = vadd.f32 %v3103, %v3352
        %v3354 = vpop.f32.mrb[0].mxu0
        %v3355 = vadd.f32 %v3099, %v3354
        %v3356 = vpop.f32.mrb[0].mxu0
        %v3357 = vadd.f32 %v3103, %v3356
        %3358 = vmatprep.mubr.bf16.mxu0 %v3059
        %3359 = vmatmul.mubr.bf16.gmra.mrb[0].mxu0 %v3058
        %v3360 = vpop.f32.mrb[0].mxu0
        %v3361 = vadd.f32 %v3099, %v3360
        %v3362 = vpop.f32.mrb[0].mxu0
        %v3363 = vadd.f32 %v3103, %v3362
        %v3364 = vpop.f32.mrb[0].mxu0
        %v3365 = vadd.f32 %v3099, %v3364
        %v3366 = vpop.f32.mrb[0].mxu0
        %v3367 = vadd.f32 %v3103, %v3366
        %3368 = vmatprep.mubr.bf16.mxu0 %v3061
        %3369 = vmatmul.mubr.bf16.gmra.mrb[0].mxu0 %v3060
        %v3370 = vpop.f32.mrb[0].mxu0
        %v3371 = vadd.f32 %v3099, %v3370
        %v3372 = vpop.f32.mrb[0].mxu0
        %v3373 = vadd.f32 %v3103, %v3372
        %v3374 = vpop.f32.mrb[0].mxu0
        %v3375 = vadd.f32 %v3099, %v3374
        %v3376 = vpop.f32.mrb[0].mxu0
        %v3377 = vadd.f32 %v3103, %v3376
        %3378 = vdwg.mxu0
        %v3379 = vmax.f32 %v3301, 0.0
        %v3380 = vmax.f32 %v3303, 0.0
        %v3381 = vmax.f32 %v3305, 0.0
        %v3382 = vmax.f32 %v3307, 0.0
        %v3383 = vmax.f32 %v3311, 0.0
        %v3384 = vmax.f32 %v3313, 0.0
        %v3385 = vmax.f32 %v3315, 0.0
        %v3386 = vmax.f32 %v3317, 0.0
        %v3387 = vmax.f32 %v3321, 0.0
        %v3388 = vmax.f32 %v3323, 0.0
        %v3389 = vmax.f32 %v3325, 0.0
        %v3390 = vmax.f32 %v3327, 0.0
        %v3391 = vmax.f32 %v3331, 0.0
        %v3392 = vmax.f32 %v3333, 0.0
        %v3393 = vmax.f32 %v3335, 0.0
        %v3394 = vmax.f32 %v3337, 0.0
        %v3395 = vmax.f32 %v3341, 0.0
        %v3396 = vmax.f32 %v3343, 0.0
        %v3397 = vmax.f32 %v3345, 0.0
        %v3398 = vmax.f32 %v3347, 0.0
        %v3399 = vmax.f32 %v3351, 0.0
        %v3400 = vmax.f32 %v3353, 0.0
        %v3401 = vmax.f32 %v3355, 0.0
        %v3402 = vmax.f32 %v3357, 0.0
        %v3403 = vmax.f32 %v3361, 0.0
        %v3404 = vmax.f32 %v3363, 0.0
        %v3405 = vmax.f32 %v3365, 0.0
        %v3406 = vmax.f32 %v3367, 0.0
        %v3407 = vmax.f32 %v3371, 0.0
        %v3408 = vmax.f32 %v3373, 0.0
        %v3409 = vmax.f32 %v3375, 0.0
        %v3410 = vmax.f32 %v3377, 0.0
        %v3411 = vpack.c.bf16 %v3381, %v3379
        %v3412 = vpack.c.bf16 %v3382, %v3380
        %v3413 = vpack.c.bf16 %v3385, %v3383
        %v3414 = vpack.c.bf16 %v3386, %v3384
        %v3415 = vpack.c.bf16 %v3389, %v3387
        %v3416 = vpack.c.bf16 %v3390, %v3388
        %v3417 = vpack.c.bf16 %v3393, %v3391
        %v3418 = vpack.c.bf16 %v3394, %v3392
        %v3419 = vpack.c.bf16 %v3397, %v3395
        %v3420 = vpack.c.bf16 %v3398, %v3396
        %v3421 = vpack.c.bf16 %v3401, %v3399
        %v3422 = vpack.c.bf16 %v3402, %v3400
        %v3423 = vpack.c.bf16 %v3405, %v3403
        %v3424 = vpack.c.bf16 %v3406, %v3404
        %v3425 = vpack.c.bf16 %v3409, %v3407
        %v3426 = vpack.c.bf16 %v3410, %v3408
        %v3427 = vld [vmem:[%s37] sm:$0xff]
        %v3428 = vld [vmem:[%s37 + $0x8] sm:$0xff]
        %v3429 = vld [vmem:[%s37 + $0x10] sm:$0xff]
        %v3430 = vld [vmem:[%s37 + $0x18] sm:$0xff]
        %v3431 = vld [vmem:[%s37 + $0x20] sm:$0xff]
        %v3432 = vld [vmem:[%s37 + $0x28] sm:$0xff]
        %v3433 = vld [vmem:[%s37 + $0x30] sm:$0xff]
        %v3434 = vld [vmem:[%s37 + $0x38] sm:$0xff]
        %v3435 = vld [vmem:[%s37 + $0x40] sm:$0xff]
        %v3436 = vld [vmem:[%s37 + $0x48] sm:$0xff]
        %v3437 = vld [vmem:[%s37 + $0x50] sm:$0xff]
        %v3438 = vld [vmem:[%s37 + $0x58] sm:$0xff]
        %v3439 = vld [vmem:[%s37 + $0x60] sm:$0xff]
        %v3440 = vld [vmem:[%s37 + $0x68] sm:$0xff]
        %v3441 = vld [vmem:[%s37 + $0x70] sm:$0xff]
        %v3442 = vld [vmem:[%s37 + $0x78] sm:$0xff]
        %v3443 = vld [vmem:[%s37 + $0x80] sm:$0xff]
        %v3444 = vld [vmem:[%s37 + $0x88] sm:$0xff]
        %v3445 = vld [vmem:[%s37 + $0x90] sm:$0xff]
        %v3446 = vld [vmem:[%s37 + $0x98] sm:$0xff]
        %v3447 = vld [vmem:[%s37 + $0xa0] sm:$0xff]
        %v3448 = vld [vmem:[%s37 + $0xa8] sm:$0xff]
        %v3449 = vld [vmem:[%s37 + $0xb0] sm:$0xff]
        %v3450 = vld [vmem:[%s37 + $0xb8] sm:$0xff]
        %v3451 = vld [vmem:[%s37 + $0xc0] sm:$0xff]
        %v3452 = vld [vmem:[%s37 + $0xc8] sm:$0xff]
        %v3453 = vld [vmem:[%s37 + $0xd0] sm:$0xff]
        %v3454 = vld [vmem:[%s37 + $0xd8] sm:$0xff]
        %v3455 = vld [vmem:[%s37 + $0xe0] sm:$0xff]
        %v3456 = vld [vmem:[%s37 + $0xe8] sm:$0xff]
        %v3457 = vld [vmem:[%s37 + $0xf0] sm:$0xff]
        %v3458 = vld [vmem:[%s37 + $0xf8] sm:$0xff]
        %v3459 = vld [vmem:[%s39] sm:$0x3]
        %v3461 = vlaneseq
        %v3462 = vshrl.u32 %v3461, 7
        %v3463 = vsub.s32 0, %v3462
        %v3464 = vrot.slane %v3459, %v3463
        %v3465 = vlaneseq
        %v3466 = vshrl.u32 %v3465, 7
        %v3467 = vsub.s32 1, %v3466
        %v3468 = vrot.slane %v3459, %v3467
        %v3503 = vunpack.c.l.b16 %v3427
        %v3504 = vunpack.c.h.b16 %v3427
        %v3505 = vunpack.c.l.b16 %v3428
        %v3506 = vunpack.c.h.b16 %v3428
        %v3507 = vunpack.c.l.b16 %v3429
        %v3508 = vunpack.c.h.b16 %v3429
        %v3509 = vunpack.c.l.b16 %v3430
        %v3510 = vunpack.c.h.b16 %v3430
        %v3511 = vunpack.c.l.b16 %v3431
        %v3512 = vunpack.c.h.b16 %v3431
        %v3513 = vunpack.c.l.b16 %v3432
        %v3514 = vunpack.c.h.b16 %v3432
        %v3515 = vunpack.c.l.b16 %v3433
        %v3516 = vunpack.c.h.b16 %v3433
        %v3517 = vunpack.c.l.b16 %v3434
        %v3518 = vunpack.c.h.b16 %v3434
        %v3519 = vunpack.c.l.b16 %v3435
        %v3520 = vunpack.c.h.b16 %v3435
        %v3521 = vunpack.c.l.b16 %v3436
        %v3522 = vunpack.c.h.b16 %v3436
        %v3523 = vunpack.c.l.b16 %v3437
        %v3524 = vunpack.c.h.b16 %v3437
        %v3525 = vunpack.c.l.b16 %v3438
        %v3526 = vunpack.c.h.b16 %v3438
        %v3527 = vunpack.c.l.b16 %v3439
        %v3528 = vunpack.c.h.b16 %v3439
        %v3529 = vunpack.c.l.b16 %v3440
        %v3530 = vunpack.c.h.b16 %v3440
        %v3531 = vunpack.c.l.b16 %v3441
        %v3532 = vunpack.c.h.b16 %v3441
        %v3533 = vunpack.c.l.b16 %v3442
        %v3534 = vunpack.c.h.b16 %v3442
        %v3535 = vunpack.c.l.b16 %v3443
        %v3536 = vunpack.c.h.b16 %v3443
        %v3537 = vunpack.c.l.b16 %v3444
        %v3538 = vunpack.c.h.b16 %v3444
        %v3539 = vunpack.c.l.b16 %v3445
        %v3540 = vunpack.c.h.b16 %v3445
        %v3541 = vunpack.c.l.b16 %v3446
        %v3542 = vunpack.c.h.b16 %v3446
        %v3543 = vunpack.c.l.b16 %v3447
        %v3544 = vunpack.c.h.b16 %v3447
        %v3545 = vunpack.c.l.b16 %v3448
        %v3546 = vunpack.c.h.b16 %v3448
        %v3547 = vunpack.c.l.b16 %v3449
        %v3548 = vunpack.c.h.b16 %v3449
        %v3549 = vunpack.c.l.b16 %v3450
        %v3550 = vunpack.c.h.b16 %v3450
        %v3551 = vunpack.c.l.b16 %v3451
        %v3552 = vunpack.c.h.b16 %v3451
        %v3553 = vunpack.c.l.b16 %v3452
        %v3554 = vunpack.c.h.b16 %v3452
        %v3555 = vunpack.c.l.b16 %v3453
        %v3556 = vunpack.c.h.b16 %v3453
        %v3557 = vunpack.c.l.b16 %v3454
        %v3558 = vunpack.c.h.b16 %v3454
        %v3559 = vunpack.c.l.b16 %v3455
        %v3560 = vunpack.c.h.b16 %v3455
        %v3561 = vunpack.c.l.b16 %v3456
        %v3562 = vunpack.c.h.b16 %v3456
        %v3563 = vunpack.c.l.b16 %v3457
        %v3564 = vunpack.c.h.b16 %v3457
        %v3565 = vunpack.c.l.b16 %v3458
        %v3566 = vunpack.c.h.b16 %v3458
        %v3567 = vpack.c.b16 %v3505, %v3503
        %v3568 = vpack.c.b16 %v3506, %v3504
        %v3569 = vpack.c.b16 %v3509, %v3507
        %v3570 = vpack.c.b16 %v3510, %v3508
        %v3571 = vpack.c.b16 %v3513, %v3511
        %v3572 = vpack.c.b16 %v3514, %v3512
        %v3573 = vpack.c.b16 %v3517, %v3515
        %v3574 = vpack.c.b16 %v3518, %v3516
        %v3575 = vpack.c.b16 %v3521, %v3519
        %v3576 = vpack.c.b16 %v3522, %v3520
        %v3577 = vpack.c.b16 %v3525, %v3523
        %v3578 = vpack.c.b16 %v3526, %v3524
        %v3579 = vpack.c.b16 %v3529, %v3527
        %v3580 = vpack.c.b16 %v3530, %v3528
        %v3581 = vpack.c.b16 %v3533, %v3531
        %v3582 = vpack.c.b16 %v3534, %v3532
        %v3583 = vpack.c.b16 %v3537, %v3535
        %v3584 = vpack.c.b16 %v3538, %v3536
        %v3585 = vpack.c.b16 %v3541, %v3539
        %v3586 = vpack.c.b16 %v3542, %v3540
        %v3587 = vpack.c.b16 %v3545, %v3543
        %v3588 = vpack.c.b16 %v3546, %v3544
        %v3589 = vpack.c.b16 %v3549, %v3547
        %v3590 = vpack.c.b16 %v3550, %v3548
        %v3591 = vpack.c.b16 %v3553, %v3551
        %v3592 = vpack.c.b16 %v3554, %v3552
        %v3593 = vpack.c.b16 %v3557, %v3555
        %v3594 = vpack.c.b16 %v3558, %v3556
        %v3595 = vpack.c.b16 %v3561, %v3559
        %v3596 = vpack.c.b16 %v3562, %v3560
        %v3597 = vpack.c.b16 %v3565, %v3563
        %v3598 = vpack.c.b16 %v3566, %v3564
        %3631 = vmatprep.subr.bf16.mxu0 %v3568
        %3632 = vmatpush1.bf16.msra.mxu0 %v3567
        %3633 = vmatprep.subr.bf16.mxu0 %v3570
        %3634 = vmatpush1.bf16.msra.mxu0 %v3569
        %3635 = vmatprep.subr.bf16.mxu0 %v3572
        %3636 = vmatpush1.bf16.msra.mxu0 %v3571
        %3637 = vmatprep.subr.bf16.mxu0 %v3574
        %3638 = vmatpush1.bf16.msra.mxu0 %v3573
        %3639 = vmatprep.subr.bf16.mxu0 %v3576
        %3640 = vmatpush1.bf16.msra.mxu0 %v3575
        %3641 = vmatprep.subr.bf16.mxu0 %v3578
        %3642 = vmatpush1.bf16.msra.mxu0 %v3577
        %3643 = vmatprep.subr.bf16.mxu0 %v3580
        %3644 = vmatpush1.bf16.msra.mxu0 %v3579
        %3645 = vmatprep.subr.bf16.mxu0 %v3582
        %3646 = vmatpush1.bf16.msra.mxu0 %v3581
        %3647 = vmatprep.subr.bf16.mxu0 %v3584
        %3648 = vmatpush1.bf16.msra.mxu0 %v3583
        %3649 = vmatprep.subr.bf16.mxu0 %v3586
        %3650 = vmatpush1.bf16.msra.mxu0 %v3585
        %3651 = vmatprep.subr.bf16.mxu0 %v3588
        %3652 = vmatpush1.bf16.msra.mxu0 %v3587
        %3653 = vmatprep.subr.bf16.mxu0 %v3590
        %3654 = vmatpush1.bf16.msra.mxu0 %v3589
        %3655 = vmatprep.subr.bf16.mxu0 %v3592
        %3656 = vmatpush1.bf16.msra.mxu0 %v3591
        %3657 = vmatprep.subr.bf16.mxu0 %v3594
        %3658 = vmatpush1.bf16.msra.mxu0 %v3593
        %3659 = vmatprep.subr.bf16.mxu0 %v3596
        %3660 = vmatpush1.bf16.msra.mxu0 %v3595
        %3661 = vmatprep.subr.bf16.mxu0 %v3598
        %3662 = vmatpush1.bf16.msra.mxu0 %v3597
        %3663 = vmatprep.mubr.bf16.mxu0 %v3412
        %3664 = vmatmul.mubr.bf16.gmra.mrb[0].mxu0 %v3411
        %v3665 = vpop.f32.mrb[0].mxu0
        %v3666 = vadd.f32 %v3464, %v3665
        %v3667 = vpop.f32.mrb[0].mxu0
        %v3668 = vadd.f32 %v3468, %v3667
        %v3669 = vpop.f32.mrb[0].mxu0
        %v3670 = vadd.f32 %v3464, %v3669
        %v3671 = vpop.f32.mrb[0].mxu0
        %v3672 = vadd.f32 %v3468, %v3671
        %3673 = vmatprep.mubr.bf16.mxu0 %v3414
        %3674 = vmatmul.mubr.bf16.gmra.mrb[0].mxu0 %v3413
        %v3675 = vpop.f32.mrb[0].mxu0
        %v3676 = vadd.f32 %v3464, %v3675
        %v3677 = vpop.f32.mrb[0].mxu0
        %v3678 = vadd.f32 %v3468, %v3677
        %v3679 = vpop.f32.mrb[0].mxu0
        %v3680 = vadd.f32 %v3464, %v3679
        %v3681 = vpop.f32.mrb[0].mxu0
        %v3682 = vadd.f32 %v3468, %v3681
        %3683 = vmatprep.mubr.bf16.mxu0 %v3416
        %3684 = vmatmul.mubr.bf16.gmra.mrb[0].mxu0 %v3415
        %v3685 = vpop.f32.mrb[0].mxu0
        %v3686 = vadd.f32 %v3464, %v3685
        %v3687 = vpop.f32.mrb[0].mxu0
        %v3688 = vadd.f32 %v3468, %v3687
        %v3689 = vpop.f32.mrb[0].mxu0
        %v3690 = vadd.f32 %v3464, %v3689
        %v3691 = vpop.f32.mrb[0].mxu0
        %v3692 = vadd.f32 %v3468, %v3691
        %3693 = vmatprep.mubr.bf16.mxu0 %v3418
        %3694 = vmatmul.mubr.bf16.gmra.mrb[0].mxu0 %v3417
        %v3695 = vpop.f32.mrb[0].mxu0
        %v3696 = vadd.f32 %v3464, %v3695
        %v3697 = vpop.f32.mrb[0].mxu0
        %v3698 = vadd.f32 %v3468, %v3697
        %v3699 = vpop.f32.mrb[0].mxu0
        %v3700 = vadd.f32 %v3464, %v3699
        %v3701 = vpop.f32.mrb[0].mxu0
        %v3702 = vadd.f32 %v3468, %v3701
        %3703 = vmatprep.mubr.bf16.mxu0 %v3420
        %3704 = vmatmul.mubr.bf16.gmra.mrb[0].mxu0 %v3419
        %v3705 = vpop.f32.mrb[0].mxu0
        %v3706 = vadd.f32 %v3464, %v3705
        %v3707 = vpop.f32.mrb[0].mxu0
        %v3708 = vadd.f32 %v3468, %v3707
        %v3709 = vpop.f32.mrb[0].mxu0
        %v3710 = vadd.f32 %v3464, %v3709
        %v3711 = vpop.f32.mrb[0].mxu0
        %v3712 = vadd.f32 %v3468, %v3711
        %3713 = vmatprep.mubr.bf16.mxu0 %v3422
        %3714 = vmatmul.mubr.bf16.gmra.mrb[0].mxu0 %v3421
        %v3715 = vpop.f32.mrb[0].mxu0
        %v3716 = vadd.f32 %v3464, %v3715
        %v3717 = vpop.f32.mrb[0].mxu0
        %v3718 = vadd.f32 %v3468, %v3717
        %v3719 = vpop.f32.mrb[0].mxu0
        %v3720 = vadd.f32 %v3464, %v3719
        %v3721 = vpop.f32.mrb[0].mxu0
        %v3722 = vadd.f32 %v3468, %v3721
        %3723 = vmatprep.mubr.bf16.mxu0 %v3424
        %3724 = vmatmul.mubr.bf16.gmra.mrb[0].mxu0 %v3423
        %v3725 = vpop.f32.mrb[0].mxu0
        %v3726 = vadd.f32 %v3464, %v3725
        %v3727 = vpop.f32.mrb[0].mxu0
        %v3728 = vadd.f32 %v3468, %v3727
        %v3729 = vpop.f32.mrb[0].mxu0
        %v3730 = vadd.f32 %v3464, %v3729
        %v3731 = vpop.f32.mrb[0].mxu0
        %v3732 = vadd.f32 %v3468, %v3731
        %3733 = vmatprep.mubr.bf16.mxu0 %v3426
        %3734 = vmatmul.mubr.bf16.gmra.mrb[0].mxu0 %v3425
        %v3735 = vpop.f32.mrb[0].mxu0
        %v3736 = vadd.f32 %v3464, %v3735
        %v3737 = vpop.f32.mrb[0].mxu0
        %v3738 = vadd.f32 %v3468, %v3737
        %v3739 = vpop.f32.mrb[0].mxu0
        %v3740 = vadd.f32 %v3464, %v3739
        %v3741 = vpop.f32.mrb[0].mxu0
        %v3742 = vadd.f32 %v3468, %v3741
        %3743 = vdwg.mxu0
        %v3744 = vmax.f32 %v3666, 0.0
        %v3745 = vmax.f32 %v3668, 0.0
        %v3746 = vmax.f32 %v3670, 0.0
        %v3747 = vmax.f32 %v3672, 0.0
        %v3748 = vmax.f32 %v3676, 0.0
        %v3749 = vmax.f32 %v3678, 0.0
        %v3750 = vmax.f32 %v3680, 0.0
        %v3751 = vmax.f32 %v3682, 0.0
        %v3752 = vmax.f32 %v3686, 0.0
        %v3753 = vmax.f32 %v3688, 0.0
        %v3754 = vmax.f32 %v3690, 0.0
        %v3755 = vmax.f32 %v3692, 0.0
        %v3756 = vmax.f32 %v3696, 0.0
        %v3757 = vmax.f32 %v3698, 0.0
        %v3758 = vmax.f32 %v3700, 0.0
        %v3759 = vmax.f32 %v3702, 0.0
        %v3760 = vmax.f32 %v3706, 0.0
        %v3761 = vmax.f32 %v3708, 0.0
        %v3762 = vmax.f32 %v3710, 0.0
        %v3763 = vmax.f32 %v3712, 0.0
        %v3764 = vmax.f32 %v3716, 0.0
        %v3765 = vmax.f32 %v3718, 0.0
        %v3766 = vmax.f32 %v3720, 0.0
        %v3767 = vmax.f32 %v3722, 0.0
        %v3768 = vmax.f32 %v3726, 0.0
        %v3769 = vmax.f32 %v3728, 0.0
        %v3770 = vmax.f32 %v3730, 0.0
        %v3771 = vmax.f32 %v3732, 0.0
        %v3772 = vmax.f32 %v3736, 0.0
        %v3773 = vmax.f32 %v3738, 0.0
        %v3774 = vmax.f32 %v3740, 0.0
        %v3775 = vmax.f32 %v3742, 0.0
        %v3776 = vld [vmem:[%s41] sm:$0x3]
        %v3777 = vld [vmem:[%s43] sm:$0x3]
        %v3778 = vmul.f32 %v3744, %v2081
        %v3779 = vmul.f32 %v3745, %v2081
        %v3780 = vmul.f32 %v3746, %v2086
        %v3781 = vmul.f32 %v3747, %v2086
        %v3782 = vmul.f32 %v3748, %v2091
        %v3783 = vmul.f32 %v3749, %v2091
        %v3784 = vmul.f32 %v3750, %v2096
        %v3785 = vmul.f32 %v3751, %v2096
        %v3786 = vmul.f32 %v3752, %v2101
        %v3787 = vmul.f32 %v3753, %v2101
        %v3788 = vmul.f32 %v3754, %v2106
        %v3789 = vmul.f32 %v3755, %v2106
        %v3790 = vmul.f32 %v3756, %v2111
        %v3791 = vmul.f32 %v3757, %v2111
        %v3792 = vmul.f32 %v3758, %v2116
        %v3793 = vmul.f32 %v3759, %v2116
        %v3794 = vmul.f32 %v3760, %v2121
        %v3795 = vmul.f32 %v3761, %v2121
        %v3796 = vmul.f32 %v3762, %v2126
        %v3797 = vmul.f32 %v3763, %v2126
        %v3798 = vmul.f32 %v3764, %v2131
        %v3799 = vmul.f32 %v3765, %v2131
        %v3800 = vmul.f32 %v3766, %v2136
        %v3801 = vmul.f32 %v3767, %v2136
        %v3802 = vmul.f32 %v3768, %v2141
        %v3803 = vmul.f32 %v3769, %v2141
        %v3804 = vmul.f32 %v3770, %v2146
        %v3805 = vmul.f32 %v3771, %v2146
        %v3806 = vmul.f32 %v3772, %v2151
        %v3807 = vmul.f32 %v3773, %v2151
        %v3808 = vmul.f32 %v3774, %v2156
        %v3809 = vmul.f32 %v3775, %v2156
        %v3810 = vadd.f32 %v3778, %v3780
        %v3811 = vadd.f32 %v3810, %v3782
        %v3812 = vadd.f32 %v3811, %v3784
        %v3813 = vadd.f32 %v3812, %v3786
        %v3814 = vadd.f32 %v3813, %v3788
        %v3815 = vadd.f32 %v3814, %v3790
        %v3816 = vadd.f32 %v3815, %v3792
        %v3817 = vadd.f32 %v3816, %v3794
        %v3818 = vadd.f32 %v3817, %v3796
        %v3819 = vadd.f32 %v3818, %v3798
        %v3820 = vadd.f32 %v3819, %v3800
        %v3821 = vadd.f32 %v3820, %v3802
        %v3822 = vadd.f32 %v3821, %v3804
        %v3823 = vadd.f32 %v3822, %v3806
        %v3824 = vadd.f32 %v3823, %v3808
        %v3825 = vrot.slane %v3824, 4
        %v3826 = vadd.f32 %v3824, %v3825
        %v3827 = vrot.slane %v3826, 2
        %v3828 = vadd.f32 %v3826, %v3827
        %v3829 = vrot.slane %v3828, 1
        %v3830 = vadd.f32 %v3828, %v3829
        %v3831 = vadd.f32 %v3779, %v3781
        %v3832 = vadd.f32 %v3831, %v3783
        %v3833 = vadd.f32 %v3832, %v3785
        %v3834 = vadd.f32 %v3833, %v3787
        %v3835 = vadd.f32 %v3834, %v3789
        %v3836 = vadd.f32 %v3835, %v3791
        %v3837 = vadd.f32 %v3836, %v3793
        %v3838 = vadd.f32 %v3837, %v3795
        %v3839 = vadd.f32 %v3838, %v3797
        %v3840 = vadd.f32 %v3839, %v3799
        %v3841 = vadd.f32 %v3840, %v3801
        %v3842 = vadd.f32 %v3841, %v3803
        %v3843 = vadd.f32 %v3842, %v3805
        %v3844 = vadd.f32 %v3843, %v3807
        %v3845 = vadd.f32 %v3844, %v3809
        %v3846 = vrot.slane %v3845, 4
        %v3847 = vadd.f32 %v3845, %v3846
        %v3848 = vrot.slane %v3847, 2
        %v3849 = vadd.f32 %v3847, %v3848
        %v3850 = vrot.slane %v3849, 1
        %v3851 = vadd.f32 %v3849, %v3850
        %v3852 = vmul.f32 %v3830, %v2235
        %v3853 = vmul.f32 %v3851, %v2235
        %v3854 = vsub.f32 %v3744, %v3852
        %v3855 = vsub.f32 %v3745, %v3853
        %v3856 = vsub.f32 %v3746, %v3852
        %v3857 = vsub.f32 %v3747, %v3853
        %v3858 = vsub.f32 %v3748, %v3852
        %v3859 = vsub.f32 %v3749, %v3853
        %v3860 = vsub.f32 %v3750, %v3852
        %v3861 = vsub.f32 %v3751, %v3853
        %v3862 = vsub.f32 %v3752, %v3852
        %v3863 = vsub.f32 %v3753, %v3853
        %v3864 = vsub.f32 %v3754, %v3852
        %v3865 = vsub.f32 %v3755, %v3853
        %v3866 = vsub.f32 %v3756, %v3852
        %v3867 = vsub.f32 %v3757, %v3853
        %v3868 = vsub.f32 %v3758, %v3852
        %v3869 = vsub.f32 %v3759, %v3853
        %v3870 = vsub.f32 %v3760, %v3852
        %v3871 = vsub.f32 %v3761, %v3853
        %v3872 = vsub.f32 %v3762, %v3852
        %v3873 = vsub.f32 %v3763, %v3853
        %v3874 = vsub.f32 %v3764, %v3852
        %v3875 = vsub.f32 %v3765, %v3853
        %v3876 = vsub.f32 %v3766, %v3852
        %v3877 = vsub.f32 %v3767, %v3853
        %v3878 = vsub.f32 %v3768, %v3852
        %v3879 = vsub.f32 %v3769, %v3853
        %v3880 = vsub.f32 %v3770, %v3852
        %v3881 = vsub.f32 %v3771, %v3853
        %v3882 = vsub.f32 %v3772, %v3852
        %v3883 = vsub.f32 %v3773, %v3853
        %v3884 = vsub.f32 %v3774, %v3852
        %v3885 = vsub.f32 %v3775, %v3853
        %v3886 = vmul.f32 %v3854, %v2081
        %v3887 = vmul.f32 %v3855, %v2081
        %v3888 = vmul.f32 %v3856, %v2086
        %v3889 = vmul.f32 %v3857, %v2086
        %v3890 = vmul.f32 %v3858, %v2091
        %v3891 = vmul.f32 %v3859, %v2091
        %v3892 = vmul.f32 %v3860, %v2096
        %v3893 = vmul.f32 %v3861, %v2096
        %v3894 = vmul.f32 %v3862, %v2101
        %v3895 = vmul.f32 %v3863, %v2101
        %v3896 = vmul.f32 %v3864, %v2106
        %v3897 = vmul.f32 %v3865, %v2106
        %v3898 = vmul.f32 %v3866, %v2111
        %v3899 = vmul.f32 %v3867, %v2111
        %v3900 = vmul.f32 %v3868, %v2116
        %v3901 = vmul.f32 %v3869, %v2116
        %v3902 = vmul.f32 %v3870, %v2121
        %v3903 = vmul.f32 %v3871, %v2121
        %v3904 = vmul.f32 %v3872, %v2126
        %v3905 = vmul.f32 %v3873, %v2126
        %v3906 = vmul.f32 %v3874, %v2131
        %v3907 = vmul.f32 %v3875, %v2131
        %v3908 = vmul.f32 %v3876, %v2136
        %v3909 = vmul.f32 %v3877, %v2136
        %v3910 = vmul.f32 %v3878, %v2141
        %v3911 = vmul.f32 %v3879, %v2141
        %v3912 = vmul.f32 %v3880, %v2146
        %v3913 = vmul.f32 %v3881, %v2146
        %v3914 = vmul.f32 %v3882, %v2151
        %v3915 = vmul.f32 %v3883, %v2151
        %v3916 = vmul.f32 %v3884, %v2156
        %v3917 = vmul.f32 %v3885, %v2156
        %v3918 = vmul.f32 %v3886, %v3886
        %v3919 = vmul.f32 %v3887, %v3887
        %v3920 = vmul.f32 %v3888, %v3888
        %v3921 = vmul.f32 %v3889, %v3889
        %v3922 = vmul.f32 %v3890, %v3890
        %v3923 = vmul.f32 %v3891, %v3891
        %v3924 = vmul.f32 %v3892, %v3892
        %v3925 = vmul.f32 %v3893, %v3893
        %v3926 = vmul.f32 %v3894, %v3894
        %v3927 = vmul.f32 %v3895, %v3895
        %v3928 = vmul.f32 %v3896, %v3896
        %v3929 = vmul.f32 %v3897, %v3897
        %v3930 = vmul.f32 %v3898, %v3898
        %v3931 = vmul.f32 %v3899, %v3899
        %v3932 = vmul.f32 %v3900, %v3900
        %v3933 = vmul.f32 %v3901, %v3901
        %v3934 = vmul.f32 %v3902, %v3902
        %v3935 = vmul.f32 %v3903, %v3903
        %v3936 = vmul.f32 %v3904, %v3904
        %v3937 = vmul.f32 %v3905, %v3905
        %v3938 = vmul.f32 %v3906, %v3906
        %v3939 = vmul.f32 %v3907, %v3907
        %v3940 = vmul.f32 %v3908, %v3908
        %v3941 = vmul.f32 %v3909, %v3909
        %v3942 = vmul.f32 %v3910, %v3910
        %v3943 = vmul.f32 %v3911, %v3911
        %v3944 = vmul.f32 %v3912, %v3912
        %v3945 = vmul.f32 %v3913, %v3913
        %v3946 = vmul.f32 %v3914, %v3914
        %v3947 = vmul.f32 %v3915, %v3915
        %v3948 = vmul.f32 %v3916, %v3916
        %v3949 = vmul.f32 %v3917, %v3917
        %v3950 = vadd.f32 %v3918, %v3920
        %v3951 = vadd.f32 %v3950, %v3922
        %v3952 = vadd.f32 %v3951, %v3924
        %v3953 = vadd.f32 %v3952, %v3926
        %v3954 = vadd.f32 %v3953, %v3928
        %v3955 = vadd.f32 %v3954, %v3930
        %v3956 = vadd.f32 %v3955, %v3932
        %v3957 = vadd.f32 %v3956, %v3934
        %v3958 = vadd.f32 %v3957, %v3936
        %v3959 = vadd.f32 %v3958, %v3938
        %v3960 = vadd.f32 %v3959, %v3940
        %v3961 = vadd.f32 %v3960, %v3942
        %v3962 = vadd.f32 %v3961, %v3944
        %v3963 = vadd.f32 %v3962, %v3946
        %v3964 = vadd.f32 %v3963, %v3948
        %v3965 = vrot.slane %v3964, 4
        %v3966 = vadd.f32 %v3964, %v3965
        %v3967 = vrot.slane %v3966, 2
        %v3968 = vadd.f32 %v3966, %v3967
        %v3969 = vrot.slane %v3968, 1
        %v3970 = vadd.f32 %v3968, %v3969
        %v3971 = vadd.f32 %v3919, %v3921
        %v3972 = vadd.f32 %v3971, %v3923
        %v3973 = vadd.f32 %v3972, %v3925
        %v3974 = vadd.f32 %v3973, %v3927
        %v3975 = vadd.f32 %v3974, %v3929
        %v3976 = vadd.f32 %v3975, %v3931
        %v3977 = vadd.f32 %v3976, %v3933
        %v3978 = vadd.f32 %v3977, %v3935
        %v3979 = vadd.f32 %v3978, %v3937
        %v3980 = vadd.f32 %v3979, %v3939
        %v3981 = vadd.f32 %v3980, %v3941
        %v3982 = vadd.f32 %v3981, %v3943
        %v3983 = vadd.f32 %v3982, %v3945
        %v3984 = vadd.f32 %v3983, %v3947
        %v3985 = vadd.f32 %v3984, %v3949
        %v3986 = vrot.slane %v3985, 4
        %v3987 = vadd.f32 %v3985, %v3986
        %v3988 = vrot.slane %v3987, 2
        %v3989 = vadd.f32 %v3987, %v3988
        %v3990 = vrot.slane %v3989, 1
        %v3991 = vadd.f32 %v3989, %v3990
        %v3992 = vmul.f32 %v3970, %v2235
        %v3993 = vmul.f32 %v3991, %v2235
        %v3994 = vadd.f32 %v3992, 1e-05
        %v3995 = vadd.f32 %v3993, 1e-05
        %v3996 = vrsqrt.pop %v3994
        %v3997 = vrsqrt.pop %v3995
        %v3998 = vmul.f32 %v3854, %v3996
        %v3999 = vmul.f32 %v3855, %v3997
        %v4000 = vmul.f32 %v3856, %v3996
        %v4001 = vmul.f32 %v3857, %v3997
        %v4002 = vmul.f32 %v3858, %v3996
        %v4003 = vmul.f32 %v3859, %v3997
        %v4004 = vmul.f32 %v3860, %v3996
        %v4005 = vmul.f32 %v3861, %v3997
        %v4006 = vmul.f32 %v3862, %v3996
        %v4007 = vmul.f32 %v3863, %v3997
        %v4008 = vmul.f32 %v3864, %v3996
        %v4009 = vmul.f32 %v3865, %v3997
        %v4010 = vmul.f32 %v3866, %v3996
        %v4011 = vmul.f32 %v3867, %v3997
        %v4012 = vmul.f32 %v3868, %v3996
        %v4013 = vmul.f32 %v3869, %v3997
        %v4014 = vmul.f32 %v3870, %v3996
        %v4015 = vmul.f32 %v3871, %v3997
        %v4016 = vmul.f32 %v3872, %v3996
        %v4017 = vmul.f32 %v3873, %v3997
        %v4018 = vmul.f32 %v3874, %v3996
        %v4019 = vmul.f32 %v3875, %v3997
        %v4020 = vmul.f32 %v3876, %v3996
        %v4021 = vmul.f32 %v3877, %v3997
        %v4022 = vmul.f32 %v3878, %v3996
        %v4023 = vmul.f32 %v3879, %v3997
        %v4024 = vmul.f32 %v3880, %v3996
        %v4025 = vmul.f32 %v3881, %v3997
        %v4026 = vmul.f32 %v3882, %v3996
        %v4027 = vmul.f32 %v3883, %v3997
        %v4028 = vmul.f32 %v3884, %v3996
        %v4029 = vmul.f32 %v3885, %v3997
        %v4031 = vlaneseq
        %v4032 = vshrl.u32 %v4031, 7
        %v4033 = vsub.s32 0, %v4032
        %v4034 = vrot.slane %v3776, %v4033
        %v4035 = vlaneseq
        %v4036 = vshrl.u32 %v4035, 7
        %v4037 = vsub.s32 1, %v4036
        %v4038 = vrot.slane %v3776, %v4037
        %v4041 = vmul.f32 %v3998, %v4034
        %v4042 = vmul.f32 %v3999, %v4038
        %v4043 = vmul.f32 %v4000, %v4034
        %v4044 = vmul.f32 %v4001, %v4038
        %v4045 = vmul.f32 %v4002, %v4034
        %v4046 = vmul.f32 %v4003, %v4038
        %v4047 = vmul.f32 %v4004, %v4034
        %v4048 = vmul.f32 %v4005, %v4038
        %v4049 = vmul.f32 %v4006, %v4034
        %v4050 = vmul.f32 %v4007, %v4038
        %v4051 = vmul.f32 %v4008, %v4034
        %v4052 = vmul.f32 %v4009, %v4038
        %v4053 = vmul.f32 %v4010, %v4034
        %v4054 = vmul.f32 %v4011, %v4038
        %v4055 = vmul.f32 %v4012, %v4034
        %v4056 = vmul.f32 %v4013, %v4038
        %v4057 = vmul.f32 %v4014, %v4034
        %v4058 = vmul.f32 %v4015, %v4038
        %v4059 = vmul.f32 %v4016, %v4034
        %v4060 = vmul.f32 %v4017, %v4038
        %v4061 = vmul.f32 %v4018, %v4034
        %v4062 = vmul.f32 %v4019, %v4038
        %v4063 = vmul.f32 %v4020, %v4034
        %v4064 = vmul.f32 %v4021, %v4038
        %v4065 = vmul.f32 %v4022, %v4034
        %v4066 = vmul.f32 %v4023, %v4038
        %v4067 = vmul.f32 %v4024, %v4034
        %v4068 = vmul.f32 %v4025, %v4038
        %v4069 = vmul.f32 %v4026, %v4034
        %v4070 = vmul.f32 %v4027, %v4038
        %v4071 = vmul.f32 %v4028, %v4034
        %v4072 = vmul.f32 %v4029, %v4038
        %v4074 = vlaneseq
        %v4075 = vshrl.u32 %v4074, 7
        %v4076 = vsub.s32 0, %v4075
        %v4077 = vrot.slane %v3777, %v4076
        %v4078 = vlaneseq
        %v4079 = vshrl.u32 %v4078, 7
        %v4080 = vsub.s32 1, %v4079
        %v4081 = vrot.slane %v3777, %v4080
        %v4084 = vadd.f32 %v4041, %v4077
        %v4085 = vadd.f32 %v4042, %v4081
        %v4086 = vadd.f32 %v4043, %v4077
        %v4087 = vadd.f32 %v4044, %v4081
        %v4088 = vadd.f32 %v4045, %v4077
        %v4089 = vadd.f32 %v4046, %v4081
        %v4090 = vadd.f32 %v4047, %v4077
        %v4091 = vadd.f32 %v4048, %v4081
        %v4092 = vadd.f32 %v4049, %v4077
        %v4093 = vadd.f32 %v4050, %v4081
        %v4094 = vadd.f32 %v4051, %v4077
        %v4095 = vadd.f32 %v4052, %v4081
        %v4096 = vadd.f32 %v4053, %v4077
        %v4097 = vadd.f32 %v4054, %v4081
        %v4098 = vadd.f32 %v4055, %v4077
        %v4099 = vadd.f32 %v4056, %v4081
        %v4100 = vadd.f32 %v4057, %v4077
        %v4101 = vadd.f32 %v4058, %v4081
        %v4102 = vadd.f32 %v4059, %v4077
        %v4103 = vadd.f32 %v4060, %v4081
        %v4104 = vadd.f32 %v4061, %v4077
        %v4105 = vadd.f32 %v4062, %v4081
        %v4106 = vadd.f32 %v4063, %v4077
        %v4107 = vadd.f32 %v4064, %v4081
        %v4108 = vadd.f32 %v4065, %v4077
        %v4109 = vadd.f32 %v4066, %v4081
        %v4110 = vadd.f32 %v4067, %v4077
        %v4111 = vadd.f32 %v4068, %v4081
        %v4112 = vadd.f32 %v4069, %v4077
        %v4113 = vadd.f32 %v4070, %v4081
        %v4114 = vadd.f32 %v4071, %v4077
        %v4115 = vadd.f32 %v4072, %v4081
        %v4116 = vld [vmem:[%s45] sm:$0x3]
        %v4117 = vld [vmem:[%s47] sm:$0x3]
        %v4118 = vmul.f32 %v4084, %v2081
        %v4119 = vmul.f32 %v4085, %v2081
        %v4120 = vmul.f32 %v4086, %v2086
        %v4121 = vmul.f32 %v4087, %v2086
        %v4122 = vmul.f32 %v4088, %v2091
        %v4123 = vmul.f32 %v4089, %v2091
        %v4124 = vmul.f32 %v4090, %v2096
        %v4125 = vmul.f32 %v4091, %v2096
        %v4126 = vmul.f32 %v4092, %v2101
        %v4127 = vmul.f32 %v4093, %v2101
        %v4128 = vmul.f32 %v4094, %v2106
        %v4129 = vmul.f32 %v4095, %v2106
        %v4130 = vmul.f32 %v4096, %v2111
        %v4131 = vmul.f32 %v4097, %v2111
        %v4132 = vmul.f32 %v4098, %v2116
        %v4133 = vmul.f32 %v4099, %v2116
        %v4134 = vmul.f32 %v4100, %v2121
        %v4135 = vmul.f32 %v4101, %v2121
        %v4136 = vmul.f32 %v4102, %v2126
        %v4137 = vmul.f32 %v4103, %v2126
        %v4138 = vmul.f32 %v4104, %v2131
        %v4139 = vmul.f32 %v4105, %v2131
        %v4140 = vmul.f32 %v4106, %v2136
        %v4141 = vmul.f32 %v4107, %v2136
        %v4142 = vmul.f32 %v4108, %v2141
        %v4143 = vmul.f32 %v4109, %v2141
        %v4144 = vmul.f32 %v4110, %v2146
        %v4145 = vmul.f32 %v4111, %v2146
        %v4146 = vmul.f32 %v4112, %v2151
        %v4147 = vmul.f32 %v4113, %v2151
        %v4148 = vmul.f32 %v4114, %v2156
        %v4149 = vmul.f32 %v4115, %v2156
        %v4150 = vadd.f32 %v4118, %v4120
        %v4151 = vadd.f32 %v4150, %v4122
        %v4152 = vadd.f32 %v4151, %v4124
        %v4153 = vadd.f32 %v4152, %v4126
        %v4154 = vadd.f32 %v4153, %v4128
        %v4155 = vadd.f32 %v4154, %v4130
        %v4156 = vadd.f32 %v4155, %v4132
        %v4157 = vadd.f32 %v4156, %v4134
        %v4158 = vadd.f32 %v4157, %v4136
        %v4159 = vadd.f32 %v4158, %v4138
        %v4160 = vadd.f32 %v4159, %v4140
        %v4161 = vadd.f32 %v4160, %v4142
        %v4162 = vadd.f32 %v4161, %v4144
        %v4163 = vadd.f32 %v4162, %v4146
        %v4164 = vadd.f32 %v4163, %v4148
        %v4165 = vrot.slane %v4164, 4
        %v4166 = vadd.f32 %v4164, %v4165
        %v4167 = vrot.slane %v4166, 2
        %v4168 = vadd.f32 %v4166, %v4167
        %v4169 = vrot.slane %v4168, 1
        %v4170 = vadd.f32 %v4168, %v4169
        %v4171 = vadd.f32 %v4119, %v4121
        %v4172 = vadd.f32 %v4171, %v4123
        %v4173 = vadd.f32 %v4172, %v4125
        %v4174 = vadd.f32 %v4173, %v4127
        %v4175 = vadd.f32 %v4174, %v4129
        %v4176 = vadd.f32 %v4175, %v4131
        %v4177 = vadd.f32 %v4176, %v4133
        %v4178 = vadd.f32 %v4177, %v4135
        %v4179 = vadd.f32 %v4178, %v4137
        %v4180 = vadd.f32 %v4179, %v4139
        %v4181 = vadd.f32 %v4180, %v4141
        %v4182 = vadd.f32 %v4181, %v4143
        %v4183 = vadd.f32 %v4182, %v4145
        %v4184 = vadd.f32 %v4183, %v4147
        %v4185 = vadd.f32 %v4184, %v4149
        %v4186 = vrot.slane %v4185, 4
        %v4187 = vadd.f32 %v4185, %v4186
        %v4188 = vrot.slane %v4187, 2
        %v4189 = vadd.f32 %v4187, %v4188
        %v4190 = vrot.slane %v4189, 1
        %v4191 = vadd.f32 %v4189, %v4190
        %v4192 = vmul.f32 %v4170, %v2235
        %v4193 = vmul.f32 %v4191, %v2235
        %v4194 = vsub.f32 %v4084, %v4192
        %v4195 = vsub.f32 %v4085, %v4193
        %v4196 = vsub.f32 %v4086, %v4192
        %v4197 = vsub.f32 %v4087, %v4193
        %v4198 = vsub.f32 %v4088, %v4192
        %v4199 = vsub.f32 %v4089, %v4193
        %v4200 = vsub.f32 %v4090, %v4192
        %v4201 = vsub.f32 %v4091, %v4193
        %v4202 = vsub.f32 %v4092, %v4192
        %v4203 = vsub.f32 %v4093, %v4193
        %v4204 = vsub.f32 %v4094, %v4192
        %v4205 = vsub.f32 %v4095, %v4193
        %v4206 = vsub.f32 %v4096, %v4192
        %v4207 = vsub.f32 %v4097, %v4193
        %v4208 = vsub.f32 %v4098, %v4192
        %v4209 = vsub.f32 %v4099, %v4193
        %v4210 = vsub.f32 %v4100, %v4192
        %v4211 = vsub.f32 %v4101, %v4193
        %v4212 = vsub.f32 %v4102, %v4192
        %v4213 = vsub.f32 %v4103, %v4193
        %v4214 = vsub.f32 %v4104, %v4192
        %v4215 = vsub.f32 %v4105, %v4193
        %v4216 = vsub.f32 %v4106, %v4192
        %v4217 = vsub.f32 %v4107, %v4193
        %v4218 = vsub.f32 %v4108, %v4192
        %v4219 = vsub.f32 %v4109, %v4193
        %v4220 = vsub.f32 %v4110, %v4192
        %v4221 = vsub.f32 %v4111, %v4193
        %v4222 = vsub.f32 %v4112, %v4192
        %v4223 = vsub.f32 %v4113, %v4193
        %v4224 = vsub.f32 %v4114, %v4192
        %v4225 = vsub.f32 %v4115, %v4193
        %v4226 = vmul.f32 %v4194, %v2081
        %v4227 = vmul.f32 %v4195, %v2081
        %v4228 = vmul.f32 %v4196, %v2086
        %v4229 = vmul.f32 %v4197, %v2086
        %v4230 = vmul.f32 %v4198, %v2091
        %v4231 = vmul.f32 %v4199, %v2091
        %v4232 = vmul.f32 %v4200, %v2096
        %v4233 = vmul.f32 %v4201, %v2096
        %v4234 = vmul.f32 %v4202, %v2101
        %v4235 = vmul.f32 %v4203, %v2101
        %v4236 = vmul.f32 %v4204, %v2106
        %v4237 = vmul.f32 %v4205, %v2106
        %v4238 = vmul.f32 %v4206, %v2111
        %v4239 = vmul.f32 %v4207, %v2111
        %v4240 = vmul.f32 %v4208, %v2116
        %v4241 = vmul.f32 %v4209, %v2116
        %v4242 = vmul.f32 %v4210, %v2121
        %v4243 = vmul.f32 %v4211, %v2121
        %v4244 = vmul.f32 %v4212, %v2126
        %v4245 = vmul.f32 %v4213, %v2126
        %v4246 = vmul.f32 %v4214, %v2131
        %v4247 = vmul.f32 %v4215, %v2131
        %v4248 = vmul.f32 %v4216, %v2136
        %v4249 = vmul.f32 %v4217, %v2136
        %v4250 = vmul.f32 %v4218, %v2141
        %v4251 = vmul.f32 %v4219, %v2141
        %v4252 = vmul.f32 %v4220, %v2146
        %v4253 = vmul.f32 %v4221, %v2146
        %v4254 = vmul.f32 %v4222, %v2151
        %v4255 = vmul.f32 %v4223, %v2151
        %v4256 = vmul.f32 %v4224, %v2156
        %v4257 = vmul.f32 %v4225, %v2156
        %v4258 = vmul.f32 %v4226, %v4226
        %v4259 = vmul.f32 %v4227, %v4227
        %v4260 = vmul.f32 %v4228, %v4228
        %v4261 = vmul.f32 %v4229, %v4229
        %v4262 = vmul.f32 %v4230, %v4230
        %v4263 = vmul.f32 %v4231, %v4231
        %v4264 = vmul.f32 %v4232, %v4232
        %v4265 = vmul.f32 %v4233, %v4233
        %v4266 = vmul.f32 %v4234, %v4234
        %v4267 = vmul.f32 %v4235, %v4235
        %v4268 = vmul.f32 %v4236, %v4236
        %v4269 = vmul.f32 %v4237, %v4237
        %v4270 = vmul.f32 %v4238, %v4238
        %v4271 = vmul.f32 %v4239, %v4239
        %v4272 = vmul.f32 %v4240, %v4240
        %v4273 = vmul.f32 %v4241, %v4241
        %v4274 = vmul.f32 %v4242, %v4242
        %v4275 = vmul.f32 %v4243, %v4243
        %v4276 = vmul.f32 %v4244, %v4244
        %v4277 = vmul.f32 %v4245, %v4245
        %v4278 = vmul.f32 %v4246, %v4246
        %v4279 = vmul.f32 %v4247, %v4247
        %v4280 = vmul.f32 %v4248, %v4248
        %v4281 = vmul.f32 %v4249, %v4249
        %v4282 = vmul.f32 %v4250, %v4250
        %v4283 = vmul.f32 %v4251, %v4251
        %v4284 = vmul.f32 %v4252, %v4252
        %v4285 = vmul.f32 %v4253, %v4253
        %v4286 = vmul.f32 %v4254, %v4254
        %v4287 = vmul.f32 %v4255, %v4255
        %v4288 = vmul.f32 %v4256, %v4256
        %v4289 = vmul.f32 %v4257, %v4257
        %v4290 = vadd.f32 %v4258, %v4260
        %v4291 = vadd.f32 %v4290, %v4262
        %v4292 = vadd.f32 %v4291, %v4264
        %v4293 = vadd.f32 %v4292, %v4266
        %v4294 = vadd.f32 %v4293, %v4268
        %v4295 = vadd.f32 %v4294, %v4270
        %v4296 = vadd.f32 %v4295, %v4272
        %v4297 = vadd.f32 %v4296, %v4274
        %v4298 = vadd.f32 %v4297, %v4276
        %v4299 = vadd.f32 %v4298, %v4278
        %v4300 = vadd.f32 %v4299, %v4280
        %v4301 = vadd.f32 %v4300, %v4282
        %v4302 = vadd.f32 %v4301, %v4284
        %v4303 = vadd.f32 %v4302, %v4286
        %v4304 = vadd.f32 %v4303, %v4288
        %v4305 = vrot.slane %v4304, 4
        %v4306 = vadd.f32 %v4304, %v4305
        %v4307 = vrot.slane %v4306, 2
        %v4308 = vadd.f32 %v4306, %v4307
        %v4309 = vrot.slane %v4308, 1
        %v4310 = vadd.f32 %v4308, %v4309
        %v4311 = vadd.f32 %v4259, %v4261
        %v4312 = vadd.f32 %v4311, %v4263
        %v4313 = vadd.f32 %v4312, %v4265
        %v4314 = vadd.f32 %v4313, %v4267
        %v4315 = vadd.f32 %v4314, %v4269
        %v4316 = vadd.f32 %v4315, %v4271
        %v4317 = vadd.f32 %v4316, %v4273
        %v4318 = vadd.f32 %v4317, %v4275
        %v4319 = vadd.f32 %v4318, %v4277
        %v4320 = vadd.f32 %v4319, %v4279
        %v4321 = vadd.f32 %v4320, %v4281
        %v4322 = vadd.f32 %v4321, %v4283
        %v4323 = vadd.f32 %v4322, %v4285
        %v4324 = vadd.f32 %v4323, %v4287
        %v4325 = vadd.f32 %v4324, %v4289
        %v4326 = vrot.slane %v4325, 4
        %v4327 = vadd.f32 %v4325, %v4326
        %v4328 = vrot.slane %v4327, 2
        %v4329 = vadd.f32 %v4327, %v4328
        %v4330 = vrot.slane %v4329, 1
        %v4331 = vadd.f32 %v4329, %v4330
        %v4332 = vmul.f32 %v4310, %v2235
        %v4333 = vmul.f32 %v4331, %v2235
        %v4334 = vadd.f32 %v4332, 1e-05
        %v4335 = vadd.f32 %v4333, 1e-05
        %v4336 = vrsqrt.pop %v4334
        %v4337 = vrsqrt.pop %v4335
        %v4338 = vmul.f32 %v4194, %v4336
        %v4339 = vmul.f32 %v4195, %v4337
        %v4340 = vmul.f32 %v4196, %v4336
        %v4341 = vmul.f32 %v4197, %v4337
        %v4342 = vmul.f32 %v4198, %v4336
        %v4343 = vmul.f32 %v4199, %v4337
        %v4344 = vmul.f32 %v4200, %v4336
        %v4345 = vmul.f32 %v4201, %v4337
        %v4346 = vmul.f32 %v4202, %v4336
        %v4347 = vmul.f32 %v4203, %v4337
        %v4348 = vmul.f32 %v4204, %v4336
        %v4349 = vmul.f32 %v4205, %v4337
        %v4350 = vmul.f32 %v4206, %v4336
        %v4351 = vmul.f32 %v4207, %v4337
        %v4352 = vmul.f32 %v4208, %v4336
        %v4353 = vmul.f32 %v4209, %v4337
        %v4354 = vmul.f32 %v4210, %v4336
        %v4355 = vmul.f32 %v4211, %v4337
        %v4356 = vmul.f32 %v4212, %v4336
        %v4357 = vmul.f32 %v4213, %v4337
        %v4358 = vmul.f32 %v4214, %v4336
        %v4359 = vmul.f32 %v4215, %v4337
        %v4360 = vmul.f32 %v4216, %v4336
        %v4361 = vmul.f32 %v4217, %v4337
        %v4362 = vmul.f32 %v4218, %v4336
        %v4363 = vmul.f32 %v4219, %v4337
        %v4364 = vmul.f32 %v4220, %v4336
        %v4365 = vmul.f32 %v4221, %v4337
        %v4366 = vmul.f32 %v4222, %v4336
        %v4367 = vmul.f32 %v4223, %v4337
        %v4368 = vmul.f32 %v4224, %v4336
        %v4369 = vmul.f32 %v4225, %v4337
        %v4371 = vlaneseq
        %v4372 = vshrl.u32 %v4371, 7
        %v4373 = vsub.s32 0, %v4372
        %v4374 = vrot.slane %v4116, %v4373
        %v4375 = vlaneseq
        %v4376 = vshrl.u32 %v4375, 7
        %v4377 = vsub.s32 1, %v4376
        %v4378 = vrot.slane %v4116, %v4377
        %v4381 = vmul.f32 %v4338, %v4374
        %v4382 = vmul.f32 %v4339, %v4378
        %v4383 = vmul.f32 %v4340, %v4374
        %v4384 = vmul.f32 %v4341, %v4378
        %v4385 = vmul.f32 %v4342, %v4374
        %v4386 = vmul.f32 %v4343, %v4378
        %v4387 = vmul.f32 %v4344, %v4374
        %v4388 = vmul.f32 %v4345, %v4378
        %v4389 = vmul.f32 %v4346, %v4374
        %v4390 = vmul.f32 %v4347, %v4378
        %v4391 = vmul.f32 %v4348, %v4374
        %v4392 = vmul.f32 %v4349, %v4378
        %v4393 = vmul.f32 %v4350, %v4374
        %v4394 = vmul.f32 %v4351, %v4378
        %v4395 = vmul.f32 %v4352, %v4374
        %v4396 = vmul.f32 %v4353, %v4378
        %v4397 = vmul.f32 %v4354, %v4374
        %v4398 = vmul.f32 %v4355, %v4378
        %v4399 = vmul.f32 %v4356, %v4374
        %v4400 = vmul.f32 %v4357, %v4378
        %v4401 = vmul.f32 %v4358, %v4374
        %v4402 = vmul.f32 %v4359, %v4378
        %v4403 = vmul.f32 %v4360, %v4374
        %v4404 = vmul.f32 %v4361, %v4378
        %v4405 = vmul.f32 %v4362, %v4374
        %v4406 = vmul.f32 %v4363, %v4378
        %v4407 = vmul.f32 %v4364, %v4374
        %v4408 = vmul.f32 %v4365, %v4378
        %v4409 = vmul.f32 %v4366, %v4374
        %v4410 = vmul.f32 %v4367, %v4378
        %v4411 = vmul.f32 %v4368, %v4374
        %v4412 = vmul.f32 %v4369, %v4378
        %v4414 = vlaneseq
        %v4415 = vshrl.u32 %v4414, 7
        %v4416 = vsub.s32 0, %v4415
        %v4417 = vrot.slane %v4117, %v4416
        %v4418 = vlaneseq
        %v4419 = vshrl.u32 %v4418, 7
        %v4420 = vsub.s32 1, %v4419
        %v4421 = vrot.slane %v4117, %v4420
        %v4424 = vadd.f32 %v4381, %v4417
        %v4425 = vadd.f32 %v4382, %v4421
        %v4426 = vadd.f32 %v4383, %v4417
        %v4427 = vadd.f32 %v4384, %v4421
        %v4428 = vadd.f32 %v4385, %v4417
        %v4429 = vadd.f32 %v4386, %v4421
        %v4430 = vadd.f32 %v4387, %v4417
        %v4431 = vadd.f32 %v4388, %v4421
        %v4432 = vadd.f32 %v4389, %v4417
        %v4433 = vadd.f32 %v4390, %v4421
        %v4434 = vadd.f32 %v4391, %v4417
        %v4435 = vadd.f32 %v4392, %v4421
        %v4436 = vadd.f32 %v4393, %v4417
        %v4437 = vadd.f32 %v4394, %v4421
        %v4438 = vadd.f32 %v4395, %v4417
        %v4439 = vadd.f32 %v4396, %v4421
        %v4440 = vadd.f32 %v4397, %v4417
        %v4441 = vadd.f32 %v4398, %v4421
        %v4442 = vadd.f32 %v4399, %v4417
        %v4443 = vadd.f32 %v4400, %v4421
        %v4444 = vadd.f32 %v4401, %v4417
        %v4445 = vadd.f32 %v4402, %v4421
        %v4446 = vadd.f32 %v4403, %v4417
        %v4447 = vadd.f32 %v4404, %v4421
        %v4448 = vadd.f32 %v4405, %v4417
        %v4449 = vadd.f32 %v4406, %v4421
        %v4450 = vadd.f32 %v4407, %v4417
        %v4451 = vadd.f32 %v4408, %v4421
        %v4452 = vadd.f32 %v4409, %v4417
        %v4453 = vadd.f32 %v4410, %v4421
        %v4454 = vadd.f32 %v4411, %v4417
        %v4455 = vadd.f32 %v4412, %v4421
        %v4456 = vmax.f32 %v4424, 0.0
        %v4457 = vmax.f32 %v4425, 0.0
        %v4458 = vmax.f32 %v4426, 0.0
        %v4459 = vmax.f32 %v4427, 0.0
        %v4460 = vmax.f32 %v4428, 0.0
        %v4461 = vmax.f32 %v4429, 0.0
        %v4462 = vmax.f32 %v4430, 0.0
        %v4463 = vmax.f32 %v4431, 0.0
        %v4464 = vmax.f32 %v4432, 0.0
        %v4465 = vmax.f32 %v4433, 0.0
        %v4466 = vmax.f32 %v4434, 0.0
        %v4467 = vmax.f32 %v4435, 0.0
        %v4468 = vmax.f32 %v4436, 0.0
        %v4469 = vmax.f32 %v4437, 0.0
        %v4470 = vmax.f32 %v4438, 0.0
        %v4471 = vmax.f32 %v4439, 0.0
        %v4472 = vmax.f32 %v4440, 0.0
        %v4473 = vmax.f32 %v4441, 0.0
        %v4474 = vmax.f32 %v4442, 0.0
        %v4475 = vmax.f32 %v4443, 0.0
        %v4476 = vmax.f32 %v4444, 0.0
        %v4477 = vmax.f32 %v4445, 0.0
        %v4478 = vmax.f32 %v4446, 0.0
        %v4479 = vmax.f32 %v4447, 0.0
        %v4480 = vmax.f32 %v4448, 0.0
        %v4481 = vmax.f32 %v4449, 0.0
        %v4482 = vmax.f32 %v4450, 0.0
        %v4483 = vmax.f32 %v4451, 0.0
        %v4484 = vmax.f32 %v4452, 0.0
        %v4485 = vmax.f32 %v4453, 0.0
        %v4486 = vmax.f32 %v4454, 0.0
        %v4487 = vmax.f32 %v4455, 0.0
        %v4488 = vpack.c.bf16 %v4458, %v4456
        %v4489 = vpack.c.bf16 %v4459, %v4457
        %v4490 = vpack.c.bf16 %v4462, %v4460
        %v4491 = vpack.c.bf16 %v4463, %v4461
        %v4492 = vpack.c.bf16 %v4466, %v4464
        %v4493 = vpack.c.bf16 %v4467, %v4465
        %v4494 = vpack.c.bf16 %v4470, %v4468
        %v4495 = vpack.c.bf16 %v4471, %v4469
        %v4496 = vpack.c.bf16 %v4474, %v4472
        %v4497 = vpack.c.bf16 %v4475, %v4473
        %v4498 = vpack.c.bf16 %v4478, %v4476
        %v4499 = vpack.c.bf16 %v4479, %v4477
        %v4500 = vpack.c.bf16 %v4482, %v4480
        %v4501 = vpack.c.bf16 %v4483, %v4481
        %v4502 = vpack.c.bf16 %v4486, %v4484
        %v4503 = vpack.c.bf16 %v4487, %v4485
        %v4504 = vld [vmem:[%s11] sm:$0x3]
        %v4506 = vlaneseq
        %v4507 = vshrl.u32 %v4506, 7
        %v4508 = vsub.s32 0, %v4507
        %v4509 = vrot.slane %v4504, %v4508
        %v4510 = vlaneseq
        %v4511 = vshrl.u32 %v4510, 7
        %v4512 = vsub.s32 1, %v4511
        %v4513 = vrot.slane %v4504, %v4512
        %v4516 = vmul.f32 %v4509, %v4456
        %v4517 = vmul.f32 %v4513, %v4457
        %v4518 = vmul.f32 %v4509, %v4458
        %v4519 = vmul.f32 %v4513, %v4459
        %v4520 = vmul.f32 %v4509, %v4460
        %v4521 = vmul.f32 %v4513, %v4461
        %v4522 = vmul.f32 %v4509, %v4462
        %v4523 = vmul.f32 %v4513, %v4463
        %v4524 = vmul.f32 %v4509, %v4464
        %v4525 = vmul.f32 %v4513, %v4465
        %v4526 = vmul.f32 %v4509, %v4466
        %v4527 = vmul.f32 %v4513, %v4467
        %v4528 = vmul.f32 %v4509, %v4468
        %v4529 = vmul.f32 %v4513, %v4469
        %v4530 = vmul.f32 %v4509, %v4470
        %v4531 = vmul.f32 %v4513, %v4471
        %v4532 = vmul.f32 %v4509, %v4472
        %v4533 = vmul.f32 %v4513, %v4473
        %v4534 = vmul.f32 %v4509, %v4474
        %v4535 = vmul.f32 %v4513, %v4475
        %v4536 = vmul.f32 %v4509, %v4476
        %v4537 = vmul.f32 %v4513, %v4477
        %v4538 = vmul.f32 %v4509, %v4478
        %v4539 = vmul.f32 %v4513, %v4479
        %v4540 = vmul.f32 %v4509, %v4480
        %v4541 = vmul.f32 %v4513, %v4481
        %v4542 = vmul.f32 %v4509, %v4482
        %v4543 = vmul.f32 %v4513, %v4483
        %v4544 = vmul.f32 %v4509, %v4484
        %v4545 = vmul.f32 %v4513, %v4485
        %v4546 = vmul.f32 %v4509, %v4486
        %v4547 = vmul.f32 %v4513, %v4487
        %4548 = vmatprep.subr.bf16.mxu0 %v4489
        %4549 = vmatpush1.bf16.msra.mxu0 %v4488
        %4550 = vmatprep.subr.bf16.mxu0 %v4491
        %4551 = vmatpush1.bf16.msra.mxu0 %v4490
        %4552 = vmatprep.subr.bf16.mxu0 %v4493
        %4553 = vmatpush1.bf16.msra.mxu0 %v4492
        %4554 = vmatprep.subr.bf16.mxu0 %v4495
        %4555 = vmatpush1.bf16.msra.mxu0 %v4494
        %4556 = vmatprep.subr.bf16.mxu0 %v4497
        %4557 = vmatpush1.bf16.msra.mxu0 %v4496
        %4558 = vmatprep.subr.bf16.mxu0 %v4499
        %4559 = vmatpush1.bf16.msra.mxu0 %v4498
        %4560 = vmatprep.subr.bf16.mxu0 %v4501
        %4561 = vmatpush1.bf16.msra.mxu0 %v4500
        %4562 = vmatprep.subr.bf16.mxu0 %v4503
        %4563 = vmatpush1.bf16.msra.mxu0 %v4502
        %4564 = vmatprep.subr.bf16.mxu0 0
        %4565 = vmatpush1.bf16.msra.mxu0 0
        %4566 = vmatprep.subr.bf16.mxu0 0
        %4567 = vmatpush1.bf16.msra.mxu0 0
        %4568 = vmatprep.subr.bf16.mxu0 0
        %4569 = vmatpush1.bf16.msra.mxu0 0
        %4570 = vmatprep.subr.bf16.mxu0 0
        %4571 = vmatpush1.bf16.msra.mxu0 0
        %4572 = vmatprep.subr.bf16.mxu0 0
        %4573 = vmatpush1.bf16.msra.mxu0 0
        %4574 = vmatprep.subr.bf16.mxu0 0
        %4575 = vmatpush1.bf16.msra.mxu0 0
        %4576 = vmatprep.subr.bf16.mxu0 0
        %4577 = vmatpush1.bf16.msra.mxu0 0
        %4578 = vmatprep.subr.bf16.mxu0 0
        %4579 = vmatpush1.bf16.msra.mxu0 0
        %4580 = vmatprep.mubr.bf16.mxu0 0
        %4581 = vmatmul.mubr.bf16.gmra.mrb[0].mxu0 %v1337
        %v4582 = vpop.f32.mrb[0].mxu0
        %v4583 = vadd.f32 %v4516, %v4582
        %v4584 = vpop.f32.mrb[0].mxu0
        %v4585 = vadd.f32 %v4517, %v4584
        %v4586 = vpop.f32.mrb[0].mxu0
        %v4587 = vadd.f32 %v4518, %v4586
        %v4588 = vpop.f32.mrb[0].mxu0
        %v4589 = vadd.f32 %v4519, %v4588
        %4590 = vmatprep.mubr.bf16.mxu0 0
        %4591 = vmatmul.mubr.bf16.gmra.mrb[0].mxu0 %v1338
        %v4592 = vpop.f32.mrb[0].mxu0
        %v4593 = vadd.f32 %v4520, %v4592
        %v4594 = vpop.f32.mrb[0].mxu0
        %v4595 = vadd.f32 %v4521, %v4594
        %v4596 = vpop.f32.mrb[0].mxu0
        %v4597 = vadd.f32 %v4522, %v4596
        %v4598 = vpop.f32.mrb[0].mxu0
        %v4599 = vadd.f32 %v4523, %v4598
        %4600 = vmatprep.mubr.bf16.mxu0 0
        %4601 = vmatmul.mubr.bf16.gmra.mrb[0].mxu0 %v1339
        %v4602 = vpop.f32.mrb[0].mxu0
        %v4603 = vadd.f32 %v4524, %v4602
        %v4604 = vpop.f32.mrb[0].mxu0
        %v4605 = vadd.f32 %v4525, %v4604
        %v4606 = vpop.f32.mrb[0].mxu0
        %v4607 = vadd.f32 %v4526, %v4606
        %v4608 = vpop.f32.mrb[0].mxu0
        %v4609 = vadd.f32 %v4527, %v4608
        %4610 = vmatprep.mubr.bf16.mxu0 0
        %4611 = vmatmul.mubr.bf16.gmra.mrb[0].mxu0 %v1340
        %v4612 = vpop.f32.mrb[0].mxu0
        %v4613 = vadd.f32 %v4528, %v4612
        %v4614 = vpop.f32.mrb[0].mxu0
        %v4615 = vadd.f32 %v4529, %v4614
        %v4616 = vpop.f32.mrb[0].mxu0
        %v4617 = vadd.f32 %v4530, %v4616
        %v4618 = vpop.f32.mrb[0].mxu0
        %v4619 = vadd.f32 %v4531, %v4618
        %4620 = vmatprep.mubr.bf16.mxu0 0
        %4621 = vmatmul.mubr.bf16.gmra.mrb[0].mxu0 %v1341
        %v4622 = vpop.f32.mrb[0].mxu0
        %v4623 = vadd.f32 %v4532, %v4622
        %v4624 = vpop.f32.mrb[0].mxu0
        %v4625 = vadd.f32 %v4533, %v4624
        %v4626 = vpop.f32.mrb[0].mxu0
        %v4627 = vadd.f32 %v4534, %v4626
        %v4628 = vpop.f32.mrb[0].mxu0
        %v4629 = vadd.f32 %v4535, %v4628
        %4630 = vmatprep.mubr.bf16.mxu0 0
        %4631 = vmatmul.mubr.bf16.gmra.mrb[0].mxu0 %v1342
        %v4632 = vpop.f32.mrb[0].mxu0
        %v4633 = vadd.f32 %v4536, %v4632
        %v4634 = vpop.f32.mrb[0].mxu0
        %v4635 = vadd.f32 %v4537, %v4634
        %v4636 = vpop.f32.mrb[0].mxu0
        %v4637 = vadd.f32 %v4538, %v4636
        %v4638 = vpop.f32.mrb[0].mxu0
        %v4639 = vadd.f32 %v4539, %v4638
        %4640 = vmatprep.mubr.bf16.mxu0 0
        %4641 = vmatmul.mubr.bf16.gmra.mrb[0].mxu0 %v1343
        %v4642 = vpop.f32.mrb[0].mxu0
        %v4643 = vadd.f32 %v4540, %v4642
        %v4644 = vpop.f32.mrb[0].mxu0
        %v4645 = vadd.f32 %v4541, %v4644
        %v4646 = vpop.f32.mrb[0].mxu0
        %v4647 = vadd.f32 %v4542, %v4646
        %v4648 = vpop.f32.mrb[0].mxu0
        %v4649 = vadd.f32 %v4543, %v4648
        %4650 = vmatprep.mubr.bf16.mxu0 0
        %4651 = vmatmul.mubr.bf16.gmra.mrb[0].mxu0 %v1344
        %v4652 = vpop.f32.mrb[0].mxu0
        %v4653 = vadd.f32 %v4544, %v4652
        %v4654 = vpop.f32.mrb[0].mxu0
        %v4655 = vadd.f32 %v4545, %v4654
        %v4656 = vpop.f32.mrb[0].mxu0
        %v4657 = vadd.f32 %v4546, %v4656
        %v4658 = vpop.f32.mrb[0].mxu0
        %v4659 = vadd.f32 %v4547, %v4658
        %4660 = vdwg.mxu0
        %v4661 = vpack.c.bf16 %v4587, %v4583
        %v4662 = vpack.c.bf16 %v4589, %v4585
        %v4663 = vpack.c.bf16 %v4597, %v4593
        %v4664 = vpack.c.bf16 %v4599, %v4595
        %v4665 = vpack.c.bf16 %v4607, %v4603
        %v4666 = vpack.c.bf16 %v4609, %v4605
        %v4667 = vpack.c.bf16 %v4617, %v4613
        %v4668 = vpack.c.bf16 %v4619, %v4615
        %v4669 = vpack.c.bf16 %v4627, %v4623
        %v4670 = vpack.c.bf16 %v4629, %v4625
        %v4671 = vpack.c.bf16 %v4637, %v4633
        %v4672 = vpack.c.bf16 %v4639, %v4635
        %v4673 = vpack.c.bf16 %v4647, %v4643
        %v4674 = vpack.c.bf16 %v4649, %v4645
        %v4675 = vpack.c.bf16 %v4657, %v4653
        %v4676 = vpack.c.bf16 %v4659, %v4655
        %v4677 = vld [vmem:[%s49] sm:$0xf]
        %v4678 = vld [vmem:[%s49 + $0x4] sm:$0xf]
        %v4679 = vld [vmem:[%s49 + $0x8] sm:$0xf]
        %v4680 = vld [vmem:[%s49 + $0xc] sm:$0xf]
        %v4681 = vld [vmem:[%s49 + $0x10] sm:$0xf]
        %v4682 = vld [vmem:[%s49 + $0x14] sm:$0xf]
        %v4683 = vld [vmem:[%s49 + $0x18] sm:$0xf]
        %v4684 = vld [vmem:[%s49 + $0x1c] sm:$0xf]
        %v4685 = vld [vmem:[%s49 + $0x20] sm:$0xf]
        %v4686 = vld [vmem:[%s49 + $0x24] sm:$0xf]
        %v4687 = vld [vmem:[%s49 + $0x28] sm:$0xf]
        %v4688 = vld [vmem:[%s49 + $0x2c] sm:$0xf]
        %v4689 = vld [vmem:[%s49 + $0x30] sm:$0xf]
        %v4690 = vld [vmem:[%s49 + $0x34] sm:$0xf]
        %v4691 = vld [vmem:[%s49 + $0x38] sm:$0xf]
        %v4692 = vld [vmem:[%s49 + $0x3c] sm:$0xf]
        %v4693 = vld [vmem:[%s49 + $0x40] sm:$0xf]
        %v4694 = vld [vmem:[%s49 + $0x44] sm:$0xf]
        %v4695 = vld [vmem:[%s49 + $0x48] sm:$0xf]
        %v4696 = vld [vmem:[%s49 + $0x4c] sm:$0xf]
        %v4697 = vld [vmem:[%s49 + $0x50] sm:$0xf]
        %v4698 = vld [vmem:[%s49 + $0x54] sm:$0xf]
        %v4699 = vld [vmem:[%s49 + $0x58] sm:$0xf]
        %v4700 = vld [vmem:[%s49 + $0x5c] sm:$0xf]
        %v4701 = vld [vmem:[%s49 + $0x60] sm:$0xf]
        %v4702 = vld [vmem:[%s49 + $0x64] sm:$0xf]
        %v4703 = vld [vmem:[%s49 + $0x68] sm:$0xf]
        %v4704 = vld [vmem:[%s49 + $0x6c] sm:$0xf]
        %v4705 = vld [vmem:[%s49 + $0x70] sm:$0xf]
        %v4706 = vld [vmem:[%s49 + $0x74] sm:$0xf]
        %v4707 = vld [vmem:[%s49 + $0x78] sm:$0xf]
        %v4708 = vld [vmem:[%s49 + $0x7c] sm:$0xf]
        %v4709 = vld [vmem:[%s51] sm:$0x1]
        %v4711 = vlaneseq
        %v4712 = vshrl.u32 %v4711, 7
        %v4713 = vsub.s32 0, %v4712
        %v4714 = vrot.slane %v4709, %v4713
        %v4748 = vunpack.c.l.b16 %v4677
        %v4749 = vunpack.c.l.b16 %v4678
        %v4750 = vunpack.c.l.b16 %v4679
        %v4751 = vunpack.c.l.b16 %v4680
        %v4752 = vunpack.c.l.b16 %v4681
        %v4753 = vunpack.c.l.b16 %v4682
        %v4754 = vunpack.c.l.b16 %v4683
        %v4755 = vunpack.c.l.b16 %v4684
        %v4756 = vunpack.c.l.b16 %v4685
        %v4757 = vunpack.c.l.b16 %v4686
        %v4758 = vunpack.c.l.b16 %v4687
        %v4759 = vunpack.c.l.b16 %v4688
        %v4760 = vunpack.c.l.b16 %v4689
        %v4761 = vunpack.c.l.b16 %v4690
        %v4762 = vunpack.c.l.b16 %v4691
        %v4763 = vunpack.c.l.b16 %v4692
        %v4764 = vunpack.c.l.b16 %v4693
        %v4765 = vunpack.c.l.b16 %v4694
        %v4766 = vunpack.c.l.b16 %v4695
        %v4767 = vunpack.c.l.b16 %v4696
        %v4768 = vunpack.c.l.b16 %v4697
        %v4769 = vunpack.c.l.b16 %v4698
        %v4770 = vunpack.c.l.b16 %v4699
        %v4771 = vunpack.c.l.b16 %v4700
        %v4772 = vunpack.c.l.b16 %v4701
        %v4773 = vunpack.c.l.b16 %v4702
        %v4774 = vunpack.c.l.b16 %v4703
        %v4775 = vunpack.c.l.b16 %v4704
        %v4776 = vunpack.c.l.b16 %v4705
        %v4777 = vunpack.c.l.b16 %v4706
        %v4778 = vunpack.c.l.b16 %v4707
        %v4779 = vunpack.c.l.b16 %v4708
        %v4780 = vpack.c.b16 %v4749, %v4748
        %v4781 = vpack.c.b16 %v4751, %v4750
        %v4782 = vpack.c.b16 %v4753, %v4752
        %v4783 = vpack.c.b16 %v4755, %v4754
        %v4784 = vpack.c.b16 %v4757, %v4756
        %v4785 = vpack.c.b16 %v4759, %v4758
        %v4786 = vpack.c.b16 %v4761, %v4760
        %v4787 = vpack.c.b16 %v4763, %v4762
        %v4788 = vpack.c.b16 %v4765, %v4764
        %v4789 = vpack.c.b16 %v4767, %v4766
        %v4790 = vpack.c.b16 %v4769, %v4768
        %v4791 = vpack.c.b16 %v4771, %v4770
        %v4792 = vpack.c.b16 %v4773, %v4772
        %v4793 = vpack.c.b16 %v4775, %v4774
        %v4794 = vpack.c.b16 %v4777, %v4776
        %v4795 = vpack.c.b16 %v4779, %v4778
        %4812 = vmatprep.subr.bf16.mxu0 0
        %4813 = vmatpush1.bf16.msra.mxu0 %v4780
        %4814 = vmatprep.subr.bf16.mxu0 0
        %4815 = vmatpush1.bf16.msra.mxu0 %v4781
        %4816 = vmatprep.subr.bf16.mxu0 0
        %4817 = vmatpush1.bf16.msra.mxu0 %v4782
        %4818 = vmatprep.subr.bf16.mxu0 0
        %4819 = vmatpush1.bf16.msra.mxu0 %v4783
        %4820 = vmatprep.subr.bf16.mxu0 0
        %4821 = vmatpush1.bf16.msra.mxu0 %v4784
        %4822 = vmatprep.subr.bf16.mxu0 0
        %4823 = vmatpush1.bf16.msra.mxu0 %v4785
        %4824 = vmatprep.subr.bf16.mxu0 0
        %4825 = vmatpush1.bf16.msra.mxu0 %v4786
        %4826 = vmatprep.subr.bf16.mxu0 0
        %4827 = vmatpush1.bf16.msra.mxu0 %v4787
        %4828 = vmatprep.subr.bf16.mxu0 0
        %4829 = vmatpush1.bf16.msra.mxu0 %v4788
        %4830 = vmatprep.subr.bf16.mxu0 0
        %4831 = vmatpush1.bf16.msra.mxu0 %v4789
        %4832 = vmatprep.subr.bf16.mxu0 0
        %4833 = vmatpush1.bf16.msra.mxu0 %v4790
        %4834 = vmatprep.subr.bf16.mxu0 0
        %4835 = vmatpush1.bf16.msra.mxu0 %v4791
        %4836 = vmatprep.subr.bf16.mxu0 0
        %4837 = vmatpush1.bf16.msra.mxu0 %v4792
        %4838 = vmatprep.subr.bf16.mxu0 0
        %4839 = vmatpush1.bf16.msra.mxu0 %v4793
        %4840 = vmatprep.subr.bf16.mxu0 0
        %4841 = vmatpush1.bf16.msra.mxu0 %v4794
        %4842 = vmatprep.subr.bf16.mxu0 0
        %4843 = vmatpush1.bf16.msra.mxu0 %v4795
        %4844 = vmatprep.mubr.bf16.mxu0 %v4662
        %4845 = vmatmul.mubr.bf16.gmra.mrb[0].mxu0 %v4661
        %v4846 = vpop.f32.mrb[0].mxu0
        %v4847 = vadd.f32 %v4714, %v4846
        %v4848 = vpop.f32.mrb[0].mxu0
        %v4849 = vpop.f32.mrb[0].mxu0
        %v4850 = vadd.f32 %v4714, %v4849
        %v4851 = vpop.f32.mrb[0].mxu0
        %4852 = vmatprep.mubr.bf16.mxu0 %v4664
        %4853 = vmatmul.mubr.bf16.gmra.mrb[0].mxu0 %v4663
        %v4854 = vpop.f32.mrb[0].mxu0
        %v4855 = vadd.f32 %v4714, %v4854
        %v4856 = vpop.f32.mrb[0].mxu0
        %v4857 = vpop.f32.mrb[0].mxu0
        %v4858 = vadd.f32 %v4714, %v4857
        %v4859 = vpop.f32.mrb[0].mxu0
        %4860 = vmatprep.mubr.bf16.mxu0 %v4666
        %4861 = vmatmul.mubr.bf16.gmra.mrb[0].mxu0 %v4665
        %v4862 = vpop.f32.mrb[0].mxu0
        %v4863 = vadd.f32 %v4714, %v4862
        %v4864 = vpop.f32.mrb[0].mxu0
        %v4865 = vpop.f32.mrb[0].mxu0
        %v4866 = vadd.f32 %v4714, %v4865
        %v4867 = vpop.f32.mrb[0].mxu0
        %4868 = vmatprep.mubr.bf16.mxu0 %v4668
        %4869 = vmatmul.mubr.bf16.gmra.mrb[0].mxu0 %v4667
        %v4870 = vpop.f32.mrb[0].mxu0
        %v4871 = vadd.f32 %v4714, %v4870
        %v4872 = vpop.f32.mrb[0].mxu0
        %v4873 = vpop.f32.mrb[0].mxu0
        %v4874 = vadd.f32 %v4714, %v4873
        %v4875 = vpop.f32.mrb[0].mxu0
        %4876 = vmatprep.mubr.bf16.mxu0 %v4670
        %4877 = vmatmul.mubr.bf16.gmra.mrb[0].mxu0 %v4669
        %v4878 = vpop.f32.mrb[0].mxu0
        %v4879 = vadd.f32 %v4714, %v4878
        %v4880 = vpop.f32.mrb[0].mxu0
        %v4881 = vpop.f32.mrb[0].mxu0
        %v4882 = vadd.f32 %v4714, %v4881
        %v4883 = vpop.f32.mrb[0].mxu0
        %4884 = vmatprep.mubr.bf16.mxu0 %v4672
        %4885 = vmatmul.mubr.bf16.gmra.mrb[0].mxu0 %v4671
        %v4886 = vpop.f32.mrb[0].mxu0
        %v4887 = vadd.f32 %v4714, %v4886
        %v4888 = vpop.f32.mrb[0].mxu0
        %v4889 = vpop.f32.mrb[0].mxu0
        %v4890 = vadd.f32 %v4714, %v4889
        %v4891 = vpop.f32.mrb[0].mxu0
        %4892 = vmatprep.mubr.bf16.mxu0 %v4674
        %4893 = vmatmul.mubr.bf16.gmra.mrb[0].mxu0 %v4673
        %v4894 = vpop.f32.mrb[0].mxu0
        %v4895 = vadd.f32 %v4714, %v4894
        %v4896 = vpop.f32.mrb[0].mxu0
        %v4897 = vpop.f32.mrb[0].mxu0
        %v4898 = vadd.f32 %v4714, %v4897
        %v4899 = vpop.f32.mrb[0].mxu0
        %4900 = vmatprep.mubr.bf16.mxu0 %v4676
        %4901 = vmatmul.mubr.bf16.gmra.mrb[0].mxu0 %v4675
        %v4902 = vpop.f32.mrb[0].mxu0
        %v4903 = vadd.f32 %v4714, %v4902
        %v4904 = vpop.f32.mrb[0].mxu0
        %v4905 = vpop.f32.mrb[0].mxu0
        %v4906 = vadd.f32 %v4714, %v4905
        %v4907 = vpop.f32.mrb[0].mxu0
        %4908 = vdwg.mxu0
        %v4909 = vmax.f32 %v4847, 0.0
        %v4910 = vmax.f32 %v4850, 0.0
        %v4911 = vmax.f32 %v4855, 0.0
        %v4912 = vmax.f32 %v4858, 0.0
        %v4913 = vmax.f32 %v4863, 0.0
        %v4914 = vmax.f32 %v4866, 0.0
        %v4915 = vmax.f32 %v4871, 0.0
        %v4916 = vmax.f32 %v4874, 0.0
        %v4917 = vmax.f32 %v4879, 0.0
        %v4918 = vmax.f32 %v4882, 0.0
        %v4919 = vmax.f32 %v4887, 0.0
        %v4920 = vmax.f32 %v4890, 0.0
        %v4921 = vmax.f32 %v4895, 0.0
        %v4922 = vmax.f32 %v4898, 0.0
        %v4923 = vmax.f32 %v4903, 0.0
        %v4924 = vmax.f32 %v4906, 0.0
        %v4925 = vpack.c.bf16 %v4910, %v4909
        %v4926 = vpack.c.bf16 %v4912, %v4911
        %v4927 = vpack.c.bf16 %v4914, %v4913
        %v4928 = vpack.c.bf16 %v4916, %v4915
        %v4929 = vpack.c.bf16 %v4918, %v4917
        %v4930 = vpack.c.bf16 %v4920, %v4919
        %v4931 = vpack.c.bf16 %v4922, %v4921
        %v4932 = vpack.c.bf16 %v4924, %v4923
        %v4933 = vld [vmem:[%s53] sm:$0xf]
        %v4934 = vld [vmem:[%s53 + $0x4] sm:$0xf]
        %v4935 = vld [vmem:[%s53 + $0x8] sm:$0xf]
        %v4936 = vld [vmem:[%s53 + $0xc] sm:$0xf]
        %v4937 = vld [vmem:[%s53 + $0x10] sm:$0xf]
        %v4938 = vld [vmem:[%s53 + $0x14] sm:$0xf]
        %v4939 = vld [vmem:[%s53 + $0x18] sm:$0xf]
        %v4940 = vld [vmem:[%s53 + $0x1c] sm:$0xf]
        %v4941 = vld [vmem:[%s53 + $0x20] sm:$0xf]
        %v4942 = vld [vmem:[%s53 + $0x24] sm:$0xf]
        %v4943 = vld [vmem:[%s53 + $0x28] sm:$0xf]
        %v4944 = vld [vmem:[%s53 + $0x2c] sm:$0xf]
        %v4945 = vld [vmem:[%s53 + $0x30] sm:$0xf]
        %v4946 = vld [vmem:[%s53 + $0x34] sm:$0xf]
        %v4947 = vld [vmem:[%s53 + $0x38] sm:$0xf]
        %v4948 = vld [vmem:[%s53 + $0x3c] sm:$0xf]
        %v4949 = vld [vmem:[%s55] sm:$0x1]
        %v4951 = vlaneseq
        %v4952 = vshrl.u32 %v4951, 7
        %v4953 = vsub.s32 0, %v4952
        %v4954 = vrot.slane %v4949, %v4953
        %v4972 = vunpack.c.l.b16 %v4933
        %v4973 = vunpack.c.l.b16 %v4934
        %v4974 = vunpack.c.l.b16 %v4935
        %v4975 = vunpack.c.l.b16 %v4936
        %v4976 = vunpack.c.l.b16 %v4937
        %v4977 = vunpack.c.l.b16 %v4938
        %v4978 = vunpack.c.l.b16 %v4939
        %v4979 = vunpack.c.l.b16 %v4940
        %v4980 = vunpack.c.l.b16 %v4941
        %v4981 = vunpack.c.l.b16 %v4942
        %v4982 = vunpack.c.l.b16 %v4943
        %v4983 = vunpack.c.l.b16 %v4944
        %v4984 = vunpack.c.l.b16 %v4945
        %v4985 = vunpack.c.l.b16 %v4946
        %v4986 = vunpack.c.l.b16 %v4947
        %v4987 = vunpack.c.l.b16 %v4948
        %v4988 = vpack.c.b16 %v4973, %v4972
        %v4989 = vpack.c.b16 %v4975, %v4974
        %v4990 = vpack.c.b16 %v4977, %v4976
        %v4991 = vpack.c.b16 %v4979, %v4978
        %v4992 = vpack.c.b16 %v4981, %v4980
        %v4993 = vpack.c.b16 %v4983, %v4982
        %v4994 = vpack.c.b16 %v4985, %v4984
        %v4995 = vpack.c.b16 %v4987, %v4986
        %5004 = vmatprep.subr.bf16.mxu0 0
        %5005 = vmatpush1.bf16.msra.mxu0 %v4988
        %5006 = vmatprep.subr.bf16.mxu0 0
        %5007 = vmatpush1.bf16.msra.mxu0 %v4989
        %5008 = vmatprep.subr.bf16.mxu0 0
        %5009 = vmatpush1.bf16.msra.mxu0 %v4990
        %5010 = vmatprep.subr.bf16.mxu0 0
        %5011 = vmatpush1.bf16.msra.mxu0 %v4991
        %5012 = vmatprep.subr.bf16.mxu0 0
        %5013 = vmatpush1.bf16.msra.mxu0 %v4992
        %5014 = vmatprep.subr.bf16.mxu0 0
        %5015 = vmatpush1.bf16.msra.mxu0 %v4993
        %5016 = vmatprep.subr.bf16.mxu0 0
        %5017 = vmatpush1.bf16.msra.mxu0 %v4994
        %5018 = vmatprep.subr.bf16.mxu0 0
        %5019 = vmatpush1.bf16.msra.mxu0 %v4995
        %5020 = vmatprep.subr.bf16.mxu0 0
        %5021 = vmatpush1.bf16.msra.mxu0 0
        %5022 = vmatprep.subr.bf16.mxu0 0
        %5023 = vmatpush1.bf16.msra.mxu0 0
        %5024 = vmatprep.subr.bf16.mxu0 0
        %5025 = vmatpush1.bf16.msra.mxu0 0
        %5026 = vmatprep.subr.bf16.mxu0 0
        %5027 = vmatpush1.bf16.msra.mxu0 0
        %5028 = vmatprep.subr.bf16.mxu0 0
        %5029 = vmatpush1.bf16.msra.mxu0 0
        %5030 = vmatprep.subr.bf16.mxu0 0
        %5031 = vmatpush1.bf16.msra.mxu0 0
        %5032 = vmatprep.subr.bf16.mxu0 0
        %5033 = vmatpush1.bf16.msra.mxu0 0
        %5034 = vmatprep.subr.bf16.mxu0 0
        %5035 = vmatpush1.bf16.msra.mxu0 0
        %5036 = vmatprep.mubr.bf16.mxu0 0
        %5037 = vmatmul.mubr.bf16.gmra.mrb[0].mxu0 %v4925
        %v5038 = vpop.f32.mrb[0].mxu0
        %v5039 = vadd.f32 %v4954, %v5038
        %v5040 = vpop.f32.mrb[0].mxu0
        %v5041 = vpop.f32.mrb[0].mxu0
        %v5042 = vadd.f32 %v4954, %v5041
        %v5043 = vpop.f32.mrb[0].mxu0
        %5044 = vmatprep.mubr.bf16.mxu0 0
        %5045 = vmatmul.mubr.bf16.gmra.mrb[0].mxu0 %v4926
        %v5046 = vpop.f32.mrb[0].mxu0
        %v5047 = vadd.f32 %v4954, %v5046
        %v5048 = vpop.f32.mrb[0].mxu0
        %v5049 = vpop.f32.mrb[0].mxu0
        %v5050 = vadd.f32 %v4954, %v5049
        %v5051 = vpop.f32.mrb[0].mxu0
        %5052 = vmatprep.mubr.bf16.mxu0 0
        %5053 = vmatmul.mubr.bf16.gmra.mrb[0].mxu0 %v4927
        %v5054 = vpop.f32.mrb[0].mxu0
        %v5055 = vadd.f32 %v4954, %v5054
        %v5056 = vpop.f32.mrb[0].mxu0
        %v5057 = vpop.f32.mrb[0].mxu0
        %v5058 = vadd.f32 %v4954, %v5057
        %v5059 = vpop.f32.mrb[0].mxu0
        %5060 = vmatprep.mubr.bf16.mxu0 0
        %5061 = vmatmul.mubr.bf16.gmra.mrb[0].mxu0 %v4928
        %v5062 = vpop.f32.mrb[0].mxu0
        %v5063 = vadd.f32 %v4954, %v5062
        %v5064 = vpop.f32.mrb[0].mxu0
        %v5065 = vpop.f32.mrb[0].mxu0
        %v5066 = vadd.f32 %v4954, %v5065
        %v5067 = vpop.f32.mrb[0].mxu0
        %5068 = vmatprep.mubr.bf16.mxu0 0
        %5069 = vmatmul.mubr.bf16.gmra.mrb[0].mxu0 %v4929
        %v5070 = vpop.f32.mrb[0].mxu0
        %v5071 = vadd.f32 %v4954, %v5070
        %v5072 = vpop.f32.mrb[0].mxu0
        %v5073 = vpop.f32.mrb[0].mxu0
        %v5074 = vadd.f32 %v4954, %v5073
        %v5075 = vpop.f32.mrb[0].mxu0
        %5076 = vmatprep.mubr.bf16.mxu0 0
        %5077 = vmatmul.mubr.bf16.gmra.mrb[0].mxu0 %v4930
        %v5078 = vpop.f32.mrb[0].mxu0
        %v5079 = vadd.f32 %v4954, %v5078
        %v5080 = vpop.f32.mrb[0].mxu0
        %v5081 = vpop.f32.mrb[0].mxu0
        %v5082 = vadd.f32 %v4954, %v5081
        %v5083 = vpop.f32.mrb[0].mxu0
        %5084 = vmatprep.mubr.bf16.mxu0 0
        %5085 = vmatmul.mubr.bf16.gmra.mrb[0].mxu0 %v4931
        %v5086 = vpop.f32.mrb[0].mxu0
        %v5087 = vadd.f32 %v4954, %v5086
        %v5088 = vpop.f32.mrb[0].mxu0
        %v5089 = vpop.f32.mrb[0].mxu0
        %v5090 = vadd.f32 %v4954, %v5089
        %v5091 = vpop.f32.mrb[0].mxu0
        %5092 = vmatprep.mubr.bf16.mxu0 0
        %5093 = vmatmul.mubr.bf16.gmra.mrb[0].mxu0 %v4932
        %v5094 = vpop.f32.mrb[0].mxu0
        %v5095 = vadd.f32 %v4954, %v5094
        %v5096 = vpop.f32.mrb[0].mxu0
        %v5097 = vpop.f32.mrb[0].mxu0
        %v5098 = vadd.f32 %v4954, %v5097
        %v5099 = vpop.f32.mrb[0].mxu0
        %5100 = vdwg.mxu0
        %v5101 = vmax.f32 %v5039, 0.0
        %v5102 = vmax.f32 %v5042, 0.0
        %v5103 = vmax.f32 %v5047, 0.0
        %v5104 = vmax.f32 %v5050, 0.0
        %v5105 = vmax.f32 %v5055, 0.0
        %v5106 = vmax.f32 %v5058, 0.0
        %v5107 = vmax.f32 %v5063, 0.0
        %v5108 = vmax.f32 %v5066, 0.0
        %v5109 = vmax.f32 %v5071, 0.0
        %v5110 = vmax.f32 %v5074, 0.0
        %v5111 = vmax.f32 %v5079, 0.0
        %v5112 = vmax.f32 %v5082, 0.0
        %v5113 = vmax.f32 %v5087, 0.0
        %v5114 = vmax.f32 %v5090, 0.0
        %v5115 = vmax.f32 %v5095, 0.0
        %v5116 = vmax.f32 %v5098, 0.0
        %v5117 = vld [vmem:[%s57] sm:$0x1]
        %v5118 = vld [vmem:[%s59] sm:$0x1]
        %v5119 = vmul.f32 %v5101, %v2081
        %v5120 = vmul.f32 %v5102, %v2086
        %v5121 = vmul.f32 %v5103, %v2091
        %v5122 = vmul.f32 %v5104, %v2096
        %v5123 = vmul.f32 %v5105, %v2101
        %v5124 = vmul.f32 %v5106, %v2106
        %v5125 = vmul.f32 %v5107, %v2111
        %v5126 = vmul.f32 %v5108, %v2116
        %v5127 = vmul.f32 %v5109, %v2121
        %v5128 = vmul.f32 %v5110, %v2126
        %v5129 = vmul.f32 %v5111, %v2131
        %v5130 = vmul.f32 %v5112, %v2136
        %v5131 = vmul.f32 %v5113, %v2141
        %v5132 = vmul.f32 %v5114, %v2146
        %v5133 = vmul.f32 %v5115, %v2151
        %v5134 = vmul.f32 %v5116, %v2156
        %v5135 = vadd.f32 %v5119, %v5120
        %v5136 = vadd.f32 %v5135, %v5121
        %v5137 = vadd.f32 %v5136, %v5122
        %v5138 = vadd.f32 %v5137, %v5123
        %v5139 = vadd.f32 %v5138, %v5124
        %v5140 = vadd.f32 %v5139, %v5125
        %v5141 = vadd.f32 %v5140, %v5126
        %v5142 = vadd.f32 %v5141, %v5127
        %v5143 = vadd.f32 %v5142, %v5128
        %v5144 = vadd.f32 %v5143, %v5129
        %v5145 = vadd.f32 %v5144, %v5130
        %v5146 = vadd.f32 %v5145, %v5131
        %v5147 = vadd.f32 %v5146, %v5132
        %v5148 = vadd.f32 %v5147, %v5133
        %v5149 = vadd.f32 %v5148, %v5134
        %v5150 = vrot.slane %v5149, 4
        %v5151 = vadd.f32 %v5149, %v5150
        %v5152 = vrot.slane %v5151, 2
        %v5153 = vadd.f32 %v5151, %v5152
        %v5154 = vrot.slane %v5153, 1
        %v5155 = vadd.f32 %v5153, %v5154
        %v5156 = vmul.f32 %v5155, %v2235
        %v5157 = vsub.f32 %v5101, %v5156
        %v5158 = vsub.f32 %v5102, %v5156
        %v5159 = vsub.f32 %v5103, %v5156
        %v5160 = vsub.f32 %v5104, %v5156
        %v5161 = vsub.f32 %v5105, %v5156
        %v5162 = vsub.f32 %v5106, %v5156
        %v5163 = vsub.f32 %v5107, %v5156
        %v5164 = vsub.f32 %v5108, %v5156
        %v5165 = vsub.f32 %v5109, %v5156
        %v5166 = vsub.f32 %v5110, %v5156
        %v5167 = vsub.f32 %v5111, %v5156
        %v5168 = vsub.f32 %v5112, %v5156
        %v5169 = vsub.f32 %v5113, %v5156
        %v5170 = vsub.f32 %v5114, %v5156
        %v5171 = vsub.f32 %v5115, %v5156
        %v5172 = vsub.f32 %v5116, %v5156
        %v5173 = vmul.f32 %v5157, %v2081
        %v5174 = vmul.f32 %v5158, %v2086
        %v5175 = vmul.f32 %v5159, %v2091
        %v5176 = vmul.f32 %v5160, %v2096
        %v5177 = vmul.f32 %v5161, %v2101
        %v5178 = vmul.f32 %v5162, %v2106
        %v5179 = vmul.f32 %v5163, %v2111
        %v5180 = vmul.f32 %v5164, %v2116
        %v5181 = vmul.f32 %v5165, %v2121
        %v5182 = vmul.f32 %v5166, %v2126
        %v5183 = vmul.f32 %v5167, %v2131
        %v5184 = vmul.f32 %v5168, %v2136
        %v5185 = vmul.f32 %v5169, %v2141
        %v5186 = vmul.f32 %v5170, %v2146
        %v5187 = vmul.f32 %v5171, %v2151
        %v5188 = vmul.f32 %v5172, %v2156
        %v5189 = vmul.f32 %v5173, %v5173
        %v5190 = vmul.f32 %v5174, %v5174
        %v5191 = vmul.f32 %v5175, %v5175
        %v5192 = vmul.f32 %v5176, %v5176
        %v5193 = vmul.f32 %v5177, %v5177
        %v5194 = vmul.f32 %v5178, %v5178
        %v5195 = vmul.f32 %v5179, %v5179
        %v5196 = vmul.f32 %v5180, %v5180
        %v5197 = vmul.f32 %v5181, %v5181
        %v5198 = vmul.f32 %v5182, %v5182
        %v5199 = vmul.f32 %v5183, %v5183
        %v5200 = vmul.f32 %v5184, %v5184
        %v5201 = vmul.f32 %v5185, %v5185
        %v5202 = vmul.f32 %v5186, %v5186
        %v5203 = vmul.f32 %v5187, %v5187
        %v5204 = vmul.f32 %v5188, %v5188
        %v5205 = vadd.f32 %v5189, %v5190
        %v5206 = vadd.f32 %v5205, %v5191
        %v5207 = vadd.f32 %v5206, %v5192
        %v5208 = vadd.f32 %v5207, %v5193
        %v5209 = vadd.f32 %v5208, %v5194
        %v5210 = vadd.f32 %v5209, %v5195
        %v5211 = vadd.f32 %v5210, %v5196
        %v5212 = vadd.f32 %v5211, %v5197
        %v5213 = vadd.f32 %v5212, %v5198
        %v5214 = vadd.f32 %v5213, %v5199
        %v5215 = vadd.f32 %v5214, %v5200
        %v5216 = vadd.f32 %v5215, %v5201
        %v5217 = vadd.f32 %v5216, %v5202
        %v5218 = vadd.f32 %v5217, %v5203
        %v5219 = vadd.f32 %v5218, %v5204
        %v5220 = vrot.slane %v5219, 4
        %v5221 = vadd.f32 %v5219, %v5220
        %v5222 = vrot.slane %v5221, 2
        %v5223 = vadd.f32 %v5221, %v5222
        %v5224 = vrot.slane %v5223, 1
        %v5225 = vadd.f32 %v5223, %v5224
        %v5226 = vmul.f32 %v5225, %v2235
        %v5227 = vadd.f32 %v5226, 1e-05
        %v5228 = vrsqrt.pop %v5227
        %v5229 = vmul.f32 %v5157, %v5228
        %v5230 = vmul.f32 %v5158, %v5228
        %v5231 = vmul.f32 %v5159, %v5228
        %v5232 = vmul.f32 %v5160, %v5228
        %v5233 = vmul.f32 %v5161, %v5228
        %v5234 = vmul.f32 %v5162, %v5228
        %v5235 = vmul.f32 %v5163, %v5228
        %v5236 = vmul.f32 %v5164, %v5228
        %v5237 = vmul.f32 %v5165, %v5228
        %v5238 = vmul.f32 %v5166, %v5228
        %v5239 = vmul.f32 %v5167, %v5228
        %v5240 = vmul.f32 %v5168, %v5228
        %v5241 = vmul.f32 %v5169, %v5228
        %v5242 = vmul.f32 %v5170, %v5228
        %v5243 = vmul.f32 %v5171, %v5228
        %v5244 = vmul.f32 %v5172, %v5228
        %v5246 = vlaneseq
        %v5247 = vshrl.u32 %v5246, 7
        %v5248 = vsub.s32 0, %v5247
        %v5249 = vrot.slane %v5117, %v5248
        %v5251 = vmul.f32 %v5229, %v5249
        %v5252 = vmul.f32 %v5230, %v5249
        %v5253 = vmul.f32 %v5231, %v5249
        %v5254 = vmul.f32 %v5232, %v5249
        %v5255 = vmul.f32 %v5233, %v5249
        %v5256 = vmul.f32 %v5234, %v5249
        %v5257 = vmul.f32 %v5235, %v5249
        %v5258 = vmul.f32 %v5236, %v5249
        %v5259 = vmul.f32 %v5237, %v5249
        %v5260 = vmul.f32 %v5238, %v5249
        %v5261 = vmul.f32 %v5239, %v5249
        %v5262 = vmul.f32 %v5240, %v5249
        %v5263 = vmul.f32 %v5241, %v5249
        %v5264 = vmul.f32 %v5242, %v5249
        %v5265 = vmul.f32 %v5243, %v5249
        %v5266 = vmul.f32 %v5244, %v5249
        %v5268 = vlaneseq
        %v5269 = vshrl.u32 %v5268, 7
        %v5270 = vsub.s32 0, %v5269
        %v5271 = vrot.slane %v5118, %v5270
        %v5273 = vadd.f32 %v5251, %v5271
        %v5274 = vadd.f32 %v5252, %v5271
        %v5275 = vadd.f32 %v5253, %v5271
        %v5276 = vadd.f32 %v5254, %v5271
        %v5277 = vadd.f32 %v5255, %v5271
        %v5278 = vadd.f32 %v5256, %v5271
        %v5279 = vadd.f32 %v5257, %v5271
        %v5280 = vadd.f32 %v5258, %v5271
        %v5281 = vadd.f32 %v5259, %v5271
        %v5282 = vadd.f32 %v5260, %v5271
        %v5283 = vadd.f32 %v5261, %v5271
        %v5284 = vadd.f32 %v5262, %v5271
        %v5285 = vadd.f32 %v5263, %v5271
        %v5286 = vadd.f32 %v5264, %v5271
        %v5287 = vadd.f32 %v5265, %v5271
        %v5288 = vadd.f32 %v5266, %v5271
        %5289 = vst [vmem:[%s953] sm:$0xff] %v5273
        %5290 = vst [vmem:[%s953 + $0x8] sm:$0xff] %v5274
        %5291 = vst [vmem:[%s953 + $0x10] sm:$0xff] %v5275
        %5292 = vst [vmem:[%s953 + $0x18] sm:$0xff] %v5276
        %5293 = vst [vmem:[%s953 + $0x20] sm:$0xff] %v5277
        %5294 = vst [vmem:[%s953 + $0x28] sm:$0xff] %v5278
        %5295 = vst [vmem:[%s953 + $0x30] sm:$0xff] %v5279
        %5296 = vst [vmem:[%s953 + $0x38] sm:$0xff] %v5280
        %5297 = vst [vmem:[%s953 + $0x40] sm:$0xff] %v5281
        %5298 = vst [vmem:[%s953 + $0x48] sm:$0xff] %v5282
        %5299 = vst [vmem:[%s953 + $0x50] sm:$0xff] %v5283
        %5300 = vst [vmem:[%s953 + $0x58] sm:$0xff] %v5284
        %5301 = vst [vmem:[%s953 + $0x60] sm:$0xff] %v5285
        %5302 = vst [vmem:[%s953 + $0x68] sm:$0xff] %v5286
        %5303 = vst [vmem:[%s953 + $0x70] sm:$0xff] %v5287
        %5304 = vst [vmem:[%s953 + $0x78] sm:$0xff] %v5288
        %s5305 = sand.u32 %s728, 1
        %s5306 = scalar_lea.sflag [#allocation3], %s5305
        %s5307 = sand.u32 %s728, 1
        %s5308 = smul.addr %s5307, 128
        %s5309 = scalar_lea.vmem [#allocation2], %s5308
        // Predicated region
        $region141: #{gin_encoder_forward_batched.1} parent=139 // pred_check
          %p5310 = pneg %p738
        $region142: #{gin_encoder_forward_batched.1} parent=139 // pred_check_branch
          %5312 = sbr.rel (%p5310) target = $region144
        $region143: #{gin_encoder_forward_batched.1} parent=139 // pred_region
          %s5314 = ssub.s32 2048, 2048
          %5315 = vsyncadd %s5306, %s5314
          %s5316 = smul.addr %s75, 16
          %s5317 = smul.addr %s5316, 128
          %s5318 = scalar_lea.hbm %s61, %s5317
          %s5319 = sshll.u32 %s5309, 4
          %s5320 = int_to_ptr.vmem [resolvable:$true] %s5319
          %5325 = dma.vmem_to_hbm [thread:$0]  %s5320, 2048, %s5318, %s5306, 128, 128, 8
        $region144: #{gin_encoder_forward_batched.1} parent=139 // pred_fallthru
          _
      $region140: #{gin_encoder_forward_batched.1} parent=5 // pred_fallthru
        _
      %p5326 = scmp.le.s32.totalorder 2, %s70
      // Predicated region
      $region145: #{gin_encoder_forward_batched.1} parent=5 // pred_check
        %p5327 = pneg %p5326
      $region146: #{gin_encoder_forward_batched.1} parent=5 // pred_check_branch
        %5329 = sbr.rel (%p5327) target = $region148
      $region147: #{gin_encoder_forward_batched.1} parent=5 // pred_region
        %s5330 = ssub.s32 %s70, 2
        // Predicated region
        $region149: #{gin_encoder_forward_batched.1} parent=147 // pred_check
          %p5331 = pneg %p744
        $region150: #{gin_encoder_forward_batched.1} parent=147 // pred_check_branch
          %5333 = sbr.rel (%p5331) target = $region152
        $region151: #{gin_encoder_forward_batched.1} parent=147 // pred_region
          %s5334 = sand.u32 %s729, 1
          %s5335 = scalar_lea.sflag [#allocation3], %s5334
          %s5336 = sand.u32 %s729, 1
          %s5337 = smul.addr %s5336, 128
          %s5338 = scalar_lea.vmem [#allocation2], %s5337
          %5339 = dma.done %s5335, 2048
        $region152: #{gin_encoder_forward_batched.1} parent=147 // pred_fallthru
          _
      $region148: #{gin_encoder_forward_batched.1} parent=5 // pred_fallthru
        _
    $region6: #{gin_encoder_forward_batched.1} parent=1 // loop_footer
      %s74 = sadd.s32 1, %s70
    $region7: #{gin_encoder_forward_batched.1} parent=1 // loop_footer_branch
      %69 = sbr.rel target = $region3
    $region8: #{gin_encoder_forward_batched.1} parent=1 // loop_exit
      _
    %5340 = vsyncpa [#allocation3], 1
    %s5341 = scalar_lea.sflag [#allocation3], 1
    %5342 = vsyncpa %s5341, 1

</llo_original>
